<compile_context>
chip_gen: v7x
topology: tpu7x:2x2x1
jax: 0.10.0
libtpu: 0.0.40
codegen_flags: <defaults>
</compile_context>

<pallas_src>
import functools

import jax
import jax.numpy as jnp
from jax import lax
from jax.experimental import pallas as pl
from jax.experimental.pallas import tpu as pltpu

QMIN = -2.0 ** 15
QMAX = 2.0 ** 15 - 1
LN_EPS = 1e-5
VMEM_BUDGET = 32 * 1024 * 1024   # explicit, safe on v5e/v6e (128 MiB) and v7x (64 MiB)


def _fpq(x, scale):
    """fixed_point_quantize: round(x*scale).clamp(-2^15, 2^15-1) / scale (divide -> multiply)."""
    inv_scale = 1.0 / scale                      # compile-time constant (exact for 2^8)
    return jnp.clip(jnp.round(x * scale), QMIN, QMAX) * inv_scale


def _mparams(dim_sem):
    return pltpu.CompilerParams(dimension_semantics=dim_sem,
                                vmem_limit_bytes=VMEM_BUDGET)


def _row_tile(m):
    """M-tile: full if small (always legal), else 256 (multiple of 8, MXU friendly)."""
    return m if m <= 256 else 256


# --------------------------------------------------------------------------
# Kernel 1: patch embedding + positional embedding (+ fpq) fused
# --------------------------------------------------------------------------

def _embed_kernel(x_ref, w_ref, b_ref, pos_ref, o_ref, *, scale):
    y = jnp.dot(x_ref[...], w_ref[...], preferred_element_type=jnp.float32) + b_ref[...]
    y = _fpq(y, scale)                      # x = fpq(embedding(patches))
    o_ref[...] = _fpq(y + pos_ref[...], scale)   # x = fpq(x + pos)


def embed_pos_quant(patches, w, b, pos, *, scale):
    BS, Kp = patches.shape
    S, D = pos.shape
    B = BS // S
    return pl.pallas_call(
        functools.partial(_embed_kernel, scale=scale),
        grid=(B,),
        in_specs=[pl.BlockSpec((S, Kp), lambda i: (i, 0)),
                  pl.BlockSpec((Kp, D), lambda i: (0, 0)),
                  pl.BlockSpec((1, D), lambda i: (0, 0)),
                  pl.BlockSpec((S, D), lambda i: (0, 0))],
        out_specs=pl.BlockSpec((S, D), lambda i: (i, 0)),
        out_shape=jax.ShapeDtypeStruct((BS, D), jnp.float32),
        compiler_params=_mparams(("parallel",)),
    )(patches, w, b, pos)


# --------------------------------------------------------------------------
# Kernel 2: fused LayerNorm -> linear -> fpq  (used for the QKV projection)
# --------------------------------------------------------------------------

def _ln_linear_kernel(x_ref, g_ref, bln_ref, w_ref, b_ref, o_ref, *, scale):
    x = x_ref[...]
    mu = jnp.mean(x, axis=-1, keepdims=True)
    var = jnp.mean(jnp.square(x - mu), axis=-1, keepdims=True)
    h = (x - mu) * lax.rsqrt(var + LN_EPS) * g_ref[...] + bln_ref[...]
    y = jnp.dot(h, w_ref[...], preferred_element_type=jnp.float32) + b_ref[...]
    o_ref[...] = _fpq(y, scale)


def ln_linear_quant(x, g, bln, w, b, *, scale):
    M, K = x.shape
    N = w.shape[1]
    tm = _row_tile(M)
    tn = N if N <= 512 else 512
    grid = (pl.cdiv(M, tm), pl.cdiv(N, tn))
    return pl.pallas_call(
        functools.partial(_ln_linear_kernel, scale=scale),
        grid=grid,
        in_specs=[pl.BlockSpec((tm, K), lambda i, j: (i, 0)),
                  pl.BlockSpec((1, K), lambda i, j: (0, 0)),
                  pl.BlockSpec((1, K), lambda i, j: (0, 0)),
                  pl.BlockSpec((K, tn), lambda i, j: (0, j)),
                  pl.BlockSpec((1, tn), lambda i, j: (0, j))],
        out_specs=pl.BlockSpec((tm, tn), lambda i, j: (i, j)),
        out_shape=jax.ShapeDtypeStruct((M, N), jnp.float32),
        compiler_params=_mparams(("parallel", "parallel")),
    )(x, g, bln, w, b)


# --------------------------------------------------------------------------
# Kernel 3: full attention block (head split + softmax(fpq) + context +
#           out_proj + fpq + residual + fpq), one grid step per batch element.
#           Output is lane-dense (S, D) = all heads concatenated.
# --------------------------------------------------------------------------
# TODO(synk): for long sequences replace the full (S,S) scores with a key-tiled
#             online-softmax accumulator; ViT patch sequences here are short (S<=64).

def _attn_block_kernel(qkv_ref, res_ref, w_ref, b_ref, o_ref, *, num_heads, scale):
    D3 = qkv_ref.shape[-1]
    D = D3 // 3
    Dh = D // num_heads
    inv_sqrt_dh = 1.0 / (Dh ** 0.5)

    qkv = qkv_ref[0]                                  # (S, 3D)
    ctx_parts = []
    for h in range(num_heads):                        # static unroll, in-kernel head split
        qh = qkv[:, h * Dh:(h + 1) * Dh]
        kh = qkv[:, D + h * Dh:D + (h + 1) * Dh]
        vh = qkv[:, 2 * D + h * Dh:2 * D + (h + 1) * Dh]
        # q @ k^T without materializing a transpose: contract the last axes directly.
        s = lax.dot_general(qh, kh, (((1,), (1,)), ((), ())),
                            preferred_element_type=jnp.float32) * inv_sqrt_dh
        m = jnp.max(s, axis=-1, keepdims=True)
        e = jnp.exp(s - m)
        p = e * pl.reciprocal(jnp.sum(e, axis=-1, keepdims=True), approx=True)
        p = _fpq(p, scale)                            # fpq(softmax(scores))
        ctx_parts.append(jnp.dot(p, vh, preferred_element_type=jnp.float32))
    ctx = jnp.concatenate(ctx_parts, axis=-1)         # (S, D) lane-dense

    y = jnp.dot(ctx, w_ref[...], preferred_element_type=jnp.float32) + b_ref[...]
    y = _fpq(y, scale)                                # fpq(out_proj(context))
    o_ref[0] = _fpq(res_ref[0] + y, scale)            # x = fpq(x + attn_output)


def attention_block(qkv, x_res, w, b, *, num_heads, scale):
    B, S, D3 = qkv.shape
    D = D3 // 3
    return pl.pallas_call(
        functools.partial(_attn_block_kernel, num_heads=num_heads, scale=scale),
        grid=(B,),
        in_specs=[pl.BlockSpec((1, S, D3), lambda b: (b, 0, 0)),
                  pl.BlockSpec((1, S, D), lambda b: (b, 0, 0)),
                  pl.BlockSpec((D, D), lambda b: (0, 0)),
                  pl.BlockSpec((1, D), lambda b: (0, 0))],
        out_specs=pl.BlockSpec((1, S, D), lambda b: (b, 0, 0)),
        out_shape=jax.ShapeDtypeStruct((B, S, D), jnp.float32),
        compiler_params=_mparams(("parallel",)),
    )(qkv, x_res, w, b)


# --------------------------------------------------------------------------
# Kernel 4: full MLP block (LN2 -> fc1 -> fpq -> relu -> fc2 -> fpq ->
#           residual -> fpq), gridded over M tiles.  The hidden activation
#           never touches HBM.
# --------------------------------------------------------------------------

def _mlp_block_kernel(x_ref, g_ref, bln_ref, w1_ref, b1_ref, w2_ref, b2_ref,
                      o_ref, *, scale):
    x = x_ref[...]
    mu = jnp.mean(x, axis=-1, keepdims=True)
    var = jnp.mean(jnp.square(x - mu), axis=-1, keepdims=True)
    h = (x - mu) * lax.rsqrt(var + LN_EPS) * g_ref[...] + bln_ref[...]
    hid = jnp.dot(h, w1_ref[...], preferred_element_type=jnp.float32) + b1_ref[...]
    hid = jnp.maximum(_fpq(hid, scale), 0.0)          # relu(fpq(fc1(.)))
    y = jnp.dot(hid, w2_ref[...], preferred_element_type=jnp.float32) + b2_ref[...]
    y = _fpq(y, scale)                                # fpq(fc2(.))
    o_ref[...] = _fpq(x + y, scale)                   # x = fpq(x + mlp_output)


def mlp_block(x, g, bln, w1, b1, w2, b2, *, scale):
    M, D = x.shape
    Hd = w1.shape[1]
    tm = _row_tile(M)
    grid = (pl.cdiv(M, tm),)
    return pl.pallas_call(
        functools.partial(_mlp_block_kernel, scale=scale),
        grid=grid,
        in_specs=[pl.BlockSpec((tm, D), lambda i: (i, 0)),
                  pl.BlockSpec((1, D), lambda i: (0, 0)),
                  pl.BlockSpec((1, D), lambda i: (0, 0)),
                  pl.BlockSpec((D, Hd), lambda i: (0, 0)),
                  pl.BlockSpec((1, Hd), lambda i: (0, 0)),
                  pl.BlockSpec((Hd, D), lambda i: (0, 0)),
                  pl.BlockSpec((1, D), lambda i: (0, 0))],
        out_specs=pl.BlockSpec((tm, D), lambda i: (i, 0)),
        out_shape=jax.ShapeDtypeStruct((M, D), jnp.float32),
        compiler_params=_mparams(("parallel",)),
    )(x, g, bln, w1, b1, w2, b2)


# --------------------------------------------------------------------------
# Kernel 5: sequence mean + classifier (no quantization, per reference)
# --------------------------------------------------------------------------

def _mean_classifier_kernel(x_ref, w_ref, b_ref, o_ref):
    xm = jnp.mean(x_ref[...], axis=1)                 # mean over the sequence
    o_ref[...] = jnp.dot(xm, w_ref[...],
                         preferred_element_type=jnp.float32) + b_ref[...]


def mean_classifier(x, w, b):
    B, S, D = x.shape
    C = w.shape[1]
    tb = 8 if (B > 8 and B % 8 == 0) else B
    grid = (B // tb,)
    return pl.pallas_call(
        _mean_classifier_kernel,
        grid=grid,
        in_specs=[pl.BlockSpec((tb, S, D), lambda i: (i, 0, 0)),
                  pl.BlockSpec((D, C), lambda i: (0, 0)),
                  pl.BlockSpec((1, C), lambda i: (0, 0))],
        out_specs=pl.BlockSpec((tb, C), lambda i: (i, 0)),
        out_shape=jax.ShapeDtypeStruct((B, C), jnp.float32),
        compiler_params=_mparams(("parallel",)),
    )(x, w, b)


# --------------------------------------------------------------------------
# Full forward pass (glue in plain JAX: only free reshapes + one-time patchify)
# --------------------------------------------------------------------------

def vit_forward(x_img, params, *, patch_size, num_heads, scale):
    B, C, H, W = x_img.shape
    P = patch_size
    # Exact reproduction of torch unfold/contiguous/view ordering:
    # (B,C,H,W) -> (B,C,H/P,P,W/P,P) -> (B,C,H/P,W/P,P,P) -> (B, (H/P)*(W/P), C*P*P)
    patches = x_img.reshape(B, C, H // P, P, W // P, P)
    patches = patches.transpose(0, 1, 2, 4, 3, 5)
    patches = patches.reshape(B, -1, C * P * P)
    S = patches.shape[1]
    D = params["emb_w"].shape[1]

    pos = params["pos"].reshape(S, D)
    x = embed_pos_quant(patches.reshape(B * S, -1), params["emb_w"],
                        params["emb_b"], pos, scale=scale)        # (B*S, D)

    for lp in params["layers"]:
        # ---- attention block: 2 fused kernels ----
        qkv = ln_linear_quant(x, lp["ln1_g"], lp["ln1_b"],
                              lp["qkv_w"], lp["qkv_b"], scale=scale)       # (B*S, 3D)
        x = attention_block(qkv.reshape(B, S, 3 * D), x.reshape(B, S, D),
                            lp["out_w"], lp["out_b"],
                            num_heads=num_heads, scale=scale)              # (B, S, D)
        x = x.reshape(B * S, D)
        # ---- MLP block: 1 fused kernel ----
        x = mlp_block(x, lp["ln2_g"], lp["ln2_b"], lp["fc1_w"], lp["fc1_b"],
                      lp["fc2_w"], lp["fc2_b"], scale=scale)               # (B*S, D)

    return mean_classifier(x.reshape(B, S, D), params["cls_w"], params["cls_b"])


# --------------------------------------------------------------------------
# Deterministic parameter construction (matches nn.Module shapes)
# --------------------------------------------------------------------------

def init_params(key, *, patch_size, embed_dim, hidden_dim, depth, num_heads,
                num_patches, num_classes):
    def lin(k, fan_in, fan_out):
        kw, kb = jax.random.split(k)
        bound = 1.0 / (fan_in ** 0.5)
        w = jax.random.uniform(kw, (fan_in, fan_out), jnp.float32, -bound, bound)
        b = jax.random.uniform(kb, (1, fan_out), jnp.float32, -bound, bound)
        return w, b

    keys = jax.random.split(key, depth + 2)
    params = {}
    params["emb_w"], params["emb_b"] = lin(keys[0], 3 * patch_size * patch_size, embed_dim)
    # nn.Parameter(torch.zeros(1, patch_dim, embed_dim))
    params["pos"] = jnp.zeros((1, num_patches, embed_dim), jnp.float32)
    layers = []
    for i in range(depth):
        k = jax.random.split(keys[1 + i], 4)
        qkv_w, qkv_b = lin(k[0], embed_dim, 3 * embed_dim)
        out_w, out_b = lin(k[1], embed_dim, embed_dim)
        fc1_w, fc1_b = lin(k[2], embed_dim, hidden_dim)
        fc2_w, fc2_b = lin(k[3], hidden_dim, embed_dim)
        layers.append(dict(
            ln1_g=jnp.ones((1, embed_dim), jnp.float32),
            ln1_b=jnp.zeros((1, embed_dim), jnp.float32),
            ln2_g=jnp.ones((1, embed_dim), jnp.float32),
            ln2_b=jnp.zeros((1, embed_dim), jnp.float32),
            qkv_w=qkv_w, qkv_b=qkv_b, out_w=out_w, out_b=out_b,
            fc1_w=fc1_w, fc1_b=fc1_b, fc2_w=fc2_w, fc2_b=fc2_b))
    params["layers"] = layers
    params["cls_w"], params["cls_b"] = lin(keys[-1], embed_dim, num_classes)
    return params


if __name__ == "__main__":
    # Small shapes consistent with the module (3-channel image, patchify, ViT).
    IMAGE_SIZE = 16
    PATCH_SIZE = 4
    EMBED_DIM = 128
    NUM_HEADS = 4          # head_dim = 32
    HIDDEN_DIM = 64
    DEPTH = 2
    NUM_CLASSES = 10
    SCALE = 2.0 ** 8
    BATCH = 2

    key = jax.random.PRNGKey(0)
    kx, kp = jax.random.split(key)
    x = jax.random.normal(kx, (BATCH, 3, IMAGE_SIZE, IMAGE_SIZE), jnp.float32)

    num_patches = (IMAGE_SIZE // PATCH_SIZE) ** 2
    params = init_params(kp, patch_size=PATCH_SIZE, embed_dim=EMBED_DIM,
                         hidden_dim=HIDDEN_DIM, depth=DEPTH, num_heads=NUM_HEADS,
                         num_patches=num_patches, num_classes=NUM_CLASSES)

    fwd = jax.jit(functools.partial(vit_forward, patch_size=PATCH_SIZE,
                                    num_heads=NUM_HEADS, scale=SCALE))
    out = fwd(x, params)
    jax.block_until_ready(out)
    assert out.shape == (BATCH, NUM_CLASSES)
    assert out.dtype == jnp.float32
    print("KERNEL_OK")
</pallas_src>

<mosaic_0001>
module attributes {stable_mosaic.version = 11 : i64} {
  func.func @_embed_kernel(%arg0: i32, %arg1: memref<16x48xf32, #tpu.memory_space<vmem>>, %arg2: memref<48x128xf32, #tpu.memory_space<vmem>>, %arg3: memref<1x128xf32, #tpu.memory_space<vmem>>, %arg4: memref<16x128xf32, #tpu.memory_space<vmem>>, %arg5: memref<16x128xf32, #tpu.memory_space<vmem>>) attributes {dimension_semantics = [#tpu.dimension_semantics<parallel>], iteration_bounds = array<i64: 2>, scalar_prefetch = 0 : i64, scratch_operands = 0 : i64, tpu.core_type = #tpu.core_type<tc>, window_params = [{transform_indices = @transform_0, window_bounds = array<i64: 16, 48>}, {pipeline_mode = #tpu.pipeline_mode<synchronous>, transform_indices = @transform_1, window_bounds = array<i64: 48, 128>}, {pipeline_mode = #tpu.pipeline_mode<synchronous>, transform_indices = @transform_2, window_bounds = array<i64: 1, 128>}, {pipeline_mode = #tpu.pipeline_mode<synchronous>, transform_indices = @transform_3, window_bounds = array<i64: 16, 128>}, {transform_indices = @transform_4, window_bounds = array<i64: 16, 128>}]} {
    %c0 = arith.constant 0 : index
    %c0_0 = arith.constant 0 : index
    %0 = vector.load %arg1[%c0, %c0_0] : memref<16x48xf32, #tpu.memory_space<vmem>>, vector<16x48xf32>
    %c0_1 = arith.constant 0 : index
    %c0_2 = arith.constant 0 : index
    %1 = vector.load %arg2[%c0_1, %c0_2] : memref<48x128xf32, #tpu.memory_space<vmem>>, vector<48x128xf32>
    %cst = arith.constant dense<0.000000e+00> : vector<16x128xf32>
    %2 = tpu.matmul %0, %1, %cst {dimension_numbers = #tpu.dot_dimension_numbers<[1], [0], [0], [1], [0, 0, 1, 1], [], []>} : vector<16x48xf32>, vector<48x128xf32>, vector<16x128xf32> -> vector<16x128xf32>
    %c0_3 = arith.constant 0 : index
    %c0_4 = arith.constant 0 : index
    %3 = vector.load %arg3[%c0_3, %c0_4] : memref<1x128xf32, #tpu.memory_space<vmem>>, vector<1x128xf32>
    %4 = vector.broadcast %3 : vector<1x128xf32> to vector<16x128xf32>
    %5 = arith.addf %2, %4 : vector<16x128xf32>
    %cst_5 = arith.constant 2.560000e+02 : f32
    %6 = vector.broadcast %cst_5 : f32 to vector<16x128xf32>
    %7 = arith.mulf %5, %6 : vector<16x128xf32>
    %8 = math.roundeven %7 : vector<16x128xf32>
    %cst_6 = arith.constant -3.276800e+04 : f32
    %cst_7 = arith.constant 3.276700e+04 : f32
    %9 = vector.broadcast %cst_6 : f32 to vector<16x128xf32>
    %10 = arith.maximumf %9, %8 : vector<16x128xf32>
    %11 = vector.broadcast %cst_7 : f32 to vector<16x128xf32>
    %12 = arith.minimumf %11, %10 : vector<16x128xf32>
    %cst_8 = arith.constant 3.906250e-03 : f32
    %13 = vector.broadcast %cst_8 : f32 to vector<16x128xf32>
    %14 = arith.mulf %12, %13 : vector<16x128xf32>
    %c0_9 = arith.constant 0 : index
    %c0_10 = arith.constant 0 : index
    %15 = vector.load %arg4[%c0_9, %c0_10] : memref<16x128xf32, #tpu.memory_space<vmem>>, vector<16x128xf32>
    %16 = arith.addf %14, %15 : vector<16x128xf32>
    %cst_11 = arith.constant 2.560000e+02 : f32
    %17 = vector.broadcast %cst_11 : f32 to vector<16x128xf32>
    %18 = arith.mulf %16, %17 : vector<16x128xf32>
    %19 = math.roundeven %18 : vector<16x128xf32>
    %cst_12 = arith.constant -3.276800e+04 : f32
    %cst_13 = arith.constant 3.276700e+04 : f32
    %20 = vector.broadcast %cst_12 : f32 to vector<16x128xf32>
    %21 = arith.maximumf %20, %19 : vector<16x128xf32>
    %22 = vector.broadcast %cst_13 : f32 to vector<16x128xf32>
    %23 = arith.minimumf %22, %21 : vector<16x128xf32>
    %cst_14 = arith.constant 3.906250e-03 : f32
    %24 = vector.broadcast %cst_14 : f32 to vector<16x128xf32>
    %25 = arith.mulf %23, %24 : vector<16x128xf32>
    %c0_15 = arith.constant 0 : index
    %c0_16 = arith.constant 0 : index
    %26 = vector.load %arg5[%c0_15, %c0_16] : memref<16x128xf32, #tpu.memory_space<vmem>>, vector<16x128xf32>
    tpu.vector_store %arg5[%c0_15, %c0_16], %25 {strides = array<i32>} : memref<16x128xf32, #tpu.memory_space<vmem>>, vector<16x128xf32>,
    return
  }
  func.func @transform_0(%arg0: i32) -> (i32, i32) {
    %c0_i32 = arith.constant 0 : i32
    %c0_i32_0 = arith.constant 0 : i32
    return %arg0, %c0_i32 : i32, i32
  }
  func.func @transform_1(%arg0: i32) -> (i32, i32) {
    %c0_i32 = arith.constant 0 : i32
    %c0_i32_0 = arith.constant 0 : i32
    %c0_i32_1 = arith.constant 0 : i32
    return %c0_i32, %c0_i32_0 : i32, i32
  }
  func.func @transform_2(%arg0: i32) -> (i32, i32) {
    %c0_i32 = arith.constant 0 : i32
    %c0_i32_0 = arith.constant 0 : i32
    %c0_i32_1 = arith.constant 0 : i32
    return %c0_i32, %c0_i32_0 : i32, i32
  }
  func.func @transform_3(%arg0: i32) -> (i32, i32) {
    %c0_i32 = arith.constant 0 : i32
    %c0_i32_0 = arith.constant 0 : i32
    %c0_i32_1 = arith.constant 0 : i32
    return %c0_i32, %c0_i32_0 : i32, i32
  }
  func.func @transform_4(%arg0: i32) -> (i32, i32) {
    %c0_i32 = arith.constant 0 : i32
    %c0_i32_0 = arith.constant 0 : i32
    return %arg0, %c0_i32 : i32, i32
  }
}

module attributes {stable_mosaic.version = 11 : i64} {
  func.func @_ln_linear_kernel(%arg0: i32, %arg1: i32, %arg2: memref<32x128xf32, #tpu.memory_space<vmem>>, %arg3: memref<1x128xf32, #tpu.memory_space<vmem>>, %arg4: memref<1x128xf32, #tpu.memory_space<vmem>>, %arg5: memref<128x384xf32, #tpu.memory_space<vmem>>, %arg6: memref<1x384xf32, #tpu.memory_space<vmem>>, %arg7: memref<32x384xf32, #tpu.memory_space<vmem>>) attributes {dimension_semantics = [#tpu.dimension_semantics<parallel>, #tpu.dimension_semantics<parallel>], iteration_bounds = array<i64: 1, 1>, scalar_prefetch = 0 : i64, scratch_operands = 0 : i64, tpu.core_type = #tpu.core_type<tc>, window_params = [{transform_indices = @transform_0, window_bounds = array<i64: 32, 128>}, {pipeline_mode = #tpu.pipeline_mode<synchronous>, transform_indices = @transform_1, window_bounds = array<i64: 1, 128>}, {pipeline_mode = #tpu.pipeline_mode<synchronous>, transform_indices = @transform_2, window_bounds = array<i64: 1, 128>}, {transform_indices = @transform_3, window_bounds = array<i64: 128, 384>}, {transform_indices = @transform_4, window_bounds = array<i64: 1, 384>}, {transform_indices = @transform_5, window_bounds = array<i64: 32, 384>}]} {
    %c0 = arith.constant 0 : index
    %c0_0 = arith.constant 0 : index
    %0 = vector.load %arg2[%c0, %c0_0] : memref<32x128xf32, #tpu.memory_space<vmem>>, vector<32x128xf32>
    %cst = arith.constant dense<0.000000e+00> : vector<32xf32>
    %1 = vector.multi_reduction <add>, %0, %cst [1] : vector<32x128xf32> to vector<32xf32>
    %2 = vector.shape_cast %1 : vector<32xf32> to vector<32x1xf32>
    %cst_1 = arith.constant 1.280000e+02 : f32
    %3 = vector.broadcast %cst_1 : f32 to vector<32x1xf32>
    %4 = arith.divf %2, %3 : vector<32x1xf32>
    %5 = vector.broadcast %4 : vector<32x1xf32> to vector<32x128xf32>
    %6 = arith.subf %0, %5 : vector<32x128xf32>
    %7 = arith.mulf %6, %6 : vector<32x128xf32>
    %cst_2 = arith.constant dense<0.000000e+00> : vector<32xf32>
    %8 = vector.multi_reduction <add>, %7, %cst_2 [1] : vector<32x128xf32> to vector<32xf32>
    %9 = vector.shape_cast %8 : vector<32xf32> to vector<32x1xf32>
    %cst_3 = arith.constant 1.280000e+02 : f32
    %10 = vector.broadcast %cst_3 : f32 to vector<32x1xf32>
    %11 = arith.divf %9, %10 : vector<32x1xf32>
    %12 = vector.broadcast %4 : vector<32x1xf32> to vector<32x128xf32>
    %13 = arith.subf %0, %12 : vector<32x128xf32>
    %cst_4 = arith.constant 9.99999974E-6 : f32
    %14 = vector.broadcast %cst_4 : f32 to vector<32x1xf32>
    %15 = arith.addf %11, %14 : vector<32x1xf32>
    %16 = math.rsqrt %15 : vector<32x1xf32>
    %17 = vector.broadcast %16 : vector<32x1xf32> to vector<32x128xf32>
    %18 = arith.mulf %13, %17 : vector<32x128xf32>
    %c0_5 = arith.constant 0 : index
    %c0_6 = arith.constant 0 : index
    %19 = vector.load %arg3[%c0_5, %c0_6] : memref<1x128xf32, #tpu.memory_space<vmem>>, vector<1x128xf32>
    %20 = vector.broadcast %19 : vector<1x128xf32> to vector<32x128xf32>
    %21 = arith.mulf %18, %20 : vector<32x128xf32>
    %c0_7 = arith.constant 0 : index
    %c0_8 = arith.constant 0 : index
    %22 = vector.load %arg4[%c0_7, %c0_8] : memref<1x128xf32, #tpu.memory_space<vmem>>, vector<1x128xf32>
    %23 = vector.broadcast %22 : vector<1x128xf32> to vector<32x128xf32>
    %24 = arith.addf %21, %23 : vector<32x128xf32>
    %c0_9 = arith.constant 0 : index
    %c0_10 = arith.constant 0 : index
    %25 = vector.load %arg5[%c0_9, %c0_10] : memref<128x384xf32, #tpu.memory_space<vmem>>, vector<128x384xf32>
    %cst_11 = arith.constant dense<0.000000e+00> : vector<32x384xf32>
    %26 = tpu.matmul %24, %25, %cst_11 {dimension_numbers = #tpu.dot_dimension_numbers<[1], [0], [0], [1], [0, 0, 1, 1], [], []>} : vector<32x128xf32>, vector<128x384xf32>, vector<32x384xf32> -> vector<32x384xf32>
    %c0_12 = arith.constant 0 : index
    %c0_13 = arith.constant 0 : index
    %27 = vector.load %arg6[%c0_12, %c0_13] : memref<1x384xf32, #tpu.memory_space<vmem>>, vector<1x384xf32>
    %28 = vector.broadcast %27 : vector<1x384xf32> to vector<32x384xf32>
    %29 = arith.addf %26, %28 : vector<32x384xf32>
    %cst_14 = arith.constant 2.560000e+02 : f32
    %30 = vector.broadcast %cst_14 : f32 to vector<32x384xf32>
    %31 = arith.mulf %29, %30 : vector<32x384xf32>
    %32 = math.roundeven %31 : vector<32x384xf32>
    %cst_15 = arith.constant -3.276800e+04 : f32
    %cst_16 = arith.constant 3.276700e+04 : f32
    %33 = vector.broadcast %cst_15 : f32 to vector<32x384xf32>
    %34 = arith.maximumf %33, %32 : vector<32x384xf32>
    %35 = vector.broadcast %cst_16 : f32 to vector<32x384xf32>
    %36 = arith.minimumf %35, %34 : vector<32x384xf32>
    %cst_17 = arith.constant 3.906250e-03 : f32
    %37 = vector.broadcast %cst_17 : f32 to vector<32x384xf32>
    %38 = arith.mulf %36, %37 : vector<32x384xf32>
    %c0_18 = arith.constant 0 : index
    %c0_19 = arith.constant 0 : index
    %39 = vector.load %arg7[%c0_18, %c0_19] : memref<32x384xf32, #tpu.memory_space<vmem>>, vector<32x384xf32>
    tpu.vector_store %arg7[%c0_18, %c0_19], %38 {strides = array<i32>} : memref<32x384xf32, #tpu.memory_space<vmem>>, vector<32x384xf32>,
    return
  }
  func.func @transform_0(%arg0: i32, %arg1: i32) -> (i32, i32) {
    %c0_i32 = arith.constant 0 : i32
    %c0_i32_0 = arith.constant 0 : i32
    return %arg0, %c0_i32 : i32, i32
  }
  func.func @transform_1(%arg0: i32, %arg1: i32) -> (i32, i32) {
    %c0_i32 = arith.constant 0 : i32
    %c0_i32_0 = arith.constant 0 : i32
    %c0_i32_1 = arith.constant 0 : i32
    return %c0_i32, %c0_i32_0 : i32, i32
  }
  func.func @transform_2(%arg0: i32, %arg1: i32) -> (i32, i32) {
    %c0_i32 = arith.constant 0 : i32
    %c0_i32_0 = arith.constant 0 : i32
    %c0_i32_1 = arith.constant 0 : i32
    return %c0_i32, %c0_i32_0 : i32, i32
  }
  func.func @transform_3(%arg0: i32, %arg1: i32) -> (i32, i32) {
    %c0_i32 = arith.constant 0 : i32
    %c0_i32_0 = arith.constant 0 : i32
    return %c0_i32, %arg1 : i32, i32
  }
  func.func @transform_4(%arg0: i32, %arg1: i32) -> (i32, i32) {
    %c0_i32 = arith.constant 0 : i32
    %c0_i32_0 = arith.constant 0 : i32
    return %c0_i32, %arg1 : i32, i32
  }
  func.func @transform_5(%arg0: i32, %arg1: i32) -> (i32, i32) {
    %c0_i32 = arith.constant 0 : i32
    return %arg0, %arg1 : i32, i32
  }
}

module attributes {stable_mosaic.version = 11 : i64} {
  func.func @_mlp_block_kernel(%arg0: i32, %arg1: memref<32x128xf32, #tpu.memory_space<vmem>>, %arg2: memref<1x128xf32, #tpu.memory_space<vmem>>, %arg3: memref<1x128xf32, #tpu.memory_space<vmem>>, %arg4: memref<128x64xf32, #tpu.memory_space<vmem>>, %arg5: memref<1x64xf32, #tpu.memory_space<vmem>>, %arg6: memref<64x128xf32, #tpu.memory_space<vmem>>, %arg7: memref<1x128xf32, #tpu.memory_space<vmem>>, %arg8: memref<32x128xf32, #tpu.memory_space<vmem>>) attributes {dimension_semantics = [#tpu.dimension_semantics<parallel>], iteration_bounds = array<i64: 1>, scalar_prefetch = 0 : i64, scratch_operands = 0 : i64, tpu.core_type = #tpu.core_type<tc>, window_params = [{transform_indices = @transform_0, window_bounds = array<i64: 32, 128>}, {pipeline_mode = #tpu.pipeline_mode<synchronous>, transform_indices = @transform_1, window_bounds = array<i64: 1, 128>}, {pipeline_mode = #tpu.pipeline_mode<synchronous>, transform_indices = @transform_2, window_bounds = array<i64: 1, 128>}, {pipeline_mode = #tpu.pipeline_mode<synchronous>, transform_indices = @transform_3, window_bounds = array<i64: 128, 64>}, {pipeline_mode = #tpu.pipeline_mode<synchronous>, transform_indices = @transform_4, window_bounds = array<i64: 1, 64>}, {pipeline_mode = #tpu.pipeline_mode<synchronous>, transform_indices = @transform_5, window_bounds = array<i64: 64, 128>}, {pipeline_mode = #tpu.pipeline_mode<synchronous>, transform_indices = @transform_6, window_bounds = array<i64: 1, 128>}, {transform_indices = @transform_7, window_bounds = array<i64: 32, 128>}]} {
    %c0 = arith.constant 0 : index
    %c0_0 = arith.constant 0 : index
    %0 = vector.load %arg1[%c0, %c0_0] : memref<32x128xf32, #tpu.memory_space<vmem>>, vector<32x128xf32>
    %cst = arith.constant dense<0.000000e+00> : vector<32xf32>
    %1 = vector.multi_reduction <add>, %0, %cst [1] : vector<32x128xf32> to vector<32xf32>
    %2 = vector.shape_cast %1 : vector<32xf32> to vector<32x1xf32>
    %cst_1 = arith.constant 1.280000e+02 : f32
    %3 = vector.broadcast %cst_1 : f32 to vector<32x1xf32>
    %4 = arith.divf %2, %3 : vector<32x1xf32>
    %5 = vector.broadcast %4 : vector<32x1xf32> to vector<32x128xf32>
    %6 = arith.subf %0, %5 : vector<32x128xf32>
    %7 = arith.mulf %6, %6 : vector<32x128xf32>
    %cst_2 = arith.constant dense<0.000000e+00> : vector<32xf32>
    %8 = vector.multi_reduction <add>, %7, %cst_2 [1] : vector<32x128xf32> to vector<32xf32>
    %9 = vector.shape_cast %8 : vector<32xf32> to vector<32x1xf32>
    %cst_3 = arith.constant 1.280000e+02 : f32
    %10 = vector.broadcast %cst_3 : f32 to vector<32x1xf32>
    %11 = arith.divf %9, %10 : vector<32x1xf32>
    %12 = vector.broadcast %4 : vector<32x1xf32> to vector<32x128xf32>
    %13 = arith.subf %0, %12 : vector<32x128xf32>
    %cst_4 = arith.constant 9.99999974E-6 : f32
    %14 = vector.broadcast %cst_4 : f32 to vector<32x1xf32>
    %15 = arith.addf %11, %14 : vector<32x1xf32>
    %16 = math.rsqrt %15 : vector<32x1xf32>
    %17 = vector.broadcast %16 : vector<32x1xf32> to vector<32x128xf32>
    %18 = arith.mulf %13, %17 : vector<32x128xf32>
    %c0_5 = arith.constant 0 : index
    %c0_6 = arith.constant 0 : index
    %19 = vector.load %arg2[%c0_5, %c0_6] : memref<1x128xf32, #tpu.memory_space<vmem>>, vector<1x128xf32>
    %20 = vector.broadcast %19 : vector<1x128xf32> to vector<32x128xf32>
    %21 = arith.mulf %18, %20 : vector<32x128xf32>
    %c0_7 = arith.constant 0 : index
    %c0_8 = arith.constant 0 : index
    %22 = vector.load %arg3[%c0_7, %c0_8] : memref<1x128xf32, #tpu.memory_space<vmem>>, vector<1x128xf32>
    %23 = vector.broadcast %22 : vector<1x128xf32> to vector<32x128xf32>
    %24 = arith.addf %21, %23 : vector<32x128xf32>
    %c0_9 = arith.constant 0 : index
    %c0_10 = arith.constant 0 : index
    %25 = vector.load %arg4[%c0_9, %c0_10] : memref<128x64xf32, #tpu.memory_space<vmem>>, vector<128x64xf32>
    %cst_11 = arith.constant dense<0.000000e+00> : vector<32x64xf32>
    %26 = tpu.matmul %24, %25, %cst_11 {dimension_numbers = #tpu.dot_dimension_numbers<[1], [0], [0], [1], [0, 0, 1, 1], [], []>} : vector<32x128xf32>, vector<128x64xf32>, vector<32x64xf32> -> vector<32x64xf32>
    %c0_12 = arith.constant 0 : index
    %c0_13 = arith.constant 0 : index
    %27 = vector.load %arg5[%c0_12, %c0_13] : memref<1x64xf32, #tpu.memory_space<vmem>>, vector<1x64xf32>
    %28 = vector.broadcast %27 : vector<1x64xf32> to vector<32x64xf32>
    %29 = arith.addf %26, %28 : vector<32x64xf32>
    %cst_14 = arith.constant 2.560000e+02 : f32
    %30 = vector.broadcast %cst_14 : f32 to vector<32x64xf32>
    %31 = arith.mulf %29, %30 : vector<32x64xf32>
    %32 = math.roundeven %31 : vector<32x64xf32>
    %cst_15 = arith.constant -3.276800e+04 : f32
    %cst_16 = arith.constant 3.276700e+04 : f32
    %33 = vector.broadcast %cst_15 : f32 to vector<32x64xf32>
    %34 = arith.maximumf %33, %32 : vector<32x64xf32>
    %35 = vector.broadcast %cst_16 : f32 to vector<32x64xf32>
    %36 = arith.minimumf %35, %34 : vector<32x64xf32>
    %cst_17 = arith.constant 3.906250e-03 : f32
    %37 = vector.broadcast %cst_17 : f32 to vector<32x64xf32>
    %38 = arith.mulf %36, %37 : vector<32x64xf32>
    %cst_18 = arith.constant 0.000000e+00 : f32
    %39 = vector.broadcast %cst_18 : f32 to vector<32x64xf32>
    %40 = arith.maximumf %38, %39 : vector<32x64xf32>
    %c0_19 = arith.constant 0 : index
    %c0_20 = arith.constant 0 : index
    %41 = vector.load %arg6[%c0_19, %c0_20] : memref<64x128xf32, #tpu.memory_space<vmem>>, vector<64x128xf32>
    %cst_21 = arith.constant dense<0.000000e+00> : vector<32x128xf32>
    %42 = tpu.matmul %40, %41, %cst_21 {dimension_numbers = #tpu.dot_dimension_numbers<[1], [0], [0], [1], [0, 0, 1, 1], [], []>} : vector<32x64xf32>, vector<64x128xf32>, vector<32x128xf32> -> vector<32x128xf32>
    %c0_22 = arith.constant 0 : index
    %c0_23 = arith.constant 0 : index
    %43 = vector.load %arg7[%c0_22, %c0_23] : memref<1x128xf32, #tpu.memory_space<vmem>>, vector<1x128xf32>
    %44 = vector.broadcast %43 : vector<1x128xf32> to vector<32x128xf32>
    %45 = arith.addf %42, %44 : vector<32x128xf32>
    %cst_24 = arith.constant 2.560000e+02 : f32
    %46 = vector.broadcast %cst_24 : f32 to vector<32x128xf32>
    %47 = arith.mulf %45, %46 : vector<32x128xf32>
    %48 = math.roundeven %47 : vector<32x128xf32>
    %cst_25 = arith.constant -3.276800e+04 : f32
    %cst_26 = arith.constant 3.276700e+04 : f32
    %49 = vector.broadcast %cst_25 : f32 to vector<32x128xf32>
    %50 = arith.maximumf %49, %48 : vector<32x128xf32>
    %51 = vector.broadcast %cst_26 : f32 to vector<32x128xf32>
    %52 = arith.minimumf %51, %50 : vector<32x128xf32>
    %cst_27 = arith.constant 3.906250e-03 : f32
    %53 = vector.broadcast %cst_27 : f32 to vector<32x128xf32>
    %54 = arith.mulf %52, %53 : vector<32x128xf32>
    %55 = arith.addf %0, %54 : vector<32x128xf32>
    %cst_28 = arith.constant 2.560000e+02 : f32
    %56 = vector.broadcast %cst_28 : f32 to vector<32x128xf32>
    %57 = arith.mulf %55, %56 : vector<32x128xf32>
    %58 = math.roundeven %57 : vector<32x128xf32>
    %cst_29 = arith.constant -3.276800e+04 : f32
    %cst_30 = arith.constant 3.276700e+04 : f32
    %59 = vector.broadcast %cst_29 : f32 to vector<32x128xf32>
    %60 = arith.maximumf %59, %58 : vector<32x128xf32>
    %61 = vector.broadcast %cst_30 : f32 to vector<32x128xf32>
    %62 = arith.minimumf %61, %60 : vector<32x128xf32>
    %cst_31 = arith.constant 3.906250e-03 : f32
    %63 = vector.broadcast %cst_31 : f32 to vector<32x128xf32>
    %64 = arith.mulf %62, %63 : vector<32x128xf32>
    %c0_32 = arith.constant 0 : index
    %c0_33 = arith.constant 0 : index
    %65 = vector.load %arg8[%c0_32, %c0_33] : memref<32x128xf32, #tpu.memory_space<vmem>>, vector<32x128xf32>
    tpu.vector_store %arg8[%c0_32, %c0_33], %64 {strides = array<i32>} : memref<32x128xf32, #tpu.memory_space<vmem>>, vector<32x128xf32>,
    return
  }
  func.func @transform_0(%arg0: i32) -> (i32, i32) {
    %c0_i32 = arith.constant 0 : i32
    %c0_i32_0 = arith.constant 0 : i32
    return %arg0, %c0_i32 : i32, i32
  }
  func.func @transform_1(%arg0: i32) -> (i32, i32) {
    %c0_i32 = arith.constant 0 : i32
    %c0_i32_0 = arith.constant 0 : i32
    %c0_i32_1 = arith.constant 0 : i32
    return %c0_i32, %c0_i32_0 : i32, i32
  }
  func.func @transform_2(%arg0: i32) -> (i32, i32) {
    %c0_i32 = arith.constant 0 : i32
    %c0_i32_0 = arith.constant 0 : i32
    %c0_i32_1 = arith.constant 0 : i32
    return %c0_i32, %c0_i32_0 : i32, i32
  }
  func.func @transform_3(%arg0: i32) -> (i32, i32) {
    %c0_i32 = arith.constant 0 : i32
    %c0_i32_0 = arith.constant 0 : i32
    %c0_i32_1 = arith.constant 0 : i32
    return %c0_i32, %c0_i32_0 : i32, i32
  }
  func.func @transform_4(%arg0: i32) -> (i32, i32) {
    %c0_i32 = arith.constant 0 : i32
    %c0_i32_0 = arith.constant 0 : i32
    %c0_i32_1 = arith.constant 0 : i32
    return %c0_i32, %c0_i32_0 : i32, i32
  }
  func.func @transform_5(%arg0: i32) -> (i32, i32) {
    %c0_i32 = arith.constant 0 : i32
    %c0_i32_0 = arith.constant 0 : i32
    %c0_i32_1 = arith.constant 0 : i32
    return %c0_i32, %c0_i32_0 : i32, i32
  }
  func.func @transform_6(%arg0: i32) -> (i32, i32) {
    %c0_i32 = arith.constant 0 : i32
    %c0_i32_0 = arith.constant 0 : i32
    %c0_i32_1 = arith.constant 0 : i32
    return %c0_i32, %c0_i32_0 : i32, i32
  }
  func.func @transform_7(%arg0: i32) -> (i32, i32) {
    %c0_i32 = arith.constant 0 : i32
    %c0_i32_0 = arith.constant 0 : i32
    return %arg0, %c0_i32 : i32, i32
  }
}

module attributes {stable_mosaic.version = 11 : i64} {
  func.func @_attn_block_kernel(%arg0: i32, %arg1: memref<1x16x384xf32, #tpu.memory_space<vmem>>, %arg2: memref<1x16x128xf32, #tpu.memory_space<vmem>>, %arg3: memref<128x128xf32, #tpu.memory_space<vmem>>, %arg4: memref<1x128xf32, #tpu.memory_space<vmem>>, %arg5: memref<1x16x128xf32, #tpu.memory_space<vmem>>) attributes {dimension_semantics = [#tpu.dimension_semantics<parallel>], iteration_bounds = array<i64: 2>, scalar_prefetch = 0 : i64, scratch_operands = 0 : i64, tpu.core_type = #tpu.core_type<tc>, window_params = [{transform_indices = @transform_0, window_bounds = array<i64: 1, 16, 384>}, {transform_indices = @transform_1, window_bounds = array<i64: 1, 16, 128>}, {pipeline_mode = #tpu.pipeline_mode<synchronous>, transform_indices = @transform_2, window_bounds = array<i64: 128, 128>}, {pipeline_mode = #tpu.pipeline_mode<synchronous>, transform_indices = @transform_3, window_bounds = array<i64: 1, 128>}, {transform_indices = @transform_4, window_bounds = array<i64: 1, 16, 128>}]} {
    %c0 = arith.constant 0 : index
    %c0_0 = arith.constant 0 : index
    %c0_1 = arith.constant 0 : index
    %0 = vector.load %arg1[%c0, %c0_0, %c0_1] : memref<1x16x384xf32, #tpu.memory_space<vmem>>, vector<1x16x384xf32>
    %1 = vector.shape_cast %0 : vector<1x16x384xf32> to vector<16x384xf32>
    %2 = vector.extract_strided_slice %1 {offsets = [0, 0], sizes = [16, 32], strides = [1, 1]} : vector<16x384xf32> to vector<16x32xf32>
    %3 = vector.extract_strided_slice %1 {offsets = [0, 128], sizes = [16, 32], strides = [1, 1]} : vector<16x384xf32> to vector<16x32xf32>
    %4 = vector.extract_strided_slice %1 {offsets = [0, 256], sizes = [16, 32], strides = [1, 1]} : vector<16x384xf32> to vector<16x32xf32>
    %cst = arith.constant dense<0.000000e+00> : vector<16x16xf32>
    %5 = tpu.matmul %2, %3, %cst {dimension_numbers = #tpu.dot_dimension_numbers<[1], [1], [0], [0], [0, 0, 1, 0], [], []>} : vector<16x32xf32>, vector<16x32xf32>, vector<16x16xf32> -> vector<16x16xf32>
    %cst_2 = arith.constant 0.176776692 : f32
    %6 = vector.broadcast %cst_2 : f32 to vector<16x16xf32>
    %7 = arith.mulf %5, %6 : vector<16x16xf32>
    %cst_3 = arith.constant dense<0xFF800000> : vector<16xf32>
    %8 = vector.multi_reduction <maximumf>, %7, %cst_3 [1] : vector<16x16xf32> to vector<16xf32>
    %9 = vector.shape_cast %8 : vector<16xf32> to vector<16x1xf32>
    %10 = vector.broadcast %9 : vector<16x1xf32> to vector<16x16xf32>
    %11 = arith.subf %7, %10 : vector<16x16xf32>
    %12 = math.exp %11 : vector<16x16xf32>
    %cst_4 = arith.constant dense<0.000000e+00> : vector<16xf32>
    %13 = vector.multi_reduction <add>, %12, %cst_4 [1] : vector<16x16xf32> to vector<16xf32>
    %14 = vector.shape_cast %13 : vector<16xf32> to vector<16x1xf32>
    %15 = tpu.reciprocal %14 {approx = true} : vector<16x1xf32> -> vector<16x1xf32>
    %16 = vector.broadcast %15 : vector<16x1xf32> to vector<16x16xf32>
    %17 = arith.mulf %12, %16 : vector<16x16xf32>
    %cst_5 = arith.constant 2.560000e+02 : f32
    %18 = vector.broadcast %cst_5 : f32 to vector<16x16xf32>
    %19 = arith.mulf %17, %18 : vector<16x16xf32>
    %20 = math.roundeven %19 : vector<16x16xf32>
    %cst_6 = arith.constant -3.276800e+04 : f32
    %cst_7 = arith.constant 3.276700e+04 : f32
    %21 = vector.broadcast %cst_6 : f32 to vector<16x16xf32>
    %22 = arith.maximumf %21, %20 : vector<16x16xf32>
    %23 = vector.broadcast %cst_7 : f32 to vector<16x16xf32>
    %24 = arith.minimumf %23, %22 : vector<16x16xf32>
    %cst_8 = arith.constant 3.906250e-03 : f32
    %25 = vector.broadcast %cst_8 : f32 to vector<16x16xf32>
    %26 = arith.mulf %24, %25 : vector<16x16xf32>
    %cst_9 = arith.constant dense<0.000000e+00> : vector<16x32xf32>
    %27 = tpu.matmul %26, %4, %cst_9 {dimension_numbers = #tpu.dot_dimension_numbers<[1], [0], [0], [1], [0, 0, 1, 1], [], []>} : vector<16x16xf32>, vector<16x32xf32>, vector<16x32xf32> -> vector<16x32xf32>
    %28 = vector.extract_strided_slice %1 {offsets = [0, 32], sizes = [16, 32], strides = [1, 1]} : vector<16x384xf32> to vector<16x32xf32>
    %29 = vector.extract_strided_slice %1 {offsets = [0, 160], sizes = [16, 32], strides = [1, 1]} : vector<16x384xf32> to vector<16x32xf32>
    %30 = vector.extract_strided_slice %1 {offsets = [0, 288], sizes = [16, 32], strides = [1, 1]} : vector<16x384xf32> to vector<16x32xf32>
    %cst_10 = arith.constant dense<0.000000e+00> : vector<16x16xf32>
    %31 = tpu.matmul %28, %29, %cst_10 {dimension_numbers = #tpu.dot_dimension_numbers<[1], [1], [0], [0], [0, 0, 1, 0], [], []>} : vector<16x32xf32>, vector<16x32xf32>, vector<16x16xf32> -> vector<16x16xf32>
    %cst_11 = arith.constant 0.176776692 : f32
    %32 = vector.broadcast %cst_11 : f32 to vector<16x16xf32>
    %33 = arith.mulf %31, %32 : vector<16x16xf32>
    %cst_12 = arith.constant dense<0xFF800000> : vector<16xf32>
    %34 = vector.multi_reduction <maximumf>, %33, %cst_12 [1] : vector<16x16xf32> to vector<16xf32>
    %35 = vector.shape_cast %34 : vector<16xf32> to vector<16x1xf32>
    %36 = vector.broadcast %35 : vector<16x1xf32> to vector<16x16xf32>
    %37 = arith.subf %33, %36 : vector<16x16xf32>
    %38 = math.exp %37 : vector<16x16xf32>
    %cst_13 = arith.constant dense<0.000000e+00> : vector<16xf32>
    %39 = vector.multi_reduction <add>, %38, %cst_13 [1] : vector<16x16xf32> to vector<16xf32>
    %40 = vector.shape_cast %39 : vector<16xf32> to vector<16x1xf32>
    %41 = tpu.reciprocal %40 {approx = true} : vector<16x1xf32> -> vector<16x1xf32>
    %42 = vector.broadcast %41 : vector<16x1xf32> to vector<16x16xf32>
    %43 = arith.mulf %38, %42 : vector<16x16xf32>
    %cst_14 = arith.constant 2.560000e+02 : f32
    %44 = vector.broadcast %cst_14 : f32 to vector<16x16xf32>
    %45 = arith.mulf %43, %44 : vector<16x16xf32>
    %46 = math.roundeven %45 : vector<16x16xf32>
    %cst_15 = arith.constant -3.276800e+04 : f32
    %cst_16 = arith.constant 3.276700e+04 : f32
    %47 = vector.broadcast %cst_15 : f32 to vector<16x16xf32>
    %48 = arith.maximumf %47, %46 : vector<16x16xf32>
    %49 = vector.broadcast %cst_16 : f32 to vector<16x16xf32>
    %50 = arith.minimumf %49, %48 : vector<16x16xf32>
    %cst_17 = arith.constant 3.906250e-03 : f32
    %51 = vector.broadcast %cst_17 : f32 to vector<16x16xf32>
    %52 = arith.mulf %50, %51 : vector<16x16xf32>
    %cst_18 = arith.constant dense<0.000000e+00> : vector<16x32xf32>
    %53 = tpu.matmul %52, %30, %cst_18 {dimension_numbers = #tpu.dot_dimension_numbers<[1], [0], [0], [1], [0, 0, 1, 1], [], []>} : vector<16x16xf32>, vector<16x32xf32>, vector<16x32xf32> -> vector<16x32xf32>
    %54 = vector.extract_strided_slice %1 {offsets = [0, 64], sizes = [16, 32], strides = [1, 1]} : vector<16x384xf32> to vector<16x32xf32>
    %55 = vector.extract_strided_slice %1 {offsets = [0, 192], sizes = [16, 32], strides = [1, 1]} : vector<16x384xf32> to vector<16x32xf32>
    %56 = vector.extract_strided_slice %1 {offsets = [0, 320], sizes = [16, 32], strides = [1, 1]} : vector<16x384xf32> to vector<16x32xf32>
    %cst_19 = arith.constant dense<0.000000e+00> : vector<16x16xf32>
    %57 = tpu.matmul %54, %55, %cst_19 {dimension_numbers = #tpu.dot_dimension_numbers<[1], [1], [0], [0], [0, 0, 1, 0], [], []>} : vector<16x32xf32>, vector<16x32xf32>, vector<16x16xf32> -> vector<16x16xf32>
    %cst_20 = arith.constant 0.176776692 : f32
    %58 = vector.broadcast %cst_20 : f32 to vector<16x16xf32>
    %59 = arith.mulf %57, %58 : vector<16x16xf32>
    %cst_21 = arith.constant dense<0xFF800000> : vector<16xf32>
    %60 = vector.multi_reduction <maximumf>, %59, %cst_21 [1] : vector<16x16xf32> to vector<16xf32>
    %61 = vector.shape_cast %60 : vector<16xf32> to vector<16x1xf32>
    %62 = vector.broadcast %61 : vector<16x1xf32> to vector<16x16xf32>
    %63 = arith.subf %59, %62 : vector<16x16xf32>
    %64 = math.exp %63 : vector<16x16xf32>
    %cst_22 = arith.constant dense<0.000000e+00> : vector<16xf32>
    %65 = vector.multi_reduction <add>, %64, %cst_22 [1] : vector<16x16xf32> to vector<16xf32>
    %66 = vector.shape_cast %65 : vector<16xf32> to vector<16x1xf32>
    %67 = tpu.reciprocal %66 {approx = true} : vector<16x1xf32> -> vector<16x1xf32>
    %68 = vector.broadcast %67 : vector<16x1xf32> to vector<16x16xf32>
    %69 = arith.mulf %64, %68 : vector<16x16xf32>
    %cst_23 = arith.constant 2.560000e+02 : f32
    %70 = vector.broadcast %cst_23 : f32 to vector<16x16xf32>
    %71 = arith.mulf %69, %70 : vector<16x16xf32>
    %72 = math.roundeven %71 : vector<16x16xf32>
    %cst_24 = arith.constant -3.276800e+04 : f32
    %cst_25 = arith.constant 3.276700e+04 : f32
    %73 = vector.broadcast %cst_24 : f32 to vector<16x16xf32>
    %74 = arith.maximumf %73, %72 : vector<16x16xf32>
    %75 = vector.broadcast %cst_25 : f32 to vector<16x16xf32>
    %76 = arith.minimumf %75, %74 : vector<16x16xf32>
    %cst_26 = arith.constant 3.906250e-03 : f32
    %77 = vector.broadcast %cst_26 : f32 to vector<16x16xf32>
    %78 = arith.mulf %76, %77 : vector<16x16xf32>
    %cst_27 = arith.constant dense<0.000000e+00> : vector<16x32xf32>
    %79 = tpu.matmul %78, %56, %cst_27 {dimension_numbers = #tpu.dot_dimension_numbers<[1], [0], [0], [1], [0, 0, 1, 1], [], []>} : vector<16x16xf32>, vector<16x32xf32>, vector<16x32xf32> -> vector<16x32xf32>
    %80 = vector.extract_strided_slice %1 {offsets = [0, 96], sizes = [16, 32], strides = [1, 1]} : vector<16x384xf32> to vector<16x32xf32>
    %81 = vector.extract_strided_slice %1 {offsets = [0, 224], sizes = [16, 32], strides = [1, 1]} : vector<16x384xf32> to vector<16x32xf32>
    %82 = vector.extract_strided_slice %1 {offsets = [0, 352], sizes = [16, 32], strides = [1, 1]} : vector<16x384xf32> to vector<16x32xf32>
    %cst_28 = arith.constant dense<0.000000e+00> : vector<16x16xf32>
    %83 = tpu.matmul %80, %81, %cst_28 {dimension_numbers = #tpu.dot_dimension_numbers<[1], [1], [0], [0], [0, 0, 1, 0], [], []>} : vector<16x32xf32>, vector<16x32xf32>, vector<16x16xf32> -> vector<16x16xf32>
    %cst_29 = arith.constant 0.176776692 : f32
    %84 = vector.broadcast %cst_29 : f32 to vector<16x16xf32>
    %85 = arith.mulf %83, %84 : vector<16x16xf32>
    %cst_30 = arith.constant dense<0xFF800000> : vector<16xf32>
    %86 = vector.multi_reduction <maximumf>, %85, %cst_30 [1] : vector<16x16xf32> to vector<16xf32>
    %87 = vector.shape_cast %86 : vector<16xf32> to vector<16x1xf32>
    %88 = vector.broadcast %87 : vector<16x1xf32> to vector<16x16xf32>
    %89 = arith.subf %85, %88 : vector<16x16xf32>
    %90 = math.exp %89 : vector<16x16xf32>
    %cst_31 = arith.constant dense<0.000000e+00> : vector<16xf32>
    %91 = vector.multi_reduction <add>, %90, %cst_31 [1] : vector<16x16xf32> to vector<16xf32>
    %92 = vector.shape_cast %91 : vector<16xf32> to vector<16x1xf32>
    %93 = tpu.reciprocal %92 {approx = true} : vector<16x1xf32> -> vector<16x1xf32>
    %94 = vector.broadcast %93 : vector<16x1xf32> to vector<16x16xf32>
    %95 = arith.mulf %90, %94 : vector<16x16xf32>
    %cst_32 = arith.constant 2.560000e+02 : f32
    %96 = vector.broadcast %cst_32 : f32 to vector<16x16xf32>
    %97 = arith.mulf %95, %96 : vector<16x16xf32>
    %98 = math.roundeven %97 : vector<16x16xf32>
    %cst_33 = arith.constant -3.276800e+04 : f32
    %cst_34 = arith.constant 3.276700e+04 : f32
    %99 = vector.broadcast %cst_33 : f32 to vector<16x16xf32>
    %100 = arith.maximumf %99, %98 : vector<16x16xf32>
    %101 = vector.broadcast %cst_34 : f32 to vector<16x16xf32>
    %102 = arith.minimumf %101, %100 : vector<16x16xf32>
    %cst_35 = arith.constant 3.906250e-03 : f32
    %103 = vector.broadcast %cst_35 : f32 to vector<16x16xf32>
    %104 = arith.mulf %102, %103 : vector<16x16xf32>
    %cst_36 = arith.constant dense<0.000000e+00> : vector<16x32xf32>
    %105 = tpu.matmul %104, %82, %cst_36 {dimension_numbers = #tpu.dot_dimension_numbers<[1], [0], [0], [1], [0, 0, 1, 1], [], []>} : vector<16x16xf32>, vector<16x32xf32>, vector<16x32xf32> -> vector<16x32xf32>
    %106 = tpu.concatenate %27, %53, %79, %105 in 1 : vector<16x32xf32>, vector<16x32xf32>, vector<16x32xf32>, vector<16x32xf32> -> vector<16x128xf32>
    %c0_37 = arith.constant 0 : index
    %c0_38 = arith.constant 0 : index
    %107 = vector.load %arg3[%c0_37, %c0_38] : memref<128x128xf32, #tpu.memory_space<vmem>>, vector<128x128xf32>
    %cst_39 = arith.constant dense<0.000000e+00> : vector<16x128xf32>
    %108 = tpu.matmul %106, %107, %cst_39 {dimension_numbers = #tpu.dot_dimension_numbers<[1], [0], [0], [1], [0, 0, 1, 1], [], []>} : vector<16x128xf32>, vector<128x128xf32>, vector<16x128xf32> -> vector<16x128xf32>
    %c0_40 = arith.constant 0 : index
    %c0_41 = arith.constant 0 : index
    %109 = vector.load %arg4[%c0_40, %c0_41] : memref<1x128xf32, #tpu.memory_space<vmem>>, vector<1x128xf32>
    %110 = vector.broadcast %109 : vector<1x128xf32> to vector<16x128xf32>
    %111 = arith.addf %108, %110 : vector<16x128xf32>
    %cst_42 = arith.constant 2.560000e+02 : f32
    %112 = vector.broadcast %cst_42 : f32 to vector<16x128xf32>
    %113 = arith.mulf %111, %112 : vector<16x128xf32>
    %114 = math.roundeven %113 : vector<16x128xf32>
    %cst_43 = arith.constant -3.276800e+04 : f32
    %cst_44 = arith.constant 3.276700e+04 : f32
    %115 = vector.broadcast %cst_43 : f32 to vector<16x128xf32>
    %116 = arith.maximumf %115, %114 : vector<16x128xf32>
    %117 = vector.broadcast %cst_44 : f32 to vector<16x128xf32>
    %118 = arith.minimumf %117, %116 : vector<16x128xf32>
    %cst_45 = arith.constant 3.906250e-03 : f32
    %119 = vector.broadcast %cst_45 : f32 to vector<16x128xf32>
    %120 = arith.mulf %118, %119 : vector<16x128xf32>
    %c0_46 = arith.constant 0 : index
    %c0_47 = arith.constant 0 : index
    %c0_48 = arith.constant 0 : index
    %121 = vector.load %arg2[%c0_46, %c0_47, %c0_48] : memref<1x16x128xf32, #tpu.memory_space<vmem>>, vector<1x16x128xf32>
    %122 = vector.shape_cast %121 : vector<1x16x128xf32> to vector<16x128xf32>
    %123 = arith.addf %122, %120 : vector<16x128xf32>
    %cst_49 = arith.constant 2.560000e+02 : f32
    %124 = vector.broadcast %cst_49 : f32 to vector<16x128xf32>
    %125 = arith.mulf %123, %124 : vector<16x128xf32>
    %126 = math.roundeven %125 : vector<16x128xf32>
    %cst_50 = arith.constant -3.276800e+04 : f32
    %cst_51 = arith.constant 3.276700e+04 : f32
    %127 = vector.broadcast %cst_50 : f32 to vector<16x128xf32>
    %128 = arith.maximumf %127, %126 : vector<16x128xf32>
    %129 = vector.broadcast %cst_51 : f32 to vector<16x128xf32>
    %130 = arith.minimumf %129, %128 : vector<16x128xf32>
    %cst_52 = arith.constant 3.906250e-03 : f32
    %131 = vector.broadcast %cst_52 : f32 to vector<16x128xf32>
    %132 = arith.mulf %130, %131 : vector<16x128xf32>
    %c0_53 = arith.constant 0 : index
    %c0_54 = arith.constant 0 : index
    %c0_55 = arith.constant 0 : index
    %133 = vector.load %arg5[%c0_53, %c0_54, %c0_55] : memref<1x16x128xf32, #tpu.memory_space<vmem>>, vector<1x16x128xf32>
    %134 = vector.shape_cast %133 : vector<1x16x128xf32> to vector<16x128xf32>
    %135 = vector.shape_cast %132 : vector<16x128xf32> to vector<1x16x128xf32>
    tpu.vector_store %arg5[%c0_53, %c0_54, %c0_55], %135 {strides = array<i32>} : memref<1x16x128xf32, #tpu.memory_space<vmem>>, vector<1x16x128xf32>,
    return
  }
  func.func @transform_0(%arg0: i32) -> (i32, i32, i32) {
    %c0_i32 = arith.constant 0 : i32
    %c0_i32_0 = arith.constant 0 : i32
    %c0_i32_1 = arith.constant 0 : i32
    return %arg0, %c0_i32, %c0_i32_0 : i32, i32, i32
  }
  func.func @transform_1(%arg0: i32) -> (i32, i32, i32) {
    %c0_i32 = arith.constant 0 : i32
    %c0_i32_0 = arith.constant 0 : i32
    %c0_i32_1 = arith.constant 0 : i32
    return %arg0, %c0_i32, %c0_i32_0 : i32, i32, i32
  }
  func.func @transform_2(%arg0: i32) -> (i32, i32) {
    %c0_i32 = arith.constant 0 : i32
    %c0_i32_0 = arith.constant 0 : i32
    %c0_i32_1 = arith.constant 0 : i32
    return %c0_i32, %c0_i32_0 : i32, i32
  }
  func.func @transform_3(%arg0: i32) -> (i32, i32) {
    %c0_i32 = arith.constant 0 : i32
    %c0_i32_0 = arith.constant 0 : i32
    %c0_i32_1 = arith.constant 0 : i32
    return %c0_i32, %c0_i32_0 : i32, i32
  }
  func.func @transform_4(%arg0: i32) -> (i32, i32, i32) {
    %c0_i32 = arith.constant 0 : i32
    %c0_i32_0 = arith.constant 0 : i32
    %c0_i32_1 = arith.constant 0 : i32
    return %arg0, %c0_i32, %c0_i32_0 : i32, i32, i32
  }
}

module attributes {stable_mosaic.version = 11 : i64} {
  func.func @_mean_classifier_kernel(%arg0: i32, %arg1: memref<2x16x128xf32, #tpu.memory_space<vmem>>, %arg2: memref<128x10xf32, #tpu.memory_space<vmem>>, %arg3: memref<1x10xf32, #tpu.memory_space<vmem>>, %arg4: memref<2x10xf32, #tpu.memory_space<vmem>>) attributes {dimension_semantics = [#tpu.dimension_semantics<parallel>], iteration_bounds = array<i64: 1>, scalar_prefetch = 0 : i64, scratch_operands = 0 : i64, tpu.core_type = #tpu.core_type<tc>, window_params = [{transform_indices = @transform_0, window_bounds = array<i64: 2, 16, 128>}, {pipeline_mode = #tpu.pipeline_mode<synchronous>, transform_indices = @transform_1, window_bounds = array<i64: 128, 10>}, {pipeline_mode = #tpu.pipeline_mode<synchronous>, transform_indices = @transform_2, window_bounds = array<i64: 1, 10>}, {transform_indices = @transform_3, window_bounds = array<i64: 2, 10>}]} {
    %c0 = arith.constant 0 : index
    %c0_0 = arith.constant 0 : index
    %c0_1 = arith.constant 0 : index
    %0 = vector.load %arg1[%c0, %c0_0, %c0_1] : memref<2x16x128xf32, #tpu.memory_space<vmem>>, vector<2x16x128xf32>
    %cst = arith.constant dense<0.000000e+00> : vector<2x128xf32>
    %1 = vector.multi_reduction <add>, %0, %cst [1] : vector<2x16x128xf32> to vector<2x128xf32>
    %cst_2 = arith.constant 1.600000e+01 : f32
    %2 = vector.broadcast %cst_2 : f32 to vector<2x128xf32>
    %3 = arith.divf %1, %2 : vector<2x128xf32>
    %c0_3 = arith.constant 0 : index
    %c0_4 = arith.constant 0 : index
    %4 = vector.load %arg2[%c0_3, %c0_4] : memref<128x10xf32, #tpu.memory_space<vmem>>, vector<128x10xf32>
    %cst_5 = arith.constant dense<0.000000e+00> : vector<2x10xf32>
    %5 = tpu.matmul %3, %4, %cst_5 {dimension_numbers = #tpu.dot_dimension_numbers<[1], [0], [0], [1], [0, 0, 1, 1], [], []>} : vector<2x128xf32>, vector<128x10xf32>, vector<2x10xf32> -> vector<2x10xf32>
    %c0_6 = arith.constant 0 : index
    %c0_7 = arith.constant 0 : index
    %6 = vector.load %arg3[%c0_6, %c0_7] : memref<1x10xf32, #tpu.memory_space<vmem>>, vector<1x10xf32>
    %7 = vector.broadcast %6 : vector<1x10xf32> to vector<2x10xf32>
    %8 = arith.addf %5, %7 : vector<2x10xf32>
    %c0_8 = arith.constant 0 : index
    %c0_9 = arith.constant 0 : index
    %9 = vector.load %arg4[%c0_8, %c0_9] : memref<2x10xf32, #tpu.memory_space<vmem>>, vector<2x10xf32>
    tpu.vector_store %arg4[%c0_8, %c0_9], %8 {strides = array<i32>} : memref<2x10xf32, #tpu.memory_space<vmem>>, vector<2x10xf32>,
    return
  }
  func.func @transform_0(%arg0: i32) -> (i32, i32, i32) {
    %c0_i32 = arith.constant 0 : i32
    %c0_i32_0 = arith.constant 0 : i32
    %c0_i32_1 = arith.constant 0 : i32
    return %arg0, %c0_i32, %c0_i32_0 : i32, i32, i32
  }
  func.func @transform_1(%arg0: i32) -> (i32, i32) {
    %c0_i32 = arith.constant 0 : i32
    %c0_i32_0 = arith.constant 0 : i32
    %c0_i32_1 = arith.constant 0 : i32
    return %c0_i32, %c0_i32_0 : i32, i32
  }
  func.func @transform_2(%arg0: i32) -> (i32, i32) {
    %c0_i32 = arith.constant 0 : i32
    %c0_i32_0 = arith.constant 0 : i32
    %c0_i32_1 = arith.constant 0 : i32
    return %c0_i32, %c0_i32_0 : i32, i32
  }
  func.func @transform_3(%arg0: i32) -> (i32, i32) {
    %c0_i32 = arith.constant 0 : i32
    %c0_i32_0 = arith.constant 0 : i32
    return %arg0, %c0_i32 : i32, i32
  }
}

</mosaic_0001>

<llo_original>
// kernel: vit_forward.8
$region0: #{vit_forward.8}
  #allocation0 [shape = 'u32[]', space=smem, size = 0x4, offset = 0x4, fixed_abs, tag = 'smem constant byte address 0x4 - core index']
  #allocation1 [shape = 'u32[144,128]{1,0:T(1,128)}', space=vmem, size = 0x12000, scoped, tag = 'internal scratch']
  %s0 = inlined_call_operand.vmem [shape: f32[32,48], index: 0, kind: input, shape index: {}]
  %s1 = inlined_call_operand.vmem [shape: f32[48,128], index: 1, kind: input, shape index: {}]
  %s2 = inlined_call_operand.vmem [shape: f32[1,128], index: 2, kind: input, shape index: {}]
  %s3 = inlined_call_operand.vmem [shape: f32[16,128], index: 3, kind: input, shape index: {}]
  %s4 = inlined_call_operand.vmem [shape: f32[32,128], index: 4, kind: output, shape index: {}]
  %s5 = sld [smem:[#allocation0]]
  $region49: #{vit_forward.8} parent=0
    _
  %s7 = ssub.s32 1, %s5
  %s8 = scalar_select 0, %s7, %s5
  loop: start=0, step=1, limit=4
  $region2: #{vit_forward.8} parent=0 // loop_pre_header
    _
  $region3: #{vit_forward.8} parent=0 // loop_header
    %s10 = sphi 0, %s14
    %p11 = scmp.ge.s32.totalorder %s10, 4
    %s20 = sphi 0, %s22
    %s23 = sphi 0, %s20
    %s24 = sphi 0, %s23
    %s40 = sphi 0, %s24
    %s44 = sphi 0, %s44
    %s46 = sphi 0, %s44
    %s47 = sphi 0, %s46
    %s61 = sphi 0, %s47
    %s65 = sphi 0, %s65
    %s67 = sphi 0, %s65
    %s68 = sphi 0, %s67
    %s82 = sphi 0, %s68
    %s86 = sphi 0, %s86
    %s88 = sphi 0, %s86
    %s89 = sphi 0, %s88
    %s103 = sphi 0, %s89
    %s109 = sphi 0, %s111
    %s112 = sphi 0, %s109
    %s113 = sphi 0, %s112
    %s129 = sphi 0, %s113
  $region4: #{vit_forward.8} parent=0 // loop_header_branch
    %13 = sbr.rel (%p11) target = $region8
  $region5: #{vit_forward.8} parent=0 // loop_body
    %s15 = ssub.s32 %s10, 1
    %s16 = ssub.s32 %s10, 2
    %s17 = sadd.s32 %s10, 1
    %s18 = ssub.s32 %s10, %s17
    %p19 = scmp.eq.s32.totalorder %s18, 0
    %s21 = sadd.s32 %s20, 1
    %s22 = scalar_select %p19, %s20, %s21
    %p25 = pneg %p19
    %p26 = scmp.eq.s32.totalorder %s10, 1
    %p27 = por %p25, %p26
    %p28 = scmp.ne.s32.totalorder %s20, %s23
    %p29 = scmp.eq.s32.totalorder %s10, 0
    %p30 = por %p28, %p29
    %p31 = scmp.ne.s32.totalorder %s20, %s23
    %p32 = scmp.eq.s32.totalorder %s15, 1
    %p33 = por %p31, %p32
    %p34 = scmp.ne.s32.totalorder %s23, %s24
    %p35 = scmp.eq.s32.totalorder %s15, 0
    %p36 = por %p34, %p35
    %p37 = scmp.ne.s32.totalorder %s23, %s24
    %p38 = scmp.eq.s32.totalorder %s16, 1
    %p39 = por %p37, %p38
    %p41 = scmp.ne.s32.totalorder %s24, %s40
    %p42 = scmp.eq.s32.totalorder %s16, 0
    %p43 = por %p41, %p42
    %s45 = sadd.s32 %s44, 1
    %p48 = scmp.eq.s32.totalorder %s10, 1
    %p49 = scmp.ne.s32.totalorder %s44, %s46
    %p50 = scmp.eq.s32.totalorder %s10, 0
    %p51 = por %p49, %p50
    %p52 = scmp.ne.s32.totalorder %s44, %s46
    %p53 = scmp.eq.s32.totalorder %s15, 1
    %p54 = por %p52, %p53
    %p55 = scmp.ne.s32.totalorder %s46, %s47
    %p56 = scmp.eq.s32.totalorder %s15, 0
    %p57 = por %p55, %p56
    %p58 = scmp.ne.s32.totalorder %s46, %s47
    %p59 = scmp.eq.s32.totalorder %s16, 1
    %p60 = por %p58, %p59
    %p62 = scmp.ne.s32.totalorder %s47, %s61
    %p63 = scmp.eq.s32.totalorder %s16, 0
    %p64 = por %p62, %p63
    %s66 = sadd.s32 %s65, 1
    %p69 = scmp.eq.s32.totalorder %s10, 1
    %p70 = scmp.ne.s32.totalorder %s65, %s67
    %p71 = scmp.eq.s32.totalorder %s10, 0
    %p72 = por %p70, %p71
    %p73 = scmp.ne.s32.totalorder %s65, %s67
    %p74 = scmp.eq.s32.totalorder %s15, 1
    %p75 = por %p73, %p74
    %p76 = scmp.ne.s32.totalorder %s67, %s68
    %p77 = scmp.eq.s32.totalorder %s15, 0
    %p78 = por %p76, %p77
    %p79 = scmp.ne.s32.totalorder %s67, %s68
    %p80 = scmp.eq.s32.totalorder %s16, 1
    %p81 = por %p79, %p80
    %p83 = scmp.ne.s32.totalorder %s68, %s82
    %p84 = scmp.eq.s32.totalorder %s16, 0
    %p85 = por %p83, %p84
    %s87 = sadd.s32 %s86, 1
    %p90 = scmp.eq.s32.totalorder %s10, 1
    %p91 = scmp.ne.s32.totalorder %s86, %s88
    %p92 = scmp.eq.s32.totalorder %s10, 0
    %p93 = por %p91, %p92
    %p94 = scmp.ne.s32.totalorder %s86, %s88
    %p95 = scmp.eq.s32.totalorder %s15, 1
    %p96 = por %p94, %p95
    %p97 = scmp.ne.s32.totalorder %s88, %s89
    %p98 = scmp.eq.s32.totalorder %s15, 0
    %p99 = por %p97, %p98
    %p100 = scmp.ne.s32.totalorder %s88, %s89
    %p101 = scmp.eq.s32.totalorder %s16, 1
    %p102 = por %p100, %p101
    %p104 = scmp.ne.s32.totalorder %s89, %s103
    %p105 = scmp.eq.s32.totalorder %s16, 0
    %p106 = por %p104, %p105
    %s107 = ssub.s32 %s10, %s17
    %p108 = scmp.eq.s32.totalorder %s107, 0
    %s110 = sadd.s32 %s109, 1
    %s111 = scalar_select %p108, %s109, %s110
    %p114 = pneg %p108
    %p115 = scmp.eq.s32.totalorder %s10, 1
    %p116 = por %p114, %p115
    %p117 = scmp.ne.s32.totalorder %s109, %s112
    %p118 = scmp.eq.s32.totalorder %s10, 0
    %p119 = por %p117, %p118
    %p120 = scmp.ne.s32.totalorder %s109, %s112
    %p121 = scmp.eq.s32.totalorder %s15, 1
    %p122 = por %p120, %p121
    %p123 = scmp.ne.s32.totalorder %s112, %s113
    %p124 = scmp.eq.s32.totalorder %s15, 0
    %p125 = por %p123, %p124
    %p126 = scmp.ne.s32.totalorder %s112, %s113
    %p127 = scmp.eq.s32.totalorder %s16, 1
    %p128 = por %p126, %p127
    %p130 = scmp.ne.s32.totalorder %s113, %s129
    %p131 = scmp.eq.s32.totalorder %s16, 0
    %p132 = por %p130, %p131
    %p133 = scmp.le.s32.totalorder 1, %s10
    %p134 = scmp.lt.s32.totalorder %s10, 3
    %p135 = pnand %p133, %p134
    %p136 = pneg %p135
    // Predicated region
    $region9: #{vit_forward.8} parent=5 // pred_check
      _
    $region10: #{vit_forward.8} parent=5 // pred_check_branch
      %138 = sbr.rel (%p135) target = $region12
    $region11: #{vit_forward.8} parent=5 // pred_region
      %s139 = ssub.s32 %s10, 1
      // Predicated region
      $region13: #{vit_forward.8} parent=11 // pred_check
        %p140 = pneg %p57
      $region14: #{vit_forward.8} parent=11 // pred_check_branch
        %142 = sbr.rel (%p140) target = $region16
      $region15: #{vit_forward.8} parent=11 // pred_region
        _
      $region16: #{vit_forward.8} parent=11 // pred_fallthru
        _
      // Predicated region
      $region17: #{vit_forward.8} parent=11 // pred_check
        %p143 = pneg %p78
      $region18: #{vit_forward.8} parent=11 // pred_check_branch
        %145 = sbr.rel (%p143) target = $region20
      $region19: #{vit_forward.8} parent=11 // pred_region
        _
      $region20: #{vit_forward.8} parent=11 // pred_fallthru
        _
      // Predicated region
      $region21: #{vit_forward.8} parent=11 // pred_check
        %p146 = pneg %p99
      $region22: #{vit_forward.8} parent=11 // pred_check_branch
        %148 = sbr.rel (%p146) target = $region24
      $region23: #{vit_forward.8} parent=11 // pred_region
        _
      $region24: #{vit_forward.8} parent=11 // pred_fallthru
        _
    $region12: #{vit_forward.8} parent=5 // pred_fallthru
      _
    %p149 = scmp.lt.s32.totalorder %s10, 2
    // Predicated region
    $region25: #{vit_forward.8} parent=5 // pred_check
      %p150 = pneg %p149
    $region26: #{vit_forward.8} parent=5 // pred_check_branch
      %152 = sbr.rel (%p150) target = $region28
    $region27: #{vit_forward.8} parent=5 // pred_region
      // Predicated region
      $region29: #{vit_forward.8} parent=27 // pred_check
        %p153 = pneg %p30
      $region30: #{vit_forward.8} parent=27 // pred_check_branch
        %155 = sbr.rel (%p153) target = $region32
      $region31: #{vit_forward.8} parent=27 // pred_region
        %s156 = smul.u32 2, %s10
        %p157 = scmp.lt.s32.totalorder %s156, 3
        %s158 = scalar_select %p157, %s156, 3
        %s159 = smul.addr %s158, 8
        %s160 = scalar_lea.vmem %s0, %s159
        %s161 = smul.u32 2, %s10
      $region32: #{vit_forward.8} parent=27 // pred_fallthru
        _
    $region28: #{vit_forward.8} parent=5 // pred_fallthru
      _
    %p162 = scmp.le.s32.totalorder 1, %s10
    %p163 = scmp.lt.s32.totalorder %s10, 3
    %p164 = pnand %p162, %p163
    %p165 = pneg %p164
    // Predicated region
    $region33: #{vit_forward.8} parent=5 // pred_check
      _
    $region34: #{vit_forward.8} parent=5 // pred_check_branch
      %167 = sbr.rel (%p164) target = $region36
    $region35: #{vit_forward.8} parent=5 // pred_region
      %s168 = ssub.s32 %s10, 1
      %s169 = smul.u32 2, %s15
      %p170 = scmp.lt.s32.totalorder %s169, 3
      %s171 = scalar_select %p170, %s169, 3
      %s172 = smul.addr %s171, 8
      %s173 = scalar_lea.vmem %s0, %s172
      %p174 = pneg %p36
      %p175 = pneg %p33
      %p176 = pneg %p57
      %p177 = pneg %p54
      %p178 = pneg %p78
      %p179 = pneg %p75
      %p180 = pneg %p99
      %p181 = pneg %p96
      %p182 = pneg %p125
      %p183 = pneg %p122
      %s184 = smul.u32 2, %s15
      %p185 = scmp.lt.s32.totalorder %s184, 3
      %s186 = scalar_select %p185, %s184, 3
      %s187 = smul.addr %s186, 8
      %s188 = scalar_lea.vmem %s4, %s187
      %s189 = smul.u32 2, %s15
      %p190 = scmp.lt.s32.totalorder %s189, 3
      %s191 = scalar_select %p190, %s189, 3
      %s192 = smul.addr %s191, 8
      %s193 = scalar_lea.vmem %s0, %s192
      %s194 = smul.u32 2, %s15
      %s195 = smul.u32 2, %s15
      %p196 = scmp.lt.s32.totalorder %s195, 3
      %s197 = scalar_select %p196, %s195, 3
      %s198 = smul.addr %s197, 8
      %s199 = scalar_lea.vmem %s4, %s198
      %s200 = smul.u32 2, %s15
      %v201 = vld [vmem:[%s193] sm:$0xff]
      %v202 = vld [vmem:[%s193 + $0x8] sm:$0xff]
      %v203 = vld [vmem:[%s1] sm:$0xff]
      %v204 = vld [vmem:[%s1 + $0x8] sm:$0xff]
      %v205 = vld [vmem:[%s1 + $0x10] sm:$0xff]
      %v206 = vld [vmem:[%s1 + $0x18] sm:$0xff]
      %v207 = vld [vmem:[%s1 + $0x20] sm:$0xff]
      %v208 = vld [vmem:[%s1 + $0x28] sm:$0xff]
      %v209 = vld [vmem:[%s2] sm:$0x1]
      %v211 = vlaneseq
      %v212 = vshrl.u32 %v211, 7
      %v213 = vsub.s32 0, %v212
      %v214 = vrot.slane %v209, %v213
      %vm216 = vcmask 392192
      %v218 = vsel %vm216, %v201, 0
      %v221 = vsel %vm216, %v202, 0
      %223 = vmatprep.subr.mxu0 0.0
      %224 = vmatpush1.msra.mxu0 %v203
      %225 = vmatprep.subr.mxu0 0.0
      %226 = vmatpush1.msra.mxu0 %v204
      %227 = vmatprep.subr.mxu0 0.0
      %228 = vmatpush1.msra.mxu0 %v205
      %229 = vmatprep.subr.mxu0 0.0
      %230 = vmatpush1.msra.mxu0 %v206
      %231 = vmatprep.subr.mxu0 0.0
      %232 = vmatpush1.msra.mxu0 %v207
      %233 = vmatprep.subr.mxu0 0.0
      %234 = vmatpush1.msra.mxu0 %v208
      %235 = vmatprep.subr.mxu0 0.0
      %236 = vmatpush1.msra.mxu0 0.0
      %237 = vmatprep.subr.mxu0 0.0
      %238 = vmatpush1.msra.mxu0 0.0
      %239 = vmatprep.subr.mxu0 0.0
      %240 = vmatpush1.msra.mxu0 0.0
      %241 = vmatprep.subr.mxu0 0.0
      %242 = vmatpush1.msra.mxu0 0.0
      %243 = vmatprep.subr.mxu0 0.0
      %244 = vmatpush1.msra.mxu0 0.0
      %245 = vmatprep.subr.mxu0 0.0
      %246 = vmatpush1.msra.mxu0 0.0
      %247 = vmatprep.subr.mxu0 0.0
      %248 = vmatpush1.msra.mxu0 0.0
      %249 = vmatprep.subr.mxu0 0.0
      %250 = vmatpush1.msra.mxu0 0.0
      %251 = vmatprep.subr.mxu0 0.0
      %252 = vmatpush1.msra.mxu0 0.0
      %253 = vmatprep.subr.mxu0 0.0
      %254 = vmatpush1.msra.mxu0 0.0
      %255 = vmatprep.subr.mxu0 0.0
      %256 = vmatpush1.msra.mxu0 0.0
      %257 = vmatprep.subr.mxu0 0.0
      %258 = vmatpush1.msra.mxu0 0.0
      %259 = vmatprep.subr.mxu0 0.0
      %260 = vmatpush1.msra.mxu0 0.0
      %261 = vmatprep.subr.mxu0 0.0
      %262 = vmatpush1.msra.mxu0 0.0
      %263 = vmatprep.subr.mxu0 0.0
      %264 = vmatpush1.msra.mxu0 0.0
      %265 = vmatprep.subr.mxu0 0.0
      %266 = vmatpush1.msra.mxu0 0.0
      %267 = vmatprep.subr.mxu0 0.0
      %268 = vmatpush1.msra.mxu0 0.0
      %269 = vmatprep.subr.mxu0 0.0
      %270 = vmatpush1.msra.mxu0 0.0
      %271 = vmatprep.subr.mxu0 0.0
      %272 = vmatpush1.msra.mxu0 0.0
      %273 = vmatprep.subr.mxu0 0.0
      %274 = vmatpush1.msra.mxu0 0.0
      %275 = vmatprep.subr.mxu0 0.0
      %276 = vmatpush1.msra.mxu0 0.0
      %277 = vmatprep.subr.mxu0 0.0
      %278 = vmatpush1.msra.mxu0 0.0
      %279 = vmatprep.subr.mxu0 0.0
      %280 = vmatpush1.msra.mxu0 0.0
      %281 = vmatprep.subr.mxu0 0.0
      %282 = vmatpush1.msra.mxu0 0.0
      %283 = vmatprep.subr.mxu0 0.0
      %284 = vmatpush1.msra.mxu0 0.0
      %285 = vmatprep.subr.mxu0 0.0
      %286 = vmatpush1.msra.mxu0 0.0
      %287 = vmatprep.mubr.f32.mxu0 0.0
      %288 = vmatmul.mubr.f32.gmra.mrb[0].mxu0 %v218
      %v289 = vpop.f32.mrb[0].mxu0
      %v290 = vadd.f32 %v214, %v289
      %v291 = vpop.f32.mrb[0].mxu0
      %292 = vmatprep.mubr.f32.mxu0 0.0
      %293 = vmatmul.mubr.f32.gmra.mrb[0].mxu0 %v221
      %v294 = vpop.f32.mrb[0].mxu0
      %v295 = vadd.f32 %v214, %v294
      %v296 = vpop.f32.mrb[0].mxu0
      %297 = vdwg.mxu0
      %v298 = vmul.f32 %v290, 256.0
      %v299 = vmul.f32 %v295, 256.0
      %v300 = vround.ne.pseudo %v298
      %v301 = vround.ne.pseudo %v299
      %v302 = vmax.f32 %v300, -32768.0
      %v303 = vmax.f32 %v301, -32768.0
      %v304 = vmin.f32 %v302, 32767.0
      %v305 = vmin.f32 %v303, 32767.0
      %v306 = vmul.f32 %v304, 0.00390625
      %v307 = vmul.f32 %v305, 0.00390625
      %v308 = vld [vmem:[%s3] sm:$0xff]
      %v309 = vld [vmem:[%s3 + $0x8] sm:$0xff]
      %v310 = vadd.f32 %v306, %v308
      %v311 = vadd.f32 %v307, %v309
      %v312 = vmul.f32 %v310, 256.0
      %v313 = vmul.f32 %v311, 256.0
      %v314 = vround.ne.pseudo %v312
      %v315 = vround.ne.pseudo %v313
      %v316 = vmax.f32 %v314, -32768.0
      %v317 = vmax.f32 %v315, -32768.0
      %v318 = vmin.f32 %v316, 32767.0
      %v319 = vmin.f32 %v317, 32767.0
      %v320 = vmul.f32 %v318, 0.00390625
      %v321 = vmul.f32 %v319, 0.00390625
      %322 = vst [vmem:[%s199] sm:$0xff] %v320
      %323 = vst [vmem:[%s199 + $0x8] sm:$0xff] %v321
      %s324 = smul.u32 2, %s15
      %p325 = scmp.lt.s32.totalorder %s324, 3
      %s326 = scalar_select %p325, %s324, 3
      %s327 = smul.addr %s326, 8
      %s328 = scalar_lea.vmem %s4, %s327
      // Predicated region
      $region37: #{vit_forward.8} parent=35 // pred_check
        %p329 = pneg %p122
      $region38: #{vit_forward.8} parent=35 // pred_check_branch
        %331 = sbr.rel (%p329) target = $region40
      $region39: #{vit_forward.8} parent=35 // pred_region
        %s332 = smul.u32 2, %s15
      $region40: #{vit_forward.8} parent=35 // pred_fallthru
        _
    $region36: #{vit_forward.8} parent=5 // pred_fallthru
      _
    %p333 = scmp.le.s32.totalorder 2, %s10
    // Predicated region
    $region41: #{vit_forward.8} parent=5 // pred_check
      %p334 = pneg %p333
    $region42: #{vit_forward.8} parent=5 // pred_check_branch
      %336 = sbr.rel (%p334) target = $region44
    $region43: #{vit_forward.8} parent=5 // pred_region
      %s337 = ssub.s32 %s10, 2
      // Predicated region
      $region45: #{vit_forward.8} parent=43 // pred_check
        %p338 = pneg %p128
      $region46: #{vit_forward.8} parent=43 // pred_check_branch
        %340 = sbr.rel (%p338) target = $region48
      $region47: #{vit_forward.8} parent=43 // pred_region
        %s341 = smul.u32 2, %s16
        %p342 = scmp.lt.s32.totalorder %s341, 3
        %s343 = scalar_select %p342, %s341, 3
        %s344 = smul.addr %s343, 8
        %s345 = scalar_lea.vmem %s4, %s344
      $region48: #{vit_forward.8} parent=43 // pred_fallthru
        _
    $region44: #{vit_forward.8} parent=5 // pred_fallthru
      _
  $region6: #{vit_forward.8} parent=0 // loop_footer
    %s14 = sadd.s32 1, %s10
  $region7: #{vit_forward.8} parent=0 // loop_footer_branch
    %9 = sbr.rel target = $region3
  $region8: #{vit_forward.8} parent=0 // loop_exit
    _

// kernel: vit_forward.11
$region0: #{vit_forward.11}
  #allocation0 [shape = 'u32[]', space=smem, size = 0x4, offset = 0x4, fixed_abs, tag = 'smem constant byte address 0x4 - core index']
  #allocation1 [shape = 'u32[144,128]{1,0:T(1,128)}', space=vmem, size = 0x12000, scoped, tag = 'internal scratch']
  %s0 = inlined_call_operand.vmem [shape: f32[32,128], index: 0, kind: input, shape index: {}]
  %s1 = inlined_call_operand.vmem [shape: f32[1,128], index: 1, kind: input, shape index: {}]
  %s2 = inlined_call_operand.vmem [shape: f32[1,128], index: 2, kind: input, shape index: {}]
  %s3 = inlined_call_operand.vmem [shape: f32[128,64], index: 3, kind: input, shape index: {}]
  %s4 = inlined_call_operand.vmem [shape: f32[1,64], index: 4, kind: input, shape index: {}]
  %s5 = inlined_call_operand.vmem [shape: f32[64,128], index: 5, kind: input, shape index: {}]
  %s6 = inlined_call_operand.vmem [shape: f32[1,128], index: 6, kind: input, shape index: {}]
  %s7 = inlined_call_operand.vmem [shape: f32[32,128], index: 7, kind: output, shape index: {}]
  %s8 = sld [smem:[#allocation0]]
  $region38: #{vit_forward.11} parent=0
    _
  %s10 = ssub.s32 1, %s8
  %s11 = scalar_select 0, %s10, %s8
  // Predicated region
  $region2: #{vit_forward.11} parent=0 // pred_check
    _
  $region3: #{vit_forward.11} parent=0 // pred_check_branch
    %13 = sbr.rel (0) target = $region5
  $region4: #{vit_forward.11} parent=0 // pred_region
    _
  $region5: #{vit_forward.11} parent=0 // pred_fallthru
    _
  // Predicated region
  $region6: #{vit_forward.11} parent=0 // pred_check
    _
  $region7: #{vit_forward.11} parent=0 // pred_check_branch
    %15 = sbr.rel (0) target = $region9
  $region8: #{vit_forward.11} parent=0 // pred_region
    _
  $region9: #{vit_forward.11} parent=0 // pred_fallthru
    _
  // Predicated region
  $region10: #{vit_forward.11} parent=0 // pred_check
    _
  $region11: #{vit_forward.11} parent=0 // pred_check_branch
    %17 = sbr.rel (0) target = $region13
  $region12: #{vit_forward.11} parent=0 // pred_region
    _
  $region13: #{vit_forward.11} parent=0 // pred_fallthru
    _
  // Predicated region
  $region14: #{vit_forward.11} parent=0 // pred_check
    _
  $region15: #{vit_forward.11} parent=0 // pred_check_branch
    %19 = sbr.rel (0) target = $region17
  $region16: #{vit_forward.11} parent=0 // pred_region
    _
  $region17: #{vit_forward.11} parent=0 // pred_fallthru
    _
  // Predicated region
  $region18: #{vit_forward.11} parent=0 // pred_check
    _
  $region19: #{vit_forward.11} parent=0 // pred_check_branch
    %21 = sbr.rel (0) target = $region21
  $region20: #{vit_forward.11} parent=0 // pred_region
    _
  $region21: #{vit_forward.11} parent=0 // pred_fallthru
    _
  // Predicated region
  $region22: #{vit_forward.11} parent=0 // pred_check
    _
  $region23: #{vit_forward.11} parent=0 // pred_check_branch
    %23 = sbr.rel (0) target = $region25
  $region24: #{vit_forward.11} parent=0 // pred_region
    _
  $region25: #{vit_forward.11} parent=0 // pred_fallthru
    _
  // Predicated region
  $region26: #{vit_forward.11} parent=0 // pred_check
    _
  $region27: #{vit_forward.11} parent=0 // pred_check_branch
    %25 = sbr.rel (0) target = $region29
  $region28: #{vit_forward.11} parent=0 // pred_region
    _
  $region29: #{vit_forward.11} parent=0 // pred_fallthru
    _
  %v26 = vld [vmem:[%s0] sm:$0xff]
  %v27 = vld [vmem:[%s0 + $0x8] sm:$0xff]
  %v28 = vld [vmem:[%s0 + $0x10] sm:$0xff]
  %v29 = vld [vmem:[%s0 + $0x18] sm:$0xff]
  %30 = vadd.xlane.f32.xlu0 %v26
  %v31 = vpop.xlane.xlu0 %30
  %32 = vadd.xlane.f32.xlu0 %v27
  %v33 = vpop.xlane.xlu0 %32
  %34 = vadd.xlane.f32.xlu0 %v28
  %v35 = vpop.xlane.xlu0 %34
  %36 = vadd.xlane.f32.xlu0 %v29
  %v37 = vpop.xlane.xlu0 %36
  %v38 = vrcp.pop 128.0
  %v39 = vmul.f32 %v31, %v38
  %v40 = vmul.f32 %v33, %v38
  %v41 = vmul.f32 %v35, %v38
  %v42 = vmul.f32 %v37, %v38
  %v43 = vsub.f32 %v26, %v39
  %v44 = vsub.f32 %v27, %v40
  %v45 = vsub.f32 %v28, %v41
  %v46 = vsub.f32 %v29, %v42
  %v47 = vmul.f32 %v43, %v43
  %v48 = vmul.f32 %v44, %v44
  %v49 = vmul.f32 %v45, %v45
  %v50 = vmul.f32 %v46, %v46
  %51 = vadd.xlane.f32.xlu0 %v47
  %v52 = vpop.xlane.xlu0 %51
  %53 = vadd.xlane.f32.xlu0 %v48
  %v54 = vpop.xlane.xlu0 %53
  %55 = vadd.xlane.f32.xlu0 %v49
  %v56 = vpop.xlane.xlu0 %55
  %57 = vadd.xlane.f32.xlu0 %v50
  %v58 = vpop.xlane.xlu0 %57
  %v59 = vmul.f32 %v52, %v38
  %v60 = vmul.f32 %v54, %v38
  %v61 = vmul.f32 %v56, %v38
  %v62 = vmul.f32 %v58, %v38
  %v63 = vadd.f32 %v59, 1e-05
  %v64 = vadd.f32 %v60, 1e-05
  %v65 = vadd.f32 %v61, 1e-05
  %v66 = vadd.f32 %v62, 1e-05
  %v67 = vrsqrt.pop %v63
  %v68 = vrsqrt.pop %v64
  %v69 = vrsqrt.pop %v65
  %v70 = vrsqrt.pop %v66
  %v71 = vmul.f32 %v43, %v67
  %v72 = vmul.f32 %v44, %v68
  %v73 = vmul.f32 %v45, %v69
  %v74 = vmul.f32 %v46, %v70
  %v75 = vld [vmem:[%s1] sm:$0x1]
  %v77 = vlaneseq
  %v78 = vshrl.u32 %v77, 7
  %v79 = vsub.s32 0, %v78
  %v80 = vrot.slane %v75, %v79
  %v82 = vmul.f32 %v71, %v80
  %v83 = vmul.f32 %v72, %v80
  %v84 = vmul.f32 %v73, %v80
  %v85 = vmul.f32 %v74, %v80
  %v86 = vld [vmem:[%s2] sm:$0x1]
  %v88 = vlaneseq
  %v89 = vshrl.u32 %v88, 7
  %v90 = vsub.s32 0, %v89
  %v91 = vrot.slane %v86, %v90
  %v93 = vadd.f32 %v82, %v91
  %v94 = vadd.f32 %v83, %v91
  %v95 = vadd.f32 %v84, %v91
  %v96 = vadd.f32 %v85, %v91
  %v97 = vld [vmem:[%s3] sm:$0xff]
  %v98 = vld [vmem:[%s3 + $0x8] sm:$0xff]
  %v99 = vld [vmem:[%s3 + $0x10] sm:$0xff]
  %v100 = vld [vmem:[%s3 + $0x18] sm:$0xff]
  %v101 = vld [vmem:[%s3 + $0x20] sm:$0xff]
  %v102 = vld [vmem:[%s3 + $0x28] sm:$0xff]
  %v103 = vld [vmem:[%s3 + $0x30] sm:$0xff]
  %v104 = vld [vmem:[%s3 + $0x38] sm:$0xff]
  %v105 = vld [vmem:[%s3 + $0x40] sm:$0xff]
  %v106 = vld [vmem:[%s3 + $0x48] sm:$0xff]
  %v107 = vld [vmem:[%s3 + $0x50] sm:$0xff]
  %v108 = vld [vmem:[%s3 + $0x58] sm:$0xff]
  %v109 = vld [vmem:[%s3 + $0x60] sm:$0xff]
  %v110 = vld [vmem:[%s3 + $0x68] sm:$0xff]
  %v111 = vld [vmem:[%s3 + $0x70] sm:$0xff]
  %v112 = vld [vmem:[%s3 + $0x78] sm:$0xff]
  %v113 = vld [vmem:[%s4] sm:$0x1]
  %v115 = vlaneseq
  %v116 = vshrl.u32 %v115, 7
  %v117 = vsub.s32 0, %v116
  %v118 = vrot.slane %v113, %v117
  %120 = vmatprep.subr.mxu0 0.0
  %121 = vmatpush1.msra.mxu0 %v97
  %122 = vmatprep.subr.mxu0 0.0
  %123 = vmatpush1.msra.mxu0 %v98
  %124 = vmatprep.subr.mxu0 0.0
  %125 = vmatpush1.msra.mxu0 %v99
  %126 = vmatprep.subr.mxu0 0.0
  %127 = vmatpush1.msra.mxu0 %v100
  %128 = vmatprep.subr.mxu0 0.0
  %129 = vmatpush1.msra.mxu0 %v101
  %130 = vmatprep.subr.mxu0 0.0
  %131 = vmatpush1.msra.mxu0 %v102
  %132 = vmatprep.subr.mxu0 0.0
  %133 = vmatpush1.msra.mxu0 %v103
  %134 = vmatprep.subr.mxu0 0.0
  %135 = vmatpush1.msra.mxu0 %v104
  %136 = vmatprep.subr.mxu0 0.0
  %137 = vmatpush1.msra.mxu0 %v105
  %138 = vmatprep.subr.mxu0 0.0
  %139 = vmatpush1.msra.mxu0 %v106
  %140 = vmatprep.subr.mxu0 0.0
  %141 = vmatpush1.msra.mxu0 %v107
  %142 = vmatprep.subr.mxu0 0.0
  %143 = vmatpush1.msra.mxu0 %v108
  %144 = vmatprep.subr.mxu0 0.0
  %145 = vmatpush1.msra.mxu0 %v109
  %146 = vmatprep.subr.mxu0 0.0
  %147 = vmatpush1.msra.mxu0 %v110
  %148 = vmatprep.subr.mxu0 0.0
  %149 = vmatpush1.msra.mxu0 %v111
  %150 = vmatprep.subr.mxu0 0.0
  %151 = vmatpush1.msra.mxu0 %v112
  %152 = vmatprep.subr.mxu0 0.0
  %153 = vmatpush1.msra.mxu0 0.0
  %154 = vmatprep.subr.mxu0 0.0
  %155 = vmatpush1.msra.mxu0 0.0
  %156 = vmatprep.subr.mxu0 0.0
  %157 = vmatpush1.msra.mxu0 0.0
  %158 = vmatprep.subr.mxu0 0.0
  %159 = vmatpush1.msra.mxu0 0.0
  %160 = vmatprep.subr.mxu0 0.0
  %161 = vmatpush1.msra.mxu0 0.0
  %162 = vmatprep.subr.mxu0 0.0
  %163 = vmatpush1.msra.mxu0 0.0
  %164 = vmatprep.subr.mxu0 0.0
  %165 = vmatpush1.msra.mxu0 0.0
  %166 = vmatprep.subr.mxu0 0.0
  %167 = vmatpush1.msra.mxu0 0.0
  %168 = vmatprep.subr.mxu0 0.0
  %169 = vmatpush1.msra.mxu0 0.0
  %170 = vmatprep.subr.mxu0 0.0
  %171 = vmatpush1.msra.mxu0 0.0
  %172 = vmatprep.subr.mxu0 0.0
  %173 = vmatpush1.msra.mxu0 0.0
  %174 = vmatprep.subr.mxu0 0.0
  %175 = vmatpush1.msra.mxu0 0.0
  %176 = vmatprep.subr.mxu0 0.0
  %177 = vmatpush1.msra.mxu0 0.0
  %178 = vmatprep.subr.mxu0 0.0
  %179 = vmatpush1.msra.mxu0 0.0
  %180 = vmatprep.subr.mxu0 0.0
  %181 = vmatpush1.msra.mxu0 0.0
  %182 = vmatprep.subr.mxu0 0.0
  %183 = vmatpush1.msra.mxu0 0.0
  %184 = vmatprep.mubr.f32.mxu0 0.0
  %185 = vmatmul.mubr.f32.gmra.mrb[0].mxu0 %v93
  %v186 = vpop.f32.mrb[0].mxu0
  %v187 = vadd.f32 %v118, %v186
  %v188 = vpop.f32.mrb[0].mxu0
  %189 = vmatprep.mubr.f32.mxu0 0.0
  %190 = vmatmul.mubr.f32.gmra.mrb[0].mxu0 %v94
  %v191 = vpop.f32.mrb[0].mxu0
  %v192 = vadd.f32 %v118, %v191
  %v193 = vpop.f32.mrb[0].mxu0
  %194 = vmatprep.mubr.f32.mxu0 0.0
  %195 = vmatmul.mubr.f32.gmra.mrb[0].mxu0 %v95
  %v196 = vpop.f32.mrb[0].mxu0
  %v197 = vadd.f32 %v118, %v196
  %v198 = vpop.f32.mrb[0].mxu0
  %199 = vmatprep.mubr.f32.mxu0 0.0
  %200 = vmatmul.mubr.f32.gmra.mrb[0].mxu0 %v96
  %v201 = vpop.f32.mrb[0].mxu0
  %v202 = vadd.f32 %v118, %v201
  %v203 = vpop.f32.mrb[0].mxu0
  %204 = vdwg.mxu0
  %v205 = vmul.f32 %v187, 256.0
  %v206 = vmul.f32 %v192, 256.0
  %v207 = vmul.f32 %v197, 256.0
  %v208 = vmul.f32 %v202, 256.0
  %v209 = vround.ne.pseudo %v205
  %v210 = vround.ne.pseudo %v206
  %v211 = vround.ne.pseudo %v207
  %v212 = vround.ne.pseudo %v208
  %v213 = vmax.f32 %v209, -32768.0
  %v214 = vmax.f32 %v210, -32768.0
  %v215 = vmax.f32 %v211, -32768.0
  %v216 = vmax.f32 %v212, -32768.0
  %v217 = vmin.f32 %v213, 32767.0
  %v218 = vmin.f32 %v214, 32767.0
  %v219 = vmin.f32 %v215, 32767.0
  %v220 = vmin.f32 %v216, 32767.0
  %v221 = vmul.f32 %v217, 0.00390625
  %v222 = vmul.f32 %v218, 0.00390625
  %v223 = vmul.f32 %v219, 0.00390625
  %v224 = vmul.f32 %v220, 0.00390625
  %v225 = vmax.f32 %v221, 0.0
  %v226 = vmax.f32 %v222, 0.0
  %v227 = vmax.f32 %v223, 0.0
  %v228 = vmax.f32 %v224, 0.0
  %v229 = vld [vmem:[%s5] sm:$0xff]
  %v230 = vld [vmem:[%s5 + $0x8] sm:$0xff]
  %v231 = vld [vmem:[%s5 + $0x10] sm:$0xff]
  %v232 = vld [vmem:[%s5 + $0x18] sm:$0xff]
  %v233 = vld [vmem:[%s5 + $0x20] sm:$0xff]
  %v234 = vld [vmem:[%s5 + $0x28] sm:$0xff]
  %v235 = vld [vmem:[%s5 + $0x30] sm:$0xff]
  %v236 = vld [vmem:[%s5 + $0x38] sm:$0xff]
  %v237 = vld [vmem:[%s6] sm:$0x1]
  %v239 = vlaneseq
  %v240 = vshrl.u32 %v239, 7
  %v241 = vsub.s32 0, %v240
  %v242 = vrot.slane %v237, %v241
  %vm244 = vcmask 523264
  %v246 = vsel %vm244, %v225, 0
  %v249 = vsel %vm244, %v226, 0
  %v252 = vsel %vm244, %v227, 0
  %v255 = vsel %vm244, %v228, 0
  %257 = vmatprep.subr.mxu0 0.0
  %258 = vmatpush1.msra.mxu0 %v229
  %259 = vmatprep.subr.mxu0 0.0
  %260 = vmatpush1.msra.mxu0 %v230
  %261 = vmatprep.subr.mxu0 0.0
  %262 = vmatpush1.msra.mxu0 %v231
  %263 = vmatprep.subr.mxu0 0.0
  %264 = vmatpush1.msra.mxu0 %v232
  %265 = vmatprep.subr.mxu0 0.0
  %266 = vmatpush1.msra.mxu0 %v233
  %267 = vmatprep.subr.mxu0 0.0
  %268 = vmatpush1.msra.mxu0 %v234
  %269 = vmatprep.subr.mxu0 0.0
  %270 = vmatpush1.msra.mxu0 %v235
  %271 = vmatprep.subr.mxu0 0.0
  %272 = vmatpush1.msra.mxu0 %v236
  %273 = vmatprep.subr.mxu0 0.0
  %274 = vmatpush1.msra.mxu0 0.0
  %275 = vmatprep.subr.mxu0 0.0
  %276 = vmatpush1.msra.mxu0 0.0
  %277 = vmatprep.subr.mxu0 0.0
  %278 = vmatpush1.msra.mxu0 0.0
  %279 = vmatprep.subr.mxu0 0.0
  %280 = vmatpush1.msra.mxu0 0.0
  %281 = vmatprep.subr.mxu0 0.0
  %282 = vmatpush1.msra.mxu0 0.0
  %283 = vmatprep.subr.mxu0 0.0
  %284 = vmatpush1.msra.mxu0 0.0
  %285 = vmatprep.subr.mxu0 0.0
  %286 = vmatpush1.msra.mxu0 0.0
  %287 = vmatprep.subr.mxu0 0.0
  %288 = vmatpush1.msra.mxu0 0.0
  %289 = vmatprep.subr.mxu0 0.0
  %290 = vmatpush1.msra.mxu0 0.0
  %291 = vmatprep.subr.mxu0 0.0
  %292 = vmatpush1.msra.mxu0 0.0
  %293 = vmatprep.subr.mxu0 0.0
  %294 = vmatpush1.msra.mxu0 0.0
  %295 = vmatprep.subr.mxu0 0.0
  %296 = vmatpush1.msra.mxu0 0.0
  %297 = vmatprep.subr.mxu0 0.0
  %298 = vmatpush1.msra.mxu0 0.0
  %299 = vmatprep.subr.mxu0 0.0
  %300 = vmatpush1.msra.mxu0 0.0
  %301 = vmatprep.subr.mxu0 0.0
  %302 = vmatpush1.msra.mxu0 0.0
  %303 = vmatprep.subr.mxu0 0.0
  %304 = vmatpush1.msra.mxu0 0.0
  %305 = vmatprep.subr.mxu0 0.0
  %306 = vmatpush1.msra.mxu0 0.0
  %307 = vmatprep.subr.mxu0 0.0
  %308 = vmatpush1.msra.mxu0 0.0
  %309 = vmatprep.subr.mxu0 0.0
  %310 = vmatpush1.msra.mxu0 0.0
  %311 = vmatprep.subr.mxu0 0.0
  %312 = vmatpush1.msra.mxu0 0.0
  %313 = vmatprep.subr.mxu0 0.0
  %314 = vmatpush1.msra.mxu0 0.0
  %315 = vmatprep.subr.mxu0 0.0
  %316 = vmatpush1.msra.mxu0 0.0
  %317 = vmatprep.subr.mxu0 0.0
  %318 = vmatpush1.msra.mxu0 0.0
  %319 = vmatprep.subr.mxu0 0.0
  %320 = vmatpush1.msra.mxu0 0.0
  %321 = vmatprep.mubr.f32.mxu0 0.0
  %322 = vmatmul.mubr.f32.gmra.mrb[0].mxu0 %v246
  %v323 = vpop.f32.mrb[0].mxu0
  %v324 = vadd.f32 %v242, %v323
  %v325 = vpop.f32.mrb[0].mxu0
  %326 = vmatprep.mubr.f32.mxu0 0.0
  %327 = vmatmul.mubr.f32.gmra.mrb[0].mxu0 %v249
  %v328 = vpop.f32.mrb[0].mxu0
  %v329 = vadd.f32 %v242, %v328
  %v330 = vpop.f32.mrb[0].mxu0
  %331 = vmatprep.mubr.f32.mxu0 0.0
  %332 = vmatmul.mubr.f32.gmra.mrb[0].mxu0 %v252
  %v333 = vpop.f32.mrb[0].mxu0
  %v334 = vadd.f32 %v242, %v333
  %v335 = vpop.f32.mrb[0].mxu0
  %336 = vmatprep.mubr.f32.mxu0 0.0
  %337 = vmatmul.mubr.f32.gmra.mrb[0].mxu0 %v255
  %v338 = vpop.f32.mrb[0].mxu0
  %v339 = vadd.f32 %v242, %v338
  %v340 = vpop.f32.mrb[0].mxu0
  %341 = vdwg.mxu0
  %v342 = vmul.f32 %v324, 256.0
  %v343 = vmul.f32 %v329, 256.0
  %v344 = vmul.f32 %v334, 256.0
  %v345 = vmul.f32 %v339, 256.0
  %v346 = vround.ne.pseudo %v342
  %v347 = vround.ne.pseudo %v343
  %v348 = vround.ne.pseudo %v344
  %v349 = vround.ne.pseudo %v345
  %v350 = vmax.f32 %v346, -32768.0
  %v351 = vmax.f32 %v347, -32768.0
  %v352 = vmax.f32 %v348, -32768.0
  %v353 = vmax.f32 %v349, -32768.0
  %v354 = vmin.f32 %v350, 32767.0
  %v355 = vmin.f32 %v351, 32767.0
  %v356 = vmin.f32 %v352, 32767.0
  %v357 = vmin.f32 %v353, 32767.0
  %v358 = vmul.f32 %v354, 0.00390625
  %v359 = vmul.f32 %v355, 0.00390625
  %v360 = vmul.f32 %v356, 0.00390625
  %v361 = vmul.f32 %v357, 0.00390625
  %v362 = vadd.f32 %v26, %v358
  %v363 = vadd.f32 %v27, %v359
  %v364 = vadd.f32 %v28, %v360
  %v365 = vadd.f32 %v29, %v361
  %v366 = vmul.f32 %v362, 256.0
  %v367 = vmul.f32 %v363, 256.0
  %v368 = vmul.f32 %v364, 256.0
  %v369 = vmul.f32 %v365, 256.0
  %v370 = vround.ne.pseudo %v366
  %v371 = vround.ne.pseudo %v367
  %v372 = vround.ne.pseudo %v368
  %v373 = vround.ne.pseudo %v369
  %v374 = vmax.f32 %v370, -32768.0
  %v375 = vmax.f32 %v371, -32768.0
  %v376 = vmax.f32 %v372, -32768.0
  %v377 = vmax.f32 %v373, -32768.0
  %v378 = vmin.f32 %v374, 32767.0
  %v379 = vmin.f32 %v375, 32767.0
  %v380 = vmin.f32 %v376, 32767.0
  %v381 = vmin.f32 %v377, 32767.0
  %v382 = vmul.f32 %v378, 0.00390625
  %v383 = vmul.f32 %v379, 0.00390625
  %v384 = vmul.f32 %v380, 0.00390625
  %v385 = vmul.f32 %v381, 0.00390625
  %386 = vst [vmem:[%s7] sm:$0xff] %v382
  %387 = vst [vmem:[%s7 + $0x8] sm:$0xff] %v383
  %388 = vst [vmem:[%s7 + $0x10] sm:$0xff] %v384
  %389 = vst [vmem:[%s7 + $0x18] sm:$0xff] %v385
  // Predicated region
  $region30: #{vit_forward.11} parent=0 // pred_check
    _
  $region31: #{vit_forward.11} parent=0 // pred_check_branch
    %391 = sbr.rel (0) target = $region33
  $region32: #{vit_forward.11} parent=0 // pred_region
    _
  $region33: #{vit_forward.11} parent=0 // pred_fallthru
    _
  // Predicated region
  $region34: #{vit_forward.11} parent=0 // pred_check
    _
  $region35: #{vit_forward.11} parent=0 // pred_check_branch
    %393 = sbr.rel (0) target = $region37
  $region36: #{vit_forward.11} parent=0 // pred_region
    _
  $region37: #{vit_forward.11} parent=0 // pred_fallthru
    _

// kernel: vit_forward.9
$region0: #{vit_forward.9}
  #allocation0 [shape = 'u32[]', space=smem, size = 0x4, offset = 0x4, fixed_abs, tag = 'smem constant byte address 0x4 - core index']
  #allocation1 [shape = 'u32[144,128]{1,0:T(1,128)}', space=vmem, size = 0x12000, scoped, tag = 'internal scratch']
  %s0 = inlined_call_operand.vmem [shape: f32[32,128], index: 0, kind: input, shape index: {}]
  %s1 = inlined_call_operand.vmem [shape: f32[1,128], index: 1, kind: input, shape index: {}]
  %s2 = inlined_call_operand.vmem [shape: f32[1,128], index: 2, kind: input, shape index: {}]
  %s3 = inlined_call_operand.vmem [shape: f32[128,384], index: 3, kind: input, shape index: {}]
  %s4 = inlined_call_operand.vmem [shape: f32[1,384], index: 4, kind: input, shape index: {}]
  %s5 = inlined_call_operand.vmem [shape: f32[32,384], index: 5, kind: output, shape index: {}]
  %s6 = sld [smem:[#allocation0]]
  $region30: #{vit_forward.9} parent=0
    _
  %s8 = ssub.s32 1, %s6
  %s9 = scalar_select 0, %s8, %s6
  // Predicated region
  $region2: #{vit_forward.9} parent=0 // pred_check
    _
  $region3: #{vit_forward.9} parent=0 // pred_check_branch
    %11 = sbr.rel (0) target = $region5
  $region4: #{vit_forward.9} parent=0 // pred_region
    _
  $region5: #{vit_forward.9} parent=0 // pred_fallthru
    _
  // Predicated region
  $region6: #{vit_forward.9} parent=0 // pred_check
    _
  $region7: #{vit_forward.9} parent=0 // pred_check_branch
    %13 = sbr.rel (0) target = $region9
  $region8: #{vit_forward.9} parent=0 // pred_region
    _
  $region9: #{vit_forward.9} parent=0 // pred_fallthru
    _
  // Predicated region
  $region10: #{vit_forward.9} parent=0 // pred_check
    _
  $region11: #{vit_forward.9} parent=0 // pred_check_branch
    %15 = sbr.rel (0) target = $region13
  $region12: #{vit_forward.9} parent=0 // pred_region
    _
  $region13: #{vit_forward.9} parent=0 // pred_fallthru
    _
  // Predicated region
  $region14: #{vit_forward.9} parent=0 // pred_check
    _
  $region15: #{vit_forward.9} parent=0 // pred_check_branch
    %17 = sbr.rel (0) target = $region17
  $region16: #{vit_forward.9} parent=0 // pred_region
    _
  $region17: #{vit_forward.9} parent=0 // pred_fallthru
    _
  // Predicated region
  $region18: #{vit_forward.9} parent=0 // pred_check
    _
  $region19: #{vit_forward.9} parent=0 // pred_check_branch
    %19 = sbr.rel (0) target = $region21
  $region20: #{vit_forward.9} parent=0 // pred_region
    _
  $region21: #{vit_forward.9} parent=0 // pred_fallthru
    _
  %v20 = vld [vmem:[%s0] sm:$0xff]
  %v21 = vld [vmem:[%s0 + $0x8] sm:$0xff]
  %v22 = vld [vmem:[%s0 + $0x10] sm:$0xff]
  %v23 = vld [vmem:[%s0 + $0x18] sm:$0xff]
  %24 = vadd.xlane.f32.xlu0 %v20
  %v25 = vpop.xlane.xlu0 %24
  %26 = vadd.xlane.f32.xlu0 %v21
  %v27 = vpop.xlane.xlu0 %26
  %28 = vadd.xlane.f32.xlu0 %v22
  %v29 = vpop.xlane.xlu0 %28
  %30 = vadd.xlane.f32.xlu0 %v23
  %v31 = vpop.xlane.xlu0 %30
  %v32 = vrcp.pop 128.0
  %v33 = vmul.f32 %v25, %v32
  %v34 = vmul.f32 %v27, %v32
  %v35 = vmul.f32 %v29, %v32
  %v36 = vmul.f32 %v31, %v32
  %v37 = vsub.f32 %v20, %v33
  %v38 = vsub.f32 %v21, %v34
  %v39 = vsub.f32 %v22, %v35
  %v40 = vsub.f32 %v23, %v36
  %v41 = vmul.f32 %v37, %v37
  %v42 = vmul.f32 %v38, %v38
  %v43 = vmul.f32 %v39, %v39
  %v44 = vmul.f32 %v40, %v40
  %45 = vadd.xlane.f32.xlu0 %v41
  %v46 = vpop.xlane.xlu0 %45
  %47 = vadd.xlane.f32.xlu0 %v42
  %v48 = vpop.xlane.xlu0 %47
  %49 = vadd.xlane.f32.xlu0 %v43
  %v50 = vpop.xlane.xlu0 %49
  %51 = vadd.xlane.f32.xlu0 %v44
  %v52 = vpop.xlane.xlu0 %51
  %v53 = vmul.f32 %v46, %v32
  %v54 = vmul.f32 %v48, %v32
  %v55 = vmul.f32 %v50, %v32
  %v56 = vmul.f32 %v52, %v32
  %v57 = vadd.f32 %v53, 1e-05
  %v58 = vadd.f32 %v54, 1e-05
  %v59 = vadd.f32 %v55, 1e-05
  %v60 = vadd.f32 %v56, 1e-05
  %v61 = vrsqrt.pop %v57
  %v62 = vrsqrt.pop %v58
  %v63 = vrsqrt.pop %v59
  %v64 = vrsqrt.pop %v60
  %v65 = vmul.f32 %v37, %v61
  %v66 = vmul.f32 %v38, %v62
  %v67 = vmul.f32 %v39, %v63
  %v68 = vmul.f32 %v40, %v64
  %v69 = vld [vmem:[%s1] sm:$0x1]
  %v71 = vlaneseq
  %v72 = vshrl.u32 %v71, 7
  %v73 = vsub.s32 0, %v72
  %v74 = vrot.slane %v69, %v73
  %v76 = vmul.f32 %v65, %v74
  %v77 = vmul.f32 %v66, %v74
  %v78 = vmul.f32 %v67, %v74
  %v79 = vmul.f32 %v68, %v74
  %v80 = vld [vmem:[%s2] sm:$0x1]
  %v82 = vlaneseq
  %v83 = vshrl.u32 %v82, 7
  %v84 = vsub.s32 0, %v83
  %v85 = vrot.slane %v80, %v84
  %v87 = vadd.f32 %v76, %v85
  %v88 = vadd.f32 %v77, %v85
  %v89 = vadd.f32 %v78, %v85
  %v90 = vadd.f32 %v79, %v85
  %v91 = vld [vmem:[%s3] sm:$0xff]
  %v92 = vld [vmem:[%s3 + $0x8] sm:$0xff]
  %v93 = vld [vmem:[%s3 + $0x10] sm:$0xff]
  %v94 = vld [vmem:[%s3 + $0x18] sm:$0xff]
  %v95 = vld [vmem:[%s3 + $0x20] sm:$0xff]
  %v96 = vld [vmem:[%s3 + $0x28] sm:$0xff]
  %v97 = vld [vmem:[%s3 + $0x30] sm:$0xff]
  %v98 = vld [vmem:[%s3 + $0x38] sm:$0xff]
  %v99 = vld [vmem:[%s3 + $0x40] sm:$0xff]
  %v100 = vld [vmem:[%s3 + $0x48] sm:$0xff]
  %v101 = vld [vmem:[%s3 + $0x50] sm:$0xff]
  %v102 = vld [vmem:[%s3 + $0x58] sm:$0xff]
  %v103 = vld [vmem:[%s3 + $0x60] sm:$0xff]
  %v104 = vld [vmem:[%s3 + $0x68] sm:$0xff]
  %v105 = vld [vmem:[%s3 + $0x70] sm:$0xff]
  %v106 = vld [vmem:[%s3 + $0x78] sm:$0xff]
  %v107 = vld [vmem:[%s3 + $0x80] sm:$0xff]
  %v108 = vld [vmem:[%s3 + $0x88] sm:$0xff]
  %v109 = vld [vmem:[%s3 + $0x90] sm:$0xff]
  %v110 = vld [vmem:[%s3 + $0x98] sm:$0xff]
  %v111 = vld [vmem:[%s3 + $0xa0] sm:$0xff]
  %v112 = vld [vmem:[%s3 + $0xa8] sm:$0xff]
  %v113 = vld [vmem:[%s3 + $0xb0] sm:$0xff]
  %v114 = vld [vmem:[%s3 + $0xb8] sm:$0xff]
  %v115 = vld [vmem:[%s3 + $0xc0] sm:$0xff]
  %v116 = vld [vmem:[%s3 + $0xc8] sm:$0xff]
  %v117 = vld [vmem:[%s3 + $0xd0] sm:$0xff]
  %v118 = vld [vmem:[%s3 + $0xd8] sm:$0xff]
  %v119 = vld [vmem:[%s3 + $0xe0] sm:$0xff]
  %v120 = vld [vmem:[%s3 + $0xe8] sm:$0xff]
  %v121 = vld [vmem:[%s3 + $0xf0] sm:$0xff]
  %v122 = vld [vmem:[%s3 + $0xf8] sm:$0xff]
  %v123 = vld [vmem:[%s3 + $0x100] sm:$0xff]
  %v124 = vld [vmem:[%s3 + $0x108] sm:$0xff]
  %v125 = vld [vmem:[%s3 + $0x110] sm:$0xff]
  %v126 = vld [vmem:[%s3 + $0x118] sm:$0xff]
  %v127 = vld [vmem:[%s3 + $0x120] sm:$0xff]
  %v128 = vld [vmem:[%s3 + $0x128] sm:$0xff]
  %v129 = vld [vmem:[%s3 + $0x130] sm:$0xff]
  %v130 = vld [vmem:[%s3 + $0x138] sm:$0xff]
  %v131 = vld [vmem:[%s3 + $0x140] sm:$0xff]
  %v132 = vld [vmem:[%s3 + $0x148] sm:$0xff]
  %v133 = vld [vmem:[%s3 + $0x150] sm:$0xff]
  %v134 = vld [vmem:[%s3 + $0x158] sm:$0xff]
  %v135 = vld [vmem:[%s3 + $0x160] sm:$0xff]
  %v136 = vld [vmem:[%s3 + $0x168] sm:$0xff]
  %v137 = vld [vmem:[%s3 + $0x170] sm:$0xff]
  %v138 = vld [vmem:[%s3 + $0x178] sm:$0xff]
  %v139 = vld [vmem:[%s4] sm:$0x7]
  %v141 = vlaneseq
  %v142 = vshrl.u32 %v141, 7
  %v143 = vsub.s32 0, %v142
  %v144 = vrot.slane %v139, %v143
  %v145 = vlaneseq
  %v146 = vshrl.u32 %v145, 7
  %v147 = vsub.s32 1, %v146
  %v148 = vrot.slane %v139, %v147
  %v149 = vlaneseq
  %v150 = vshrl.u32 %v149, 7
  %v151 = vsub.s32 2, %v150
  %v152 = vrot.slane %v139, %v151
  %156 = vmatprep.subr.mxu0 %v92
  %157 = vmatpush1.msra.mxu0 %v91
  %158 = vmatprep.subr.mxu0 %v95
  %159 = vmatpush1.msra.mxu0 %v94
  %160 = vmatprep.subr.mxu0 %v98
  %161 = vmatpush1.msra.mxu0 %v97
  %162 = vmatprep.subr.mxu0 %v101
  %163 = vmatpush1.msra.mxu0 %v100
  %164 = vmatprep.subr.mxu0 %v104
  %165 = vmatpush1.msra.mxu0 %v103
  %166 = vmatprep.subr.mxu0 %v107
  %167 = vmatpush1.msra.mxu0 %v106
  %168 = vmatprep.subr.mxu0 %v110
  %169 = vmatpush1.msra.mxu0 %v109
  %170 = vmatprep.subr.mxu0 %v113
  %171 = vmatpush1.msra.mxu0 %v112
  %172 = vmatprep.subr.mxu0 %v116
  %173 = vmatpush1.msra.mxu0 %v115
  %174 = vmatprep.subr.mxu0 %v119
  %175 = vmatpush1.msra.mxu0 %v118
  %176 = vmatprep.subr.mxu0 %v122
  %177 = vmatpush1.msra.mxu0 %v121
  %178 = vmatprep.subr.mxu0 %v125
  %179 = vmatpush1.msra.mxu0 %v124
  %180 = vmatprep.subr.mxu0 %v128
  %181 = vmatpush1.msra.mxu0 %v127
  %182 = vmatprep.subr.mxu0 %v131
  %183 = vmatpush1.msra.mxu0 %v130
  %184 = vmatprep.subr.mxu0 %v134
  %185 = vmatpush1.msra.mxu0 %v133
  %186 = vmatprep.subr.mxu0 %v137
  %187 = vmatpush1.msra.mxu0 %v136
  %188 = vmatprep.subr.mxu0 0.0
  %189 = vmatpush1.msra.mxu0 0.0
  %190 = vmatprep.subr.mxu0 0.0
  %191 = vmatpush1.msra.mxu0 0.0
  %192 = vmatprep.subr.mxu0 0.0
  %193 = vmatpush1.msra.mxu0 0.0
  %194 = vmatprep.subr.mxu0 0.0
  %195 = vmatpush1.msra.mxu0 0.0
  %196 = vmatprep.subr.mxu0 0.0
  %197 = vmatpush1.msra.mxu0 0.0
  %198 = vmatprep.subr.mxu0 0.0
  %199 = vmatpush1.msra.mxu0 0.0
  %200 = vmatprep.subr.mxu0 0.0
  %201 = vmatpush1.msra.mxu0 0.0
  %202 = vmatprep.subr.mxu0 0.0
  %203 = vmatpush1.msra.mxu0 0.0
  %204 = vmatprep.subr.mxu0 0.0
  %205 = vmatpush1.msra.mxu0 0.0
  %206 = vmatprep.subr.mxu0 0.0
  %207 = vmatpush1.msra.mxu0 0.0
  %208 = vmatprep.subr.mxu0 0.0
  %209 = vmatpush1.msra.mxu0 0.0
  %210 = vmatprep.subr.mxu0 0.0
  %211 = vmatpush1.msra.mxu0 0.0
  %212 = vmatprep.subr.mxu0 0.0
  %213 = vmatpush1.msra.mxu0 0.0
  %214 = vmatprep.subr.mxu0 0.0
  %215 = vmatpush1.msra.mxu0 0.0
  %216 = vmatprep.subr.mxu0 0.0
  %217 = vmatpush1.msra.mxu0 0.0
  %218 = vmatprep.subr.mxu0 0.0
  %219 = vmatpush1.msra.mxu0 0.0
  %220 = vmatprep.mubr.f32.mxu0 0.0
  %221 = vmatmul.mubr.f32.gmra.mrb[0].mxu0 %v87
  %v222 = vpop.f32.mrb[0].mxu0
  %v223 = vadd.f32 %v144, %v222
  %v224 = vpop.f32.mrb[0].mxu0
  %v225 = vadd.f32 %v148, %v224
  %226 = vmatprep.mubr.f32.mxu0 0.0
  %227 = vmatmul.mubr.f32.gmra.mrb[0].mxu0 %v88
  %v228 = vpop.f32.mrb[0].mxu0
  %v229 = vadd.f32 %v144, %v228
  %v230 = vpop.f32.mrb[0].mxu0
  %v231 = vadd.f32 %v148, %v230
  %232 = vmatprep.mubr.f32.mxu0 0.0
  %233 = vmatmul.mubr.f32.gmra.mrb[0].mxu0 %v89
  %v234 = vpop.f32.mrb[0].mxu0
  %v235 = vadd.f32 %v144, %v234
  %v236 = vpop.f32.mrb[0].mxu0
  %v237 = vadd.f32 %v148, %v236
  %238 = vmatprep.mubr.f32.mxu0 0.0
  %239 = vmatmul.mubr.f32.gmra.mrb[0].mxu0 %v90
  %v240 = vpop.f32.mrb[0].mxu0
  %v241 = vadd.f32 %v144, %v240
  %v242 = vpop.f32.mrb[0].mxu0
  %v243 = vadd.f32 %v148, %v242
  %244 = vdwg.mxu0
  %245 = vmatprep.subr.mxu0 0.0
  %246 = vmatpush1.msra.mxu0 %v93
  %247 = vmatprep.subr.mxu0 0.0
  %248 = vmatpush1.msra.mxu0 %v96
  %249 = vmatprep.subr.mxu0 0.0
  %250 = vmatpush1.msra.mxu0 %v99
  %251 = vmatprep.subr.mxu0 0.0
  %252 = vmatpush1.msra.mxu0 %v102
  %253 = vmatprep.subr.mxu0 0.0
  %254 = vmatpush1.msra.mxu0 %v105
  %255 = vmatprep.subr.mxu0 0.0
  %256 = vmatpush1.msra.mxu0 %v108
  %257 = vmatprep.subr.mxu0 0.0
  %258 = vmatpush1.msra.mxu0 %v111
  %259 = vmatprep.subr.mxu0 0.0
  %260 = vmatpush1.msra.mxu0 %v114
  %261 = vmatprep.subr.mxu0 0.0
  %262 = vmatpush1.msra.mxu0 %v117
  %263 = vmatprep.subr.mxu0 0.0
  %264 = vmatpush1.msra.mxu0 %v120
  %265 = vmatprep.subr.mxu0 0.0
  %266 = vmatpush1.msra.mxu0 %v123
  %267 = vmatprep.subr.mxu0 0.0
  %268 = vmatpush1.msra.mxu0 %v126
  %269 = vmatprep.subr.mxu0 0.0
  %270 = vmatpush1.msra.mxu0 %v129
  %271 = vmatprep.subr.mxu0 0.0
  %272 = vmatpush1.msra.mxu0 %v132
  %273 = vmatprep.subr.mxu0 0.0
  %274 = vmatpush1.msra.mxu0 %v135
  %275 = vmatprep.subr.mxu0 0.0
  %276 = vmatpush1.msra.mxu0 %v138
  %277 = vmatprep.subr.mxu0 0.0
  %278 = vmatpush1.msra.mxu0 0.0
  %279 = vmatprep.subr.mxu0 0.0
  %280 = vmatpush1.msra.mxu0 0.0
  %281 = vmatprep.subr.mxu0 0.0
  %282 = vmatpush1.msra.mxu0 0.0
  %283 = vmatprep.subr.mxu0 0.0
  %284 = vmatpush1.msra.mxu0 0.0
  %285 = vmatprep.subr.mxu0 0.0
  %286 = vmatpush1.msra.mxu0 0.0
  %287 = vmatprep.subr.mxu0 0.0
  %288 = vmatpush1.msra.mxu0 0.0
  %289 = vmatprep.subr.mxu0 0.0
  %290 = vmatpush1.msra.mxu0 0.0
  %291 = vmatprep.subr.mxu0 0.0
  %292 = vmatpush1.msra.mxu0 0.0
  %293 = vmatprep.subr.mxu0 0.0
  %294 = vmatpush1.msra.mxu0 0.0
  %295 = vmatprep.subr.mxu0 0.0
  %296 = vmatpush1.msra.mxu0 0.0
  %297 = vmatprep.subr.mxu0 0.0
  %298 = vmatpush1.msra.mxu0 0.0
  %299 = vmatprep.subr.mxu0 0.0
  %300 = vmatpush1.msra.mxu0 0.0
  %301 = vmatprep.subr.mxu0 0.0
  %302 = vmatpush1.msra.mxu0 0.0
  %303 = vmatprep.subr.mxu0 0.0
  %304 = vmatpush1.msra.mxu0 0.0
  %305 = vmatprep.subr.mxu0 0.0
  %306 = vmatpush1.msra.mxu0 0.0
  %307 = vmatprep.subr.mxu0 0.0
  %308 = vmatpush1.msra.mxu0 0.0
  %309 = vmatprep.mubr.f32.mxu0 0.0
  %310 = vmatmul.mubr.f32.gmra.mrb[0].mxu0 %v87
  %v311 = vpop.f32.mrb[0].mxu0
  %v312 = vadd.f32 %v152, %v311
  %v313 = vpop.f32.mrb[0].mxu0
  %314 = vmatprep.mubr.f32.mxu0 0.0
  %315 = vmatmul.mubr.f32.gmra.mrb[0].mxu0 %v88
  %v316 = vpop.f32.mrb[0].mxu0
  %v317 = vadd.f32 %v152, %v316
  %v318 = vpop.f32.mrb[0].mxu0
  %319 = vmatprep.mubr.f32.mxu0 0.0
  %320 = vmatmul.mubr.f32.gmra.mrb[0].mxu0 %v89
  %v321 = vpop.f32.mrb[0].mxu0
  %v322 = vadd.f32 %v152, %v321
  %v323 = vpop.f32.mrb[0].mxu0
  %324 = vmatprep.mubr.f32.mxu0 0.0
  %325 = vmatmul.mubr.f32.gmra.mrb[0].mxu0 %v90
  %v326 = vpop.f32.mrb[0].mxu0
  %v327 = vadd.f32 %v152, %v326
  %v328 = vpop.f32.mrb[0].mxu0
  %329 = vdwg.mxu0
  %v330 = vmul.f32 %v223, 256.0
  %v331 = vmul.f32 %v225, 256.0
  %v332 = vmul.f32 %v312, 256.0
  %v333 = vmul.f32 %v229, 256.0
  %v334 = vmul.f32 %v231, 256.0
  %v335 = vmul.f32 %v317, 256.0
  %v336 = vmul.f32 %v235, 256.0
  %v337 = vmul.f32 %v237, 256.0
  %v338 = vmul.f32 %v322, 256.0
  %v339 = vmul.f32 %v241, 256.0
  %v340 = vmul.f32 %v243, 256.0
  %v341 = vmul.f32 %v327, 256.0
  %v342 = vround.ne.pseudo %v330
  %v343 = vround.ne.pseudo %v331
  %v344 = vround.ne.pseudo %v332
  %v345 = vround.ne.pseudo %v333
  %v346 = vround.ne.pseudo %v334
  %v347 = vround.ne.pseudo %v335
  %v348 = vround.ne.pseudo %v336
  %v349 = vround.ne.pseudo %v337
  %v350 = vround.ne.pseudo %v338
  %v351 = vround.ne.pseudo %v339
  %v352 = vround.ne.pseudo %v340
  %v353 = vround.ne.pseudo %v341
  %v354 = vmax.f32 %v342, -32768.0
  %v355 = vmax.f32 %v343, -32768.0
  %v356 = vmax.f32 %v344, -32768.0
  %v357 = vmax.f32 %v345, -32768.0
  %v358 = vmax.f32 %v346, -32768.0
  %v359 = vmax.f32 %v347, -32768.0
  %v360 = vmax.f32 %v348, -32768.0
  %v361 = vmax.f32 %v349, -32768.0
  %v362 = vmax.f32 %v350, -32768.0
  %v363 = vmax.f32 %v351, -32768.0
  %v364 = vmax.f32 %v352, -32768.0
  %v365 = vmax.f32 %v353, -32768.0
  %v366 = vmin.f32 %v354, 32767.0
  %v367 = vmin.f32 %v355, 32767.0
  %v368 = vmin.f32 %v356, 32767.0
  %v369 = vmin.f32 %v357, 32767.0
  %v370 = vmin.f32 %v358, 32767.0
  %v371 = vmin.f32 %v359, 32767.0
  %v372 = vmin.f32 %v360, 32767.0
  %v373 = vmin.f32 %v361, 32767.0
  %v374 = vmin.f32 %v362, 32767.0
  %v375 = vmin.f32 %v363, 32767.0
  %v376 = vmin.f32 %v364, 32767.0
  %v377 = vmin.f32 %v365, 32767.0
  %v378 = vmul.f32 %v366, 0.00390625
  %v379 = vmul.f32 %v367, 0.00390625
  %v380 = vmul.f32 %v368, 0.00390625
  %v381 = vmul.f32 %v369, 0.00390625
  %v382 = vmul.f32 %v370, 0.00390625
  %v383 = vmul.f32 %v371, 0.00390625
  %v384 = vmul.f32 %v372, 0.00390625
  %v385 = vmul.f32 %v373, 0.00390625
  %v386 = vmul.f32 %v374, 0.00390625
  %v387 = vmul.f32 %v375, 0.00390625
  %v388 = vmul.f32 %v376, 0.00390625
  %v389 = vmul.f32 %v377, 0.00390625
  %390 = vst [vmem:[%s5] sm:$0xff] %v378
  %391 = vst [vmem:[%s5 + $0x8] sm:$0xff] %v379
  %392 = vst [vmem:[%s5 + $0x10] sm:$0xff] %v380
  %393 = vst [vmem:[%s5 + $0x18] sm:$0xff] %v381
  %394 = vst [vmem:[%s5 + $0x20] sm:$0xff] %v382
  %395 = vst [vmem:[%s5 + $0x28] sm:$0xff] %v383
  %396 = vst [vmem:[%s5 + $0x30] sm:$0xff] %v384
  %397 = vst [vmem:[%s5 + $0x38] sm:$0xff] %v385
  %398 = vst [vmem:[%s5 + $0x40] sm:$0xff] %v386
  %399 = vst [vmem:[%s5 + $0x48] sm:$0xff] %v387
  %400 = vst [vmem:[%s5 + $0x50] sm:$0xff] %v388
  %401 = vst [vmem:[%s5 + $0x58] sm:$0xff] %v389
  // Predicated region
  $region22: #{vit_forward.9} parent=0 // pred_check
    _
  $region23: #{vit_forward.9} parent=0 // pred_check_branch
    %403 = sbr.rel (0) target = $region25
  $region24: #{vit_forward.9} parent=0 // pred_region
    _
  $region25: #{vit_forward.9} parent=0 // pred_fallthru
    _
  // Predicated region
  $region26: #{vit_forward.9} parent=0 // pred_check
    _
  $region27: #{vit_forward.9} parent=0 // pred_check_branch
    %405 = sbr.rel (0) target = $region29
  $region28: #{vit_forward.9} parent=0 // pred_region
    _
  $region29: #{vit_forward.9} parent=0 // pred_fallthru
    _

// kernel: vit_forward.10
$region0: #{vit_forward.10}
  #allocation0 [shape = 'u32[]', space=smem, size = 0x4, offset = 0x4, fixed_abs, tag = 'smem constant byte address 0x4 - core index']
  #allocation1 [shape = 'u32[144,128]{1,0:T(1,128)}', space=vmem, size = 0x12000, scoped, tag = 'internal scratch']
  %s0 = inlined_call_operand.vmem [shape: f32[2,16,384], index: 0, kind: input, shape index: {}]
  %s1 = inlined_call_operand.vmem [shape: f32[2,16,128], index: 1, kind: input, shape index: {}]
  %s2 = inlined_call_operand.vmem [shape: f32[128,128], index: 2, kind: input, shape index: {}]
  %s3 = inlined_call_operand.vmem [shape: f32[1,128], index: 3, kind: input, shape index: {}]
  %s4 = inlined_call_operand.vmem [shape: f32[2,16,128], index: 4, kind: output, shape index: {}]
  %s5 = sld [smem:[#allocation0]]
  $region49: #{vit_forward.10} parent=0
    _
  %s7 = ssub.s32 1, %s5
  %s8 = scalar_select 0, %s7, %s5
  loop: start=0, step=1, limit=4
  $region2: #{vit_forward.10} parent=0 // loop_pre_header
    _
  $region3: #{vit_forward.10} parent=0 // loop_header
    %s10 = sphi 0, %s14
    %p11 = scmp.ge.s32.totalorder %s10, 4
    %s20 = sphi 0, %s22
    %s23 = sphi 0, %s20
    %s24 = sphi 0, %s23
    %s40 = sphi 0, %s24
    %s46 = sphi 0, %s48
    %s49 = sphi 0, %s46
    %s50 = sphi 0, %s49
    %s66 = sphi 0, %s50
    %s70 = sphi 0, %s70
    %s72 = sphi 0, %s70
    %s73 = sphi 0, %s72
    %s87 = sphi 0, %s73
    %s91 = sphi 0, %s91
    %s93 = sphi 0, %s91
    %s94 = sphi 0, %s93
    %s108 = sphi 0, %s94
    %s114 = sphi 0, %s116
    %s117 = sphi 0, %s114
    %s118 = sphi 0, %s117
    %s134 = sphi 0, %s118
  $region4: #{vit_forward.10} parent=0 // loop_header_branch
    %13 = sbr.rel (%p11) target = $region8
  $region5: #{vit_forward.10} parent=0 // loop_body
    %s15 = ssub.s32 %s10, 1
    %s16 = ssub.s32 %s10, 2
    %s17 = sadd.s32 %s10, 1
    %s18 = ssub.s32 %s10, %s17
    %p19 = scmp.eq.s32.totalorder %s18, 0
    %s21 = sadd.s32 %s20, 1
    %s22 = scalar_select %p19, %s20, %s21
    %p25 = pneg %p19
    %p26 = scmp.eq.s32.totalorder %s10, 1
    %p27 = por %p25, %p26
    %p28 = scmp.ne.s32.totalorder %s20, %s23
    %p29 = scmp.eq.s32.totalorder %s10, 0
    %p30 = por %p28, %p29
    %p31 = scmp.ne.s32.totalorder %s20, %s23
    %p32 = scmp.eq.s32.totalorder %s15, 1
    %p33 = por %p31, %p32
    %p34 = scmp.ne.s32.totalorder %s23, %s24
    %p35 = scmp.eq.s32.totalorder %s15, 0
    %p36 = por %p34, %p35
    %p37 = scmp.ne.s32.totalorder %s23, %s24
    %p38 = scmp.eq.s32.totalorder %s16, 1
    %p39 = por %p37, %p38
    %p41 = scmp.ne.s32.totalorder %s24, %s40
    %p42 = scmp.eq.s32.totalorder %s16, 0
    %p43 = por %p41, %p42
    %s44 = ssub.s32 %s10, %s17
    %p45 = scmp.eq.s32.totalorder %s44, 0
    %s47 = sadd.s32 %s46, 1
    %s48 = scalar_select %p45, %s46, %s47
    %p51 = pneg %p45
    %p52 = scmp.eq.s32.totalorder %s10, 1
    %p53 = por %p51, %p52
    %p54 = scmp.ne.s32.totalorder %s46, %s49
    %p55 = scmp.eq.s32.totalorder %s10, 0
    %p56 = por %p54, %p55
    %p57 = scmp.ne.s32.totalorder %s46, %s49
    %p58 = scmp.eq.s32.totalorder %s15, 1
    %p59 = por %p57, %p58
    %p60 = scmp.ne.s32.totalorder %s49, %s50
    %p61 = scmp.eq.s32.totalorder %s15, 0
    %p62 = por %p60, %p61
    %p63 = scmp.ne.s32.totalorder %s49, %s50
    %p64 = scmp.eq.s32.totalorder %s16, 1
    %p65 = por %p63, %p64
    %p67 = scmp.ne.s32.totalorder %s50, %s66
    %p68 = scmp.eq.s32.totalorder %s16, 0
    %p69 = por %p67, %p68
    %s71 = sadd.s32 %s70, 1
    %p74 = scmp.eq.s32.totalorder %s10, 1
    %p75 = scmp.ne.s32.totalorder %s70, %s72
    %p76 = scmp.eq.s32.totalorder %s10, 0
    %p77 = por %p75, %p76
    %p78 = scmp.ne.s32.totalorder %s70, %s72
    %p79 = scmp.eq.s32.totalorder %s15, 1
    %p80 = por %p78, %p79
    %p81 = scmp.ne.s32.totalorder %s72, %s73
    %p82 = scmp.eq.s32.totalorder %s15, 0
    %p83 = por %p81, %p82
    %p84 = scmp.ne.s32.totalorder %s72, %s73
    %p85 = scmp.eq.s32.totalorder %s16, 1
    %p86 = por %p84, %p85
    %p88 = scmp.ne.s32.totalorder %s73, %s87
    %p89 = scmp.eq.s32.totalorder %s16, 0
    %p90 = por %p88, %p89
    %s92 = sadd.s32 %s91, 1
    %p95 = scmp.eq.s32.totalorder %s10, 1
    %p96 = scmp.ne.s32.totalorder %s91, %s93
    %p97 = scmp.eq.s32.totalorder %s10, 0
    %p98 = por %p96, %p97
    %p99 = scmp.ne.s32.totalorder %s91, %s93
    %p100 = scmp.eq.s32.totalorder %s15, 1
    %p101 = por %p99, %p100
    %p102 = scmp.ne.s32.totalorder %s93, %s94
    %p103 = scmp.eq.s32.totalorder %s15, 0
    %p104 = por %p102, %p103
    %p105 = scmp.ne.s32.totalorder %s93, %s94
    %p106 = scmp.eq.s32.totalorder %s16, 1
    %p107 = por %p105, %p106
    %p109 = scmp.ne.s32.totalorder %s94, %s108
    %p110 = scmp.eq.s32.totalorder %s16, 0
    %p111 = por %p109, %p110
    %s112 = ssub.s32 %s10, %s17
    %p113 = scmp.eq.s32.totalorder %s112, 0
    %s115 = sadd.s32 %s114, 1
    %s116 = scalar_select %p113, %s114, %s115
    %p119 = pneg %p113
    %p120 = scmp.eq.s32.totalorder %s10, 1
    %p121 = por %p119, %p120
    %p122 = scmp.ne.s32.totalorder %s114, %s117
    %p123 = scmp.eq.s32.totalorder %s10, 0
    %p124 = por %p122, %p123
    %p125 = scmp.ne.s32.totalorder %s114, %s117
    %p126 = scmp.eq.s32.totalorder %s15, 1
    %p127 = por %p125, %p126
    %p128 = scmp.ne.s32.totalorder %s117, %s118
    %p129 = scmp.eq.s32.totalorder %s15, 0
    %p130 = por %p128, %p129
    %p131 = scmp.ne.s32.totalorder %s117, %s118
    %p132 = scmp.eq.s32.totalorder %s16, 1
    %p133 = por %p131, %p132
    %p135 = scmp.ne.s32.totalorder %s118, %s134
    %p136 = scmp.eq.s32.totalorder %s16, 0
    %p137 = por %p135, %p136
    %p138 = scmp.le.s32.totalorder 1, %s10
    %p139 = scmp.lt.s32.totalorder %s10, 3
    %p140 = pnand %p138, %p139
    %p141 = pneg %p140
    // Predicated region
    $region9: #{vit_forward.10} parent=5 // pred_check
      _
    $region10: #{vit_forward.10} parent=5 // pred_check_branch
      %143 = sbr.rel (%p140) target = $region12
    $region11: #{vit_forward.10} parent=5 // pred_region
      %s144 = ssub.s32 %s10, 1
      // Predicated region
      $region13: #{vit_forward.10} parent=11 // pred_check
        %p145 = pneg %p83
      $region14: #{vit_forward.10} parent=11 // pred_check_branch
        %147 = sbr.rel (%p145) target = $region16
      $region15: #{vit_forward.10} parent=11 // pred_region
        _
      $region16: #{vit_forward.10} parent=11 // pred_fallthru
        _
      // Predicated region
      $region17: #{vit_forward.10} parent=11 // pred_check
        %p148 = pneg %p104
      $region18: #{vit_forward.10} parent=11 // pred_check_branch
        %150 = sbr.rel (%p148) target = $region20
      $region19: #{vit_forward.10} parent=11 // pred_region
        _
      $region20: #{vit_forward.10} parent=11 // pred_fallthru
        _
    $region12: #{vit_forward.10} parent=5 // pred_fallthru
      _
    %p151 = scmp.lt.s32.totalorder %s10, 2
    // Predicated region
    $region21: #{vit_forward.10} parent=5 // pred_check
      %p152 = pneg %p151
    $region22: #{vit_forward.10} parent=5 // pred_check_branch
      %154 = sbr.rel (%p152) target = $region24
    $region23: #{vit_forward.10} parent=5 // pred_region
      // Predicated region
      $region25: #{vit_forward.10} parent=23 // pred_check
        %p155 = pneg %p30
      $region26: #{vit_forward.10} parent=23 // pred_check_branch
        %157 = sbr.rel (%p155) target = $region28
      $region27: #{vit_forward.10} parent=23 // pred_region
        %p158 = scmp.lt.s32.totalorder %s10, 1
        %s159 = scalar_select %p158, %s10, 1
        %s160 = smul.addr %s159, 6
        %s161 = smul.addr %s160, 8
        %s162 = scalar_lea.vmem %s0, %s161
      $region28: #{vit_forward.10} parent=23 // pred_fallthru
        _
      // Predicated region
      $region29: #{vit_forward.10} parent=23 // pred_check
        %p163 = pneg %p56
      $region30: #{vit_forward.10} parent=23 // pred_check_branch
        %165 = sbr.rel (%p163) target = $region32
      $region31: #{vit_forward.10} parent=23 // pred_region
        %p166 = scmp.lt.s32.totalorder %s10, 1
        %s167 = scalar_select %p166, %s10, 1
        %s168 = smul.addr %s167, 2
        %s169 = smul.addr %s168, 8
        %s170 = scalar_lea.vmem %s1, %s169
      $region32: #{vit_forward.10} parent=23 // pred_fallthru
        _
    $region24: #{vit_forward.10} parent=5 // pred_fallthru
      _
    %p171 = scmp.le.s32.totalorder 1, %s10
    %p172 = scmp.lt.s32.totalorder %s10, 3
    %p173 = pnand %p171, %p172
    %p174 = pneg %p173
    // Predicated region
    $region33: #{vit_forward.10} parent=5 // pred_check
      _
    $region34: #{vit_forward.10} parent=5 // pred_check_branch
      %176 = sbr.rel (%p173) target = $region36
    $region35: #{vit_forward.10} parent=5 // pred_region
      %s177 = ssub.s32 %s10, 1
      %p178 = scmp.lt.s32.totalorder %s15, 1
      %s179 = scalar_select %p178, %s15, 1
      %s180 = smul.addr %s179, 6
      %s181 = smul.addr %s180, 8
      %s182 = scalar_lea.vmem %s0, %s181
      %p183 = pneg %p36
      %p184 = pneg %p33
      %p185 = scmp.lt.s32.totalorder %s15, 1
      %s186 = scalar_select %p185, %s15, 1
      %s187 = smul.addr %s186, 2
      %s188 = smul.addr %s187, 8
      %s189 = scalar_lea.vmem %s1, %s188
      %p190 = pneg %p62
      %p191 = pneg %p59
      %p192 = pneg %p83
      %p193 = pneg %p80
      %p194 = pneg %p104
      %p195 = pneg %p101
      %p196 = pneg %p130
      %p197 = pneg %p127
      %p198 = scmp.lt.s32.totalorder %s15, 1
      %s199 = scalar_select %p198, %s15, 1
      %s200 = smul.addr %s199, 2
      %s201 = smul.addr %s200, 8
      %s202 = scalar_lea.vmem %s4, %s201
      %p203 = scmp.lt.s32.totalorder %s15, 1
      %s204 = scalar_select %p203, %s15, 1
      %s205 = smul.addr %s204, 6
      %s206 = smul.addr %s205, 8
      %s207 = scalar_lea.vmem %s0, %s206
      %p208 = scmp.lt.s32.totalorder %s15, 1
      %s209 = scalar_select %p208, %s15, 1
      %s210 = smul.addr %s209, 2
      %s211 = smul.addr %s210, 8
      %s212 = scalar_lea.vmem %s1, %s211
      %p213 = scmp.lt.s32.totalorder %s15, 1
      %s214 = scalar_select %p213, %s15, 1
      %s215 = smul.addr %s214, 2
      %s216 = smul.addr %s215, 8
      %s217 = scalar_lea.vmem %s4, %s216
      %v218 = vld [vmem:[%s207] sm:$0xff]
      %v219 = vld [vmem:[%s207 + $0x8] sm:$0xff]
      %v220 = vld [vmem:[%s207 + $0x10] sm:$0xff]
      %v221 = vld [vmem:[%s207 + $0x18] sm:$0xff]
      %v222 = vld [vmem:[%s207 + $0x20] sm:$0xff]
      %v223 = vld [vmem:[%s207 + $0x28] sm:$0xff]
      %vm224 = vcmask 261120
      %v226 = vsel %vm224, %v218, 0
      %v229 = vsel %vm224, %v221, 0
      %v232 = vsel %vm224, %v219, 0
      %v235 = vsel %vm224, %v222, 0
      %237 = vmatprep.subr.mxu0 0.0
      %238 = vmatpush1.xpose.msra.mxu0 %v232
      %239 = vmatprep.subr.mxu0 0.0
      %240 = vmatpush1.xpose.msra.mxu0 %v235
      %241 = vmatprep.subr.mxu0 0.0
      %242 = vmatpush1.xpose.msra.mxu0 0.0
      %243 = vmatprep.subr.mxu0 0.0
      %244 = vmatpush1.xpose.msra.mxu0 0.0
      %245 = vmatprep.subr.mxu0 0.0
      %246 = vmatpush1.xpose.msra.mxu0 0.0
      %247 = vmatprep.subr.mxu0 0.0
      %248 = vmatpush1.xpose.msra.mxu0 0.0
      %249 = vmatprep.subr.mxu0 0.0
      %250 = vmatpush1.xpose.msra.mxu0 0.0
      %251 = vmatprep.subr.mxu0 0.0
      %252 = vmatpush1.xpose.msra.mxu0 0.0
      %253 = vmatprep.subr.mxu0 0.0
      %254 = vmatpush1.xpose.msra.mxu0 0.0
      %255 = vmatprep.subr.mxu0 0.0
      %256 = vmatpush1.xpose.msra.mxu0 0.0
      %257 = vmatprep.subr.mxu0 0.0
      %258 = vmatpush1.xpose.msra.mxu0 0.0
      %259 = vmatprep.subr.mxu0 0.0
      %260 = vmatpush1.xpose.msra.mxu0 0.0
      %261 = vmatprep.subr.mxu0 0.0
      %262 = vmatpush1.xpose.msra.mxu0 0.0
      %263 = vmatprep.subr.mxu0 0.0
      %264 = vmatpush1.xpose.msra.mxu0 0.0
      %265 = vmatprep.subr.mxu0 0.0
      %266 = vmatpush1.xpose.msra.mxu0 0.0
      %267 = vmatprep.subr.mxu0 0.0
      %268 = vmatpush1.xpose.msra.mxu0 0.0
      %269 = vmatprep.subr.mxu0 0.0
      %270 = vmatpush1.xpose.msra.mxu0 0.0
      %271 = vmatprep.subr.mxu0 0.0
      %272 = vmatpush1.xpose.msra.mxu0 0.0
      %273 = vmatprep.subr.mxu0 0.0
      %274 = vmatpush1.xpose.msra.mxu0 0.0
      %275 = vmatprep.subr.mxu0 0.0
      %276 = vmatpush1.xpose.msra.mxu0 0.0
      %277 = vmatprep.subr.mxu0 0.0
      %278 = vmatpush1.xpose.msra.mxu0 0.0
      %279 = vmatprep.subr.mxu0 0.0
      %280 = vmatpush1.xpose.msra.mxu0 0.0
      %281 = vmatprep.subr.mxu0 0.0
      %282 = vmatpush1.xpose.msra.mxu0 0.0
      %283 = vmatprep.subr.mxu0 0.0
      %284 = vmatpush1.xpose.msra.mxu0 0.0
      %285 = vmatprep.subr.mxu0 0.0
      %286 = vmatpush1.xpose.msra.mxu0 0.0
      %287 = vmatprep.subr.mxu0 0.0
      %288 = vmatpush1.xpose.msra.mxu0 0.0
      %289 = vmatprep.subr.mxu0 0.0
      %290 = vmatpush1.xpose.msra.mxu0 0.0
      %291 = vmatprep.subr.mxu0 0.0
      %292 = vmatpush1.xpose.msra.mxu0 0.0
      %293 = vmatprep.subr.mxu0 0.0
      %294 = vmatpush1.xpose.msra.mxu0 0.0
      %295 = vmatprep.subr.mxu0 0.0
      %296 = vmatpush1.xpose.msra.mxu0 0.0
      %297 = vmatprep.subr.mxu0 0.0
      %298 = vmatpush1.xpose.msra.mxu0 0.0
      %299 = vmatprep.subr.mxu0 0.0
      %300 = vmatpush1.xpose.msra.mxu0 0.0
      %301 = vmatprep.mubr.f32.mxu0 0.0
      %302 = vmatmul.mubr.f32.gmra.mrb[0].mxu0 %v226
      %v303 = vpop.f32.mrb[0].mxu0
      %v304 = vadd.f32 0.0, %v303
      %v305 = vpop.f32.mrb[0].mxu0
      %306 = vmatprep.mubr.f32.mxu0 0.0
      %307 = vmatmul.mubr.f32.gmra.mrb[0].mxu0 %v229
      %v308 = vpop.f32.mrb[0].mxu0
      %v309 = vadd.f32 0.0, %v308
      %v310 = vpop.f32.mrb[0].mxu0
      %311 = vdwg.mxu0
      %v312 = vmul.f32 %v304, 0.17677669
      %v313 = vmul.f32 %v309, 0.17677669
      %vm314 = vcmask 130048
      %v315 = vsel %vm314, %v312, -inf
      %316 = vmax.xlane.f32.xlu0 %v315
      %v317 = vpop.xlane.xlu0 %316
      %v318 = vsel %vm314, %v313, -inf
      %319 = vmax.xlane.f32.xlu0 %v318
      %v320 = vpop.xlane.xlu0 %319
      %v321 = vsub.f32 %v312, %v317
      %v322 = vsub.f32 %v313, %v320
      %v323 = vmul.f32 %v321, 1.442695
      %v324 = vpow.pop %v323
      %v325 = vmul.f32 %v322, 1.442695
      %v326 = vpow.pop %v325
      %v327 = vsel %vm314, %v324, 0.0
      %328 = vadd.xlane.f32.xlu0 %v327
      %v329 = vpop.xlane.xlu0 %328
      %v330 = vsel %vm314, %v326, 0.0
      %331 = vadd.xlane.f32.xlu0 %v330
      %v332 = vpop.xlane.xlu0 %331
      %v333 = vrcp.pop %v329
      %v334 = vrcp.pop %v332
      %v335 = vmul.f32 %v324, %v333
      %v336 = vmul.f32 %v326, %v334
      %v337 = vmul.f32 %v335, 256.0
      %v338 = vmul.f32 %v336, 256.0
      %v339 = vround.ne.pseudo %v337
      %v340 = vround.ne.pseudo %v338
      %v341 = vmax.f32 %v339, -32768.0
      %v342 = vmax.f32 %v340, -32768.0
      %v343 = vmin.f32 %v341, 32767.0
      %v344 = vmin.f32 %v342, 32767.0
      %v345 = vmul.f32 %v343, 0.00390625
      %v346 = vmul.f32 %v344, 0.00390625
      %v348 = vsel %vm314, %v345, 0
      %v351 = vsel %vm314, %v346, 0
      %353 = vmatprep.subr.mxu0 0.0
      %354 = vmatpush1.msra.mxu0 %v220
      %355 = vmatprep.subr.mxu0 0.0
      %356 = vmatpush1.msra.mxu0 %v223
      %357 = vmatprep.subr.mxu0 0.0
      %358 = vmatpush1.msra.mxu0 0.0
      %359 = vmatprep.subr.mxu0 0.0
      %360 = vmatpush1.msra.mxu0 0.0
      %361 = vmatprep.subr.mxu0 0.0
      %362 = vmatpush1.msra.mxu0 0.0
      %363 = vmatprep.subr.mxu0 0.0
      %364 = vmatpush1.msra.mxu0 0.0
      %365 = vmatprep.subr.mxu0 0.0
      %366 = vmatpush1.msra.mxu0 0.0
      %367 = vmatprep.subr.mxu0 0.0
      %368 = vmatpush1.msra.mxu0 0.0
      %369 = vmatprep.subr.mxu0 0.0
      %370 = vmatpush1.msra.mxu0 0.0
      %371 = vmatprep.subr.mxu0 0.0
      %372 = vmatpush1.msra.mxu0 0.0
      %373 = vmatprep.subr.mxu0 0.0
      %374 = vmatpush1.msra.mxu0 0.0
      %375 = vmatprep.subr.mxu0 0.0
      %376 = vmatpush1.msra.mxu0 0.0
      %377 = vmatprep.subr.mxu0 0.0
      %378 = vmatpush1.msra.mxu0 0.0
      %379 = vmatprep.subr.mxu0 0.0
      %380 = vmatpush1.msra.mxu0 0.0
      %381 = vmatprep.subr.mxu0 0.0
      %382 = vmatpush1.msra.mxu0 0.0
      %383 = vmatprep.subr.mxu0 0.0
      %384 = vmatpush1.msra.mxu0 0.0
      %385 = vmatprep.subr.mxu0 0.0
      %386 = vmatpush1.msra.mxu0 0.0
      %387 = vmatprep.subr.mxu0 0.0
      %388 = vmatpush1.msra.mxu0 0.0
      %389 = vmatprep.subr.mxu0 0.0
      %390 = vmatpush1.msra.mxu0 0.0
      %391 = vmatprep.subr.mxu0 0.0
      %392 = vmatpush1.msra.mxu0 0.0
      %393 = vmatprep.subr.mxu0 0.0
      %394 = vmatpush1.msra.mxu0 0.0
      %395 = vmatprep.subr.mxu0 0.0
      %396 = vmatpush1.msra.mxu0 0.0
      %397 = vmatprep.subr.mxu0 0.0
      %398 = vmatpush1.msra.mxu0 0.0
      %399 = vmatprep.subr.mxu0 0.0
      %400 = vmatpush1.msra.mxu0 0.0
      %401 = vmatprep.subr.mxu0 0.0
      %402 = vmatpush1.msra.mxu0 0.0
      %403 = vmatprep.subr.mxu0 0.0
      %404 = vmatpush1.msra.mxu0 0.0
      %405 = vmatprep.subr.mxu0 0.0
      %406 = vmatpush1.msra.mxu0 0.0
      %407 = vmatprep.subr.mxu0 0.0
      %408 = vmatpush1.msra.mxu0 0.0
      %409 = vmatprep.subr.mxu0 0.0
      %410 = vmatpush1.msra.mxu0 0.0
      %411 = vmatprep.subr.mxu0 0.0
      %412 = vmatpush1.msra.mxu0 0.0
      %413 = vmatprep.subr.mxu0 0.0
      %414 = vmatpush1.msra.mxu0 0.0
      %415 = vmatprep.subr.mxu0 0.0
      %416 = vmatpush1.msra.mxu0 0.0
      %417 = vmatprep.mubr.f32.mxu0 0.0
      %418 = vmatmul.mubr.f32.gmra.mrb[0].mxu0 %v348
      %v419 = vpop.f32.mrb[0].mxu0
      %v420 = vadd.f32 0.0, %v419
      %v421 = vpop.f32.mrb[0].mxu0
      %422 = vmatprep.mubr.f32.mxu0 0.0
      %423 = vmatmul.mubr.f32.gmra.mrb[0].mxu0 %v351
      %v424 = vpop.f32.mrb[0].mxu0
      %v425 = vadd.f32 0.0, %v424
      %v426 = vpop.f32.mrb[0].mxu0
      %427 = vdwg.mxu0
      %428 = vrot.lane.b32.xlu0 %v218, 96
      %v429 = vpop.permute.xlu0 %428
      %430 = vrot.lane.b32.xlu0 %v221, 96
      %v431 = vpop.permute.xlu0 %430
      %432 = vrot.lane.b32.xlu0 %v219, 96
      %v433 = vpop.permute.xlu0 %432
      %434 = vrot.lane.b32.xlu0 %v222, 96
      %v435 = vpop.permute.xlu0 %434
      %v436 = vsel %vm224, %v429, 0
      %v438 = vsel %vm224, %v431, 0
      %v440 = vsel %vm224, %v433, 0
      %v442 = vsel %vm224, %v435, 0
      %444 = vmatprep.subr.mxu0 0.0
      %445 = vmatpush1.xpose.msra.mxu0 %v440
      %446 = vmatprep.subr.mxu0 0.0
      %447 = vmatpush1.xpose.msra.mxu0 %v442
      %448 = vmatprep.subr.mxu0 0.0
      %449 = vmatpush1.xpose.msra.mxu0 0.0
      %450 = vmatprep.subr.mxu0 0.0
      %451 = vmatpush1.xpose.msra.mxu0 0.0
      %452 = vmatprep.subr.mxu0 0.0
      %453 = vmatpush1.xpose.msra.mxu0 0.0
      %454 = vmatprep.subr.mxu0 0.0
      %455 = vmatpush1.xpose.msra.mxu0 0.0
      %456 = vmatprep.subr.mxu0 0.0
      %457 = vmatpush1.xpose.msra.mxu0 0.0
      %458 = vmatprep.subr.mxu0 0.0
      %459 = vmatpush1.xpose.msra.mxu0 0.0
      %460 = vmatprep.subr.mxu0 0.0
      %461 = vmatpush1.xpose.msra.mxu0 0.0
      %462 = vmatprep.subr.mxu0 0.0
      %463 = vmatpush1.xpose.msra.mxu0 0.0
      %464 = vmatprep.subr.mxu0 0.0
      %465 = vmatpush1.xpose.msra.mxu0 0.0
      %466 = vmatprep.subr.mxu0 0.0
      %467 = vmatpush1.xpose.msra.mxu0 0.0
      %468 = vmatprep.subr.mxu0 0.0
      %469 = vmatpush1.xpose.msra.mxu0 0.0
      %470 = vmatprep.subr.mxu0 0.0
      %471 = vmatpush1.xpose.msra.mxu0 0.0
      %472 = vmatprep.subr.mxu0 0.0
      %473 = vmatpush1.xpose.msra.mxu0 0.0
      %474 = vmatprep.subr.mxu0 0.0
      %475 = vmatpush1.xpose.msra.mxu0 0.0
      %476 = vmatprep.subr.mxu0 0.0
      %477 = vmatpush1.xpose.msra.mxu0 0.0
      %478 = vmatprep.subr.mxu0 0.0
      %479 = vmatpush1.xpose.msra.mxu0 0.0
      %480 = vmatprep.subr.mxu0 0.0
      %481 = vmatpush1.xpose.msra.mxu0 0.0
      %482 = vmatprep.subr.mxu0 0.0
      %483 = vmatpush1.xpose.msra.mxu0 0.0
      %484 = vmatprep.subr.mxu0 0.0
      %485 = vmatpush1.xpose.msra.mxu0 0.0
      %486 = vmatprep.subr.mxu0 0.0
      %487 = vmatpush1.xpose.msra.mxu0 0.0
      %488 = vmatprep.subr.mxu0 0.0
      %489 = vmatpush1.xpose.msra.mxu0 0.0
      %490 = vmatprep.subr.mxu0 0.0
      %491 = vmatpush1.xpose.msra.mxu0 0.0
      %492 = vmatprep.subr.mxu0 0.0
      %493 = vmatpush1.xpose.msra.mxu0 0.0
      %494 = vmatprep.subr.mxu0 0.0
      %495 = vmatpush1.xpose.msra.mxu0 0.0
      %496 = vmatprep.subr.mxu0 0.0
      %497 = vmatpush1.xpose.msra.mxu0 0.0
      %498 = vmatprep.subr.mxu0 0.0
      %499 = vmatpush1.xpose.msra.mxu0 0.0
      %500 = vmatprep.subr.mxu0 0.0
      %501 = vmatpush1.xpose.msra.mxu0 0.0
      %502 = vmatprep.subr.mxu0 0.0
      %503 = vmatpush1.xpose.msra.mxu0 0.0
      %504 = vmatprep.subr.mxu0 0.0
      %505 = vmatpush1.xpose.msra.mxu0 0.0
      %506 = vmatprep.subr.mxu0 0.0
      %507 = vmatpush1.xpose.msra.mxu0 0.0
      %508 = vmatprep.mubr.f32.mxu0 0.0
      %509 = vmatmul.mubr.f32.gmra.mrb[0].mxu0 %v436
      %v510 = vpop.f32.mrb[0].mxu0
      %v511 = vadd.f32 0.0, %v510
      %v512 = vpop.f32.mrb[0].mxu0
      %513 = vmatprep.mubr.f32.mxu0 0.0
      %514 = vmatmul.mubr.f32.gmra.mrb[0].mxu0 %v438
      %v515 = vpop.f32.mrb[0].mxu0
      %v516 = vadd.f32 0.0, %v515
      %v517 = vpop.f32.mrb[0].mxu0
      %518 = vdwg.mxu0
      %v519 = vmul.f32 %v511, 0.17677669
      %v520 = vmul.f32 %v516, 0.17677669
      %v521 = vsel %vm314, %v519, -inf
      %522 = vmax.xlane.f32.xlu0 %v521
      %v523 = vpop.xlane.xlu0 %522
      %v524 = vsel %vm314, %v520, -inf
      %525 = vmax.xlane.f32.xlu0 %v524
      %v526 = vpop.xlane.xlu0 %525
      %v527 = vsub.f32 %v519, %v523
      %v528 = vsub.f32 %v520, %v526
      %v529 = vmul.f32 %v527, 1.442695
      %v530 = vpow.pop %v529
      %v531 = vmul.f32 %v528, 1.442695
      %v532 = vpow.pop %v531
      %v533 = vsel %vm314, %v530, 0.0
      %534 = vadd.xlane.f32.xlu0 %v533
      %v535 = vpop.xlane.xlu0 %534
      %v536 = vsel %vm314, %v532, 0.0
      %537 = vadd.xlane.f32.xlu0 %v536
      %v538 = vpop.xlane.xlu0 %537
      %v539 = vrcp.pop %v535
      %v540 = vrcp.pop %v538
      %v541 = vmul.f32 %v530, %v539
      %v542 = vmul.f32 %v532, %v540
      %v543 = vmul.f32 %v541, 256.0
      %v544 = vmul.f32 %v542, 256.0
      %v545 = vround.ne.pseudo %v543
      %v546 = vround.ne.pseudo %v544
      %v547 = vmax.f32 %v545, -32768.0
      %v548 = vmax.f32 %v546, -32768.0
      %v549 = vmin.f32 %v547, 32767.0
      %v550 = vmin.f32 %v548, 32767.0
      %v551 = vmul.f32 %v549, 0.00390625
      %v552 = vmul.f32 %v550, 0.00390625
      %555 = vrot.lane.b32.xlu0 %v220, 96
      %v556 = vpop.permute.xlu0 %555
      %557 = vrot.lane.b32.xlu0 %v223, 96
      %v558 = vpop.permute.xlu0 %557
      %v562 = vsel %vm314, %v551, 0
      %v565 = vsel %vm314, %v552, 0
      %567 = vmatprep.subr.mxu0 0.0
      %568 = vmatpush1.msra.mxu0 %v556
      %569 = vmatprep.subr.mxu0 0.0
      %570 = vmatpush1.msra.mxu0 %v558
      %571 = vmatprep.subr.mxu0 0.0
      %572 = vmatpush1.msra.mxu0 0.0
      %573 = vmatprep.subr.mxu0 0.0
      %574 = vmatpush1.msra.mxu0 0.0
      %575 = vmatprep.subr.mxu0 0.0
      %576 = vmatpush1.msra.mxu0 0.0
      %577 = vmatprep.subr.mxu0 0.0
      %578 = vmatpush1.msra.mxu0 0.0
      %579 = vmatprep.subr.mxu0 0.0
      %580 = vmatpush1.msra.mxu0 0.0
      %581 = vmatprep.subr.mxu0 0.0
      %582 = vmatpush1.msra.mxu0 0.0
      %583 = vmatprep.subr.mxu0 0.0
      %584 = vmatpush1.msra.mxu0 0.0
      %585 = vmatprep.subr.mxu0 0.0
      %586 = vmatpush1.msra.mxu0 0.0
      %587 = vmatprep.subr.mxu0 0.0
      %588 = vmatpush1.msra.mxu0 0.0
      %589 = vmatprep.subr.mxu0 0.0
      %590 = vmatpush1.msra.mxu0 0.0
      %591 = vmatprep.subr.mxu0 0.0
      %592 = vmatpush1.msra.mxu0 0.0
      %593 = vmatprep.subr.mxu0 0.0
      %594 = vmatpush1.msra.mxu0 0.0
      %595 = vmatprep.subr.mxu0 0.0
      %596 = vmatpush1.msra.mxu0 0.0
      %597 = vmatprep.subr.mxu0 0.0
      %598 = vmatpush1.msra.mxu0 0.0
      %599 = vmatprep.subr.mxu0 0.0
      %600 = vmatpush1.msra.mxu0 0.0
      %601 = vmatprep.subr.mxu0 0.0
      %602 = vmatpush1.msra.mxu0 0.0
      %603 = vmatprep.subr.mxu0 0.0
      %604 = vmatpush1.msra.mxu0 0.0
      %605 = vmatprep.subr.mxu0 0.0
      %606 = vmatpush1.msra.mxu0 0.0
      %607 = vmatprep.subr.mxu0 0.0
      %608 = vmatpush1.msra.mxu0 0.0
      %609 = vmatprep.subr.mxu0 0.0
      %610 = vmatpush1.msra.mxu0 0.0
      %611 = vmatprep.subr.mxu0 0.0
      %612 = vmatpush1.msra.mxu0 0.0
      %613 = vmatprep.subr.mxu0 0.0
      %614 = vmatpush1.msra.mxu0 0.0
      %615 = vmatprep.subr.mxu0 0.0
      %616 = vmatpush1.msra.mxu0 0.0
      %617 = vmatprep.subr.mxu0 0.0
      %618 = vmatpush1.msra.mxu0 0.0
      %619 = vmatprep.subr.mxu0 0.0
      %620 = vmatpush1.msra.mxu0 0.0
      %621 = vmatprep.subr.mxu0 0.0
      %622 = vmatpush1.msra.mxu0 0.0
      %623 = vmatprep.subr.mxu0 0.0
      %624 = vmatpush1.msra.mxu0 0.0
      %625 = vmatprep.subr.mxu0 0.0
      %626 = vmatpush1.msra.mxu0 0.0
      %627 = vmatprep.subr.mxu0 0.0
      %628 = vmatpush1.msra.mxu0 0.0
      %629 = vmatprep.subr.mxu0 0.0
      %630 = vmatpush1.msra.mxu0 0.0
      %631 = vmatprep.mubr.f32.mxu0 0.0
      %632 = vmatmul.mubr.f32.gmra.mrb[0].mxu0 %v562
      %v633 = vpop.f32.mrb[0].mxu0
      %v634 = vadd.f32 0.0, %v633
      %v635 = vpop.f32.mrb[0].mxu0
      %636 = vmatprep.mubr.f32.mxu0 0.0
      %637 = vmatmul.mubr.f32.gmra.mrb[0].mxu0 %v565
      %v638 = vpop.f32.mrb[0].mxu0
      %v639 = vadd.f32 0.0, %v638
      %v640 = vpop.f32.mrb[0].mxu0
      %641 = vdwg.mxu0
      %642 = vrot.lane.b32.xlu0 %v218, 64
      %v643 = vpop.permute.xlu0 %642
      %644 = vrot.lane.b32.xlu0 %v221, 64
      %v645 = vpop.permute.xlu0 %644
      %646 = vrot.lane.b32.xlu0 %v219, 64
      %v647 = vpop.permute.xlu0 %646
      %648 = vrot.lane.b32.xlu0 %v222, 64
      %v649 = vpop.permute.xlu0 %648
      %v650 = vsel %vm224, %v643, 0
      %v652 = vsel %vm224, %v645, 0
      %v654 = vsel %vm224, %v647, 0
      %v656 = vsel %vm224, %v649, 0
      %658 = vmatprep.subr.mxu0 0.0
      %659 = vmatpush1.xpose.msra.mxu0 %v654
      %660 = vmatprep.subr.mxu0 0.0
      %661 = vmatpush1.xpose.msra.mxu0 %v656
      %662 = vmatprep.subr.mxu0 0.0
      %663 = vmatpush1.xpose.msra.mxu0 0.0
      %664 = vmatprep.subr.mxu0 0.0
      %665 = vmatpush1.xpose.msra.mxu0 0.0
      %666 = vmatprep.subr.mxu0 0.0
      %667 = vmatpush1.xpose.msra.mxu0 0.0
      %668 = vmatprep.subr.mxu0 0.0
      %669 = vmatpush1.xpose.msra.mxu0 0.0
      %670 = vmatprep.subr.mxu0 0.0
      %671 = vmatpush1.xpose.msra.mxu0 0.0
      %672 = vmatprep.subr.mxu0 0.0
      %673 = vmatpush1.xpose.msra.mxu0 0.0
      %674 = vmatprep.subr.mxu0 0.0
      %675 = vmatpush1.xpose.msra.mxu0 0.0
      %676 = vmatprep.subr.mxu0 0.0
      %677 = vmatpush1.xpose.msra.mxu0 0.0
      %678 = vmatprep.subr.mxu0 0.0
      %679 = vmatpush1.xpose.msra.mxu0 0.0
      %680 = vmatprep.subr.mxu0 0.0
      %681 = vmatpush1.xpose.msra.mxu0 0.0
      %682 = vmatprep.subr.mxu0 0.0
      %683 = vmatpush1.xpose.msra.mxu0 0.0
      %684 = vmatprep.subr.mxu0 0.0
      %685 = vmatpush1.xpose.msra.mxu0 0.0
      %686 = vmatprep.subr.mxu0 0.0
      %687 = vmatpush1.xpose.msra.mxu0 0.0
      %688 = vmatprep.subr.mxu0 0.0
      %689 = vmatpush1.xpose.msra.mxu0 0.0
      %690 = vmatprep.subr.mxu0 0.0
      %691 = vmatpush1.xpose.msra.mxu0 0.0
      %692 = vmatprep.subr.mxu0 0.0
      %693 = vmatpush1.xpose.msra.mxu0 0.0
      %694 = vmatprep.subr.mxu0 0.0
      %695 = vmatpush1.xpose.msra.mxu0 0.0
      %696 = vmatprep.subr.mxu0 0.0
      %697 = vmatpush1.xpose.msra.mxu0 0.0
      %698 = vmatprep.subr.mxu0 0.0
      %699 = vmatpush1.xpose.msra.mxu0 0.0
      %700 = vmatprep.subr.mxu0 0.0
      %701 = vmatpush1.xpose.msra.mxu0 0.0
      %702 = vmatprep.subr.mxu0 0.0
      %703 = vmatpush1.xpose.msra.mxu0 0.0
      %704 = vmatprep.subr.mxu0 0.0
      %705 = vmatpush1.xpose.msra.mxu0 0.0
      %706 = vmatprep.subr.mxu0 0.0
      %707 = vmatpush1.xpose.msra.mxu0 0.0
      %708 = vmatprep.subr.mxu0 0.0
      %709 = vmatpush1.xpose.msra.mxu0 0.0
      %710 = vmatprep.subr.mxu0 0.0
      %711 = vmatpush1.xpose.msra.mxu0 0.0
      %712 = vmatprep.subr.mxu0 0.0
      %713 = vmatpush1.xpose.msra.mxu0 0.0
      %714 = vmatprep.subr.mxu0 0.0
      %715 = vmatpush1.xpose.msra.mxu0 0.0
      %716 = vmatprep.subr.mxu0 0.0
      %717 = vmatpush1.xpose.msra.mxu0 0.0
      %718 = vmatprep.subr.mxu0 0.0
      %719 = vmatpush1.xpose.msra.mxu0 0.0
      %720 = vmatprep.subr.mxu0 0.0
      %721 = vmatpush1.xpose.msra.mxu0 0.0
      %722 = vmatprep.mubr.f32.mxu0 0.0
      %723 = vmatmul.mubr.f32.gmra.mrb[0].mxu0 %v650
      %v724 = vpop.f32.mrb[0].mxu0
      %v725 = vadd.f32 0.0, %v724
      %v726 = vpop.f32.mrb[0].mxu0
      %727 = vmatprep.mubr.f32.mxu0 0.0
      %728 = vmatmul.mubr.f32.gmra.mrb[0].mxu0 %v652
      %v729 = vpop.f32.mrb[0].mxu0
      %v730 = vadd.f32 0.0, %v729
      %v731 = vpop.f32.mrb[0].mxu0
      %732 = vdwg.mxu0
      %v733 = vmul.f32 %v725, 0.17677669
      %v734 = vmul.f32 %v730, 0.17677669
      %v735 = vsel %vm314, %v733, -inf
      %736 = vmax.xlane.f32.xlu0 %v735
      %v737 = vpop.xlane.xlu0 %736
      %v738 = vsel %vm314, %v734, -inf
      %739 = vmax.xlane.f32.xlu0 %v738
      %v740 = vpop.xlane.xlu0 %739
      %v741 = vsub.f32 %v733, %v737
      %v742 = vsub.f32 %v734, %v740
      %v743 = vmul.f32 %v741, 1.442695
      %v744 = vpow.pop %v743
      %v745 = vmul.f32 %v742, 1.442695
      %v746 = vpow.pop %v745
      %v747 = vsel %vm314, %v744, 0.0
      %748 = vadd.xlane.f32.xlu0 %v747
      %v749 = vpop.xlane.xlu0 %748
      %v750 = vsel %vm314, %v746, 0.0
      %751 = vadd.xlane.f32.xlu0 %v750
      %v752 = vpop.xlane.xlu0 %751
      %v753 = vrcp.pop %v749
      %v754 = vrcp.pop %v752
      %v755 = vmul.f32 %v744, %v753
      %v756 = vmul.f32 %v746, %v754
      %v757 = vmul.f32 %v755, 256.0
      %v758 = vmul.f32 %v756, 256.0
      %v759 = vround.ne.pseudo %v757
      %v760 = vround.ne.pseudo %v758
      %v761 = vmax.f32 %v759, -32768.0
      %v762 = vmax.f32 %v760, -32768.0
      %v763 = vmin.f32 %v761, 32767.0
      %v764 = vmin.f32 %v762, 32767.0
      %v765 = vmul.f32 %v763, 0.00390625
      %v766 = vmul.f32 %v764, 0.00390625
      %767 = vrot.lane.b32.xlu0 %v220, 64
      %v768 = vpop.permute.xlu0 %767
      %769 = vrot.lane.b32.xlu0 %v223, 64
      %v770 = vpop.permute.xlu0 %769
      %v774 = vsel %vm314, %v765, 0
      %v777 = vsel %vm314, %v766, 0
      %779 = vmatprep.subr.mxu0 0.0
      %780 = vmatpush1.msra.mxu0 %v768
      %781 = vmatprep.subr.mxu0 0.0
      %782 = vmatpush1.msra.mxu0 %v770
      %783 = vmatprep.subr.mxu0 0.0
      %784 = vmatpush1.msra.mxu0 0.0
      %785 = vmatprep.subr.mxu0 0.0
      %786 = vmatpush1.msra.mxu0 0.0
      %787 = vmatprep.subr.mxu0 0.0
      %788 = vmatpush1.msra.mxu0 0.0
      %789 = vmatprep.subr.mxu0 0.0
      %790 = vmatpush1.msra.mxu0 0.0
      %791 = vmatprep.subr.mxu0 0.0
      %792 = vmatpush1.msra.mxu0 0.0
      %793 = vmatprep.subr.mxu0 0.0
      %794 = vmatpush1.msra.mxu0 0.0
      %795 = vmatprep.subr.mxu0 0.0
      %796 = vmatpush1.msra.mxu0 0.0
      %797 = vmatprep.subr.mxu0 0.0
      %798 = vmatpush1.msra.mxu0 0.0
      %799 = vmatprep.subr.mxu0 0.0
      %800 = vmatpush1.msra.mxu0 0.0
      %801 = vmatprep.subr.mxu0 0.0
      %802 = vmatpush1.msra.mxu0 0.0
      %803 = vmatprep.subr.mxu0 0.0
      %804 = vmatpush1.msra.mxu0 0.0
      %805 = vmatprep.subr.mxu0 0.0
      %806 = vmatpush1.msra.mxu0 0.0
      %807 = vmatprep.subr.mxu0 0.0
      %808 = vmatpush1.msra.mxu0 0.0
      %809 = vmatprep.subr.mxu0 0.0
      %810 = vmatpush1.msra.mxu0 0.0
      %811 = vmatprep.subr.mxu0 0.0
      %812 = vmatpush1.msra.mxu0 0.0
      %813 = vmatprep.subr.mxu0 0.0
      %814 = vmatpush1.msra.mxu0 0.0
      %815 = vmatprep.subr.mxu0 0.0
      %816 = vmatpush1.msra.mxu0 0.0
      %817 = vmatprep.subr.mxu0 0.0
      %818 = vmatpush1.msra.mxu0 0.0
      %819 = vmatprep.subr.mxu0 0.0
      %820 = vmatpush1.msra.mxu0 0.0
      %821 = vmatprep.subr.mxu0 0.0
      %822 = vmatpush1.msra.mxu0 0.0
      %823 = vmatprep.subr.mxu0 0.0
      %824 = vmatpush1.msra.mxu0 0.0
      %825 = vmatprep.subr.mxu0 0.0
      %826 = vmatpush1.msra.mxu0 0.0
      %827 = vmatprep.subr.mxu0 0.0
      %828 = vmatpush1.msra.mxu0 0.0
      %829 = vmatprep.subr.mxu0 0.0
      %830 = vmatpush1.msra.mxu0 0.0
      %831 = vmatprep.subr.mxu0 0.0
      %832 = vmatpush1.msra.mxu0 0.0
      %833 = vmatprep.subr.mxu0 0.0
      %834 = vmatpush1.msra.mxu0 0.0
      %835 = vmatprep.subr.mxu0 0.0
      %836 = vmatpush1.msra.mxu0 0.0
      %837 = vmatprep.subr.mxu0 0.0
      %838 = vmatpush1.msra.mxu0 0.0
      %839 = vmatprep.subr.mxu0 0.0
      %840 = vmatpush1.msra.mxu0 0.0
      %841 = vmatprep.subr.mxu0 0.0
      %842 = vmatpush1.msra.mxu0 0.0
      %843 = vmatprep.mubr.f32.mxu0 0.0
      %844 = vmatmul.mubr.f32.gmra.mrb[0].mxu0 %v774
      %v845 = vpop.f32.mrb[0].mxu0
      %v846 = vadd.f32 0.0, %v845
      %v847 = vpop.f32.mrb[0].mxu0
      %848 = vmatprep.mubr.f32.mxu0 0.0
      %849 = vmatmul.mubr.f32.gmra.mrb[0].mxu0 %v777
      %v850 = vpop.f32.mrb[0].mxu0
      %v851 = vadd.f32 0.0, %v850
      %v852 = vpop.f32.mrb[0].mxu0
      %853 = vdwg.mxu0
      %854 = vrot.lane.b32.xlu0 %v218, 32
      %v855 = vpop.permute.xlu0 %854
      %856 = vrot.lane.b32.xlu0 %v221, 32
      %v857 = vpop.permute.xlu0 %856
      %858 = vrot.lane.b32.xlu0 %v219, 32
      %v859 = vpop.permute.xlu0 %858
      %860 = vrot.lane.b32.xlu0 %v222, 32
      %v861 = vpop.permute.xlu0 %860
      %v862 = vsel %vm224, %v855, 0
      %v864 = vsel %vm224, %v857, 0
      %v866 = vsel %vm224, %v859, 0
      %v868 = vsel %vm224, %v861, 0
      %870 = vmatprep.subr.mxu0 0.0
      %871 = vmatpush1.xpose.msra.mxu0 %v866
      %872 = vmatprep.subr.mxu0 0.0
      %873 = vmatpush1.xpose.msra.mxu0 %v868
      %874 = vmatprep.subr.mxu0 0.0
      %875 = vmatpush1.xpose.msra.mxu0 0.0
      %876 = vmatprep.subr.mxu0 0.0
      %877 = vmatpush1.xpose.msra.mxu0 0.0
      %878 = vmatprep.subr.mxu0 0.0
      %879 = vmatpush1.xpose.msra.mxu0 0.0
      %880 = vmatprep.subr.mxu0 0.0
      %881 = vmatpush1.xpose.msra.mxu0 0.0
      %882 = vmatprep.subr.mxu0 0.0
      %883 = vmatpush1.xpose.msra.mxu0 0.0
      %884 = vmatprep.subr.mxu0 0.0
      %885 = vmatpush1.xpose.msra.mxu0 0.0
      %886 = vmatprep.subr.mxu0 0.0
      %887 = vmatpush1.xpose.msra.mxu0 0.0
      %888 = vmatprep.subr.mxu0 0.0
      %889 = vmatpush1.xpose.msra.mxu0 0.0
      %890 = vmatprep.subr.mxu0 0.0
      %891 = vmatpush1.xpose.msra.mxu0 0.0
      %892 = vmatprep.subr.mxu0 0.0
      %893 = vmatpush1.xpose.msra.mxu0 0.0
      %894 = vmatprep.subr.mxu0 0.0
      %895 = vmatpush1.xpose.msra.mxu0 0.0
      %896 = vmatprep.subr.mxu0 0.0
      %897 = vmatpush1.xpose.msra.mxu0 0.0
      %898 = vmatprep.subr.mxu0 0.0
      %899 = vmatpush1.xpose.msra.mxu0 0.0
      %900 = vmatprep.subr.mxu0 0.0
      %901 = vmatpush1.xpose.msra.mxu0 0.0
      %902 = vmatprep.subr.mxu0 0.0
      %903 = vmatpush1.xpose.msra.mxu0 0.0
      %904 = vmatprep.subr.mxu0 0.0
      %905 = vmatpush1.xpose.msra.mxu0 0.0
      %906 = vmatprep.subr.mxu0 0.0
      %907 = vmatpush1.xpose.msra.mxu0 0.0
      %908 = vmatprep.subr.mxu0 0.0
      %909 = vmatpush1.xpose.msra.mxu0 0.0
      %910 = vmatprep.subr.mxu0 0.0
      %911 = vmatpush1.xpose.msra.mxu0 0.0
      %912 = vmatprep.subr.mxu0 0.0
      %913 = vmatpush1.xpose.msra.mxu0 0.0
      %914 = vmatprep.subr.mxu0 0.0
      %915 = vmatpush1.xpose.msra.mxu0 0.0
      %916 = vmatprep.subr.mxu0 0.0
      %917 = vmatpush1.xpose.msra.mxu0 0.0
      %918 = vmatprep.subr.mxu0 0.0
      %919 = vmatpush1.xpose.msra.mxu0 0.0
      %920 = vmatprep.subr.mxu0 0.0
      %921 = vmatpush1.xpose.msra.mxu0 0.0
      %922 = vmatprep.subr.mxu0 0.0
      %923 = vmatpush1.xpose.msra.mxu0 0.0
      %924 = vmatprep.subr.mxu0 0.0
      %925 = vmatpush1.xpose.msra.mxu0 0.0
      %926 = vmatprep.subr.mxu0 0.0
      %927 = vmatpush1.xpose.msra.mxu0 0.0
      %928 = vmatprep.subr.mxu0 0.0
      %929 = vmatpush1.xpose.msra.mxu0 0.0
      %930 = vmatprep.subr.mxu0 0.0
      %931 = vmatpush1.xpose.msra.mxu0 0.0
      %932 = vmatprep.subr.mxu0 0.0
      %933 = vmatpush1.xpose.msra.mxu0 0.0
      %934 = vmatprep.mubr.f32.mxu0 0.0
      %935 = vmatmul.mubr.f32.gmra.mrb[0].mxu0 %v862
      %v936 = vpop.f32.mrb[0].mxu0
      %v937 = vadd.f32 0.0, %v936
      %v938 = vpop.f32.mrb[0].mxu0
      %939 = vmatprep.mubr.f32.mxu0 0.0
      %940 = vmatmul.mubr.f32.gmra.mrb[0].mxu0 %v864
      %v941 = vpop.f32.mrb[0].mxu0
      %v942 = vadd.f32 0.0, %v941
      %v943 = vpop.f32.mrb[0].mxu0
      %944 = vdwg.mxu0
      %v945 = vmul.f32 %v937, 0.17677669
      %v946 = vmul.f32 %v942, 0.17677669
      %v947 = vsel %vm314, %v945, -inf
      %948 = vmax.xlane.f32.xlu0 %v947
      %v949 = vpop.xlane.xlu0 %948
      %v950 = vsel %vm314, %v946, -inf
      %951 = vmax.xlane.f32.xlu0 %v950
      %v952 = vpop.xlane.xlu0 %951
      %v953 = vsub.f32 %v945, %v949
      %v954 = vsub.f32 %v946, %v952
      %v955 = vmul.f32 %v953, 1.442695
      %v956 = vpow.pop %v955
      %v957 = vmul.f32 %v954, 1.442695
      %v958 = vpow.pop %v957
      %v959 = vsel %vm314, %v956, 0.0
      %960 = vadd.xlane.f32.xlu0 %v959
      %v961 = vpop.xlane.xlu0 %960
      %v962 = vsel %vm314, %v958, 0.0
      %963 = vadd.xlane.f32.xlu0 %v962
      %v964 = vpop.xlane.xlu0 %963
      %v965 = vrcp.pop %v961
      %v966 = vrcp.pop %v964
      %v967 = vmul.f32 %v956, %v965
      %v968 = vmul.f32 %v958, %v966
      %v969 = vmul.f32 %v967, 256.0
      %v970 = vmul.f32 %v968, 256.0
      %v971 = vround.ne.pseudo %v969
      %v972 = vround.ne.pseudo %v970
      %v973 = vmax.f32 %v971, -32768.0
      %v974 = vmax.f32 %v972, -32768.0
      %v975 = vmin.f32 %v973, 32767.0
      %v976 = vmin.f32 %v974, 32767.0
      %v977 = vmul.f32 %v975, 0.00390625
      %v978 = vmul.f32 %v976, 0.00390625
      %979 = vrot.lane.b32.xlu0 %v220, 32
      %v980 = vpop.permute.xlu0 %979
      %981 = vrot.lane.b32.xlu0 %v223, 32
      %v982 = vpop.permute.xlu0 %981
      %v986 = vsel %vm314, %v977, 0
      %v989 = vsel %vm314, %v978, 0
      %991 = vmatprep.subr.mxu0 0.0
      %992 = vmatpush1.msra.mxu0 %v980
      %993 = vmatprep.subr.mxu0 0.0
      %994 = vmatpush1.msra.mxu0 %v982
      %995 = vmatprep.subr.mxu0 0.0
      %996 = vmatpush1.msra.mxu0 0.0
      %997 = vmatprep.subr.mxu0 0.0
      %998 = vmatpush1.msra.mxu0 0.0
      %999 = vmatprep.subr.mxu0 0.0
      %1000 = vmatpush1.msra.mxu0 0.0
      %1001 = vmatprep.subr.mxu0 0.0
      %1002 = vmatpush1.msra.mxu0 0.0
      %1003 = vmatprep.subr.mxu0 0.0
      %1004 = vmatpush1.msra.mxu0 0.0
      %1005 = vmatprep.subr.mxu0 0.0
      %1006 = vmatpush1.msra.mxu0 0.0
      %1007 = vmatprep.subr.mxu0 0.0
      %1008 = vmatpush1.msra.mxu0 0.0
      %1009 = vmatprep.subr.mxu0 0.0
      %1010 = vmatpush1.msra.mxu0 0.0
      %1011 = vmatprep.subr.mxu0 0.0
      %1012 = vmatpush1.msra.mxu0 0.0
      %1013 = vmatprep.subr.mxu0 0.0
      %1014 = vmatpush1.msra.mxu0 0.0
      %1015 = vmatprep.subr.mxu0 0.0
      %1016 = vmatpush1.msra.mxu0 0.0
      %1017 = vmatprep.subr.mxu0 0.0
      %1018 = vmatpush1.msra.mxu0 0.0
      %1019 = vmatprep.subr.mxu0 0.0
      %1020 = vmatpush1.msra.mxu0 0.0
      %1021 = vmatprep.subr.mxu0 0.0
      %1022 = vmatpush1.msra.mxu0 0.0
      %1023 = vmatprep.subr.mxu0 0.0
      %1024 = vmatpush1.msra.mxu0 0.0
      %1025 = vmatprep.subr.mxu0 0.0
      %1026 = vmatpush1.msra.mxu0 0.0
      %1027 = vmatprep.subr.mxu0 0.0
      %1028 = vmatpush1.msra.mxu0 0.0
      %1029 = vmatprep.subr.mxu0 0.0
      %1030 = vmatpush1.msra.mxu0 0.0
      %1031 = vmatprep.subr.mxu0 0.0
      %1032 = vmatpush1.msra.mxu0 0.0
      %1033 = vmatprep.subr.mxu0 0.0
      %1034 = vmatpush1.msra.mxu0 0.0
      %1035 = vmatprep.subr.mxu0 0.0
      %1036 = vmatpush1.msra.mxu0 0.0
      %1037 = vmatprep.subr.mxu0 0.0
      %1038 = vmatpush1.msra.mxu0 0.0
      %1039 = vmatprep.subr.mxu0 0.0
      %1040 = vmatpush1.msra.mxu0 0.0
      %1041 = vmatprep.subr.mxu0 0.0
      %1042 = vmatpush1.msra.mxu0 0.0
      %1043 = vmatprep.subr.mxu0 0.0
      %1044 = vmatpush1.msra.mxu0 0.0
      %1045 = vmatprep.subr.mxu0 0.0
      %1046 = vmatpush1.msra.mxu0 0.0
      %1047 = vmatprep.subr.mxu0 0.0
      %1048 = vmatpush1.msra.mxu0 0.0
      %1049 = vmatprep.subr.mxu0 0.0
      %1050 = vmatpush1.msra.mxu0 0.0
      %1051 = vmatprep.subr.mxu0 0.0
      %1052 = vmatpush1.msra.mxu0 0.0
      %1053 = vmatprep.subr.mxu0 0.0
      %1054 = vmatpush1.msra.mxu0 0.0
      %1055 = vmatprep.mubr.f32.mxu0 0.0
      %1056 = vmatmul.mubr.f32.gmra.mrb[0].mxu0 %v986
      %v1057 = vpop.f32.mrb[0].mxu0
      %v1058 = vadd.f32 0.0, %v1057
      %v1059 = vpop.f32.mrb[0].mxu0
      %1060 = vmatprep.mubr.f32.mxu0 0.0
      %1061 = vmatmul.mubr.f32.gmra.mrb[0].mxu0 %v989
      %v1062 = vpop.f32.mrb[0].mxu0
      %v1063 = vadd.f32 0.0, %v1062
      %v1064 = vpop.f32.mrb[0].mxu0
      %1065 = vdwg.mxu0
      %1068 = vrot.lane.b32.xlu0 %v634, 32
      %v1069 = vpop.permute.xlu0 %1068
      %1070 = vrot.lane.b32.xlu0 %v639, 32
      %v1071 = vpop.permute.xlu0 %1070
      %1076 = vrot.lane.b32.xlu0 %v846, 64
      %v1077 = vpop.permute.xlu0 %1076
      %1078 = vrot.lane.b32.xlu0 %v851, 64
      %v1079 = vpop.permute.xlu0 %1078
      %1084 = vrot.lane.b32.xlu0 %v1058, 96
      %v1085 = vpop.permute.xlu0 %1084
      %1086 = vrot.lane.b32.xlu0 %v1063, 96
      %v1087 = vpop.permute.xlu0 %1086
      %v1090 = vsel %vm224, %v420, %v1069
      %v1091 = vsel %vm224, %v425, %v1071
      %vm1092 = vcmask 523264
      %v1093 = vsel %vm1092, %v1090, %v1077
      %v1094 = vsel %vm1092, %v1091, %v1079
      %vm1095 = vcmask 785408
      %v1096 = vsel %vm1095, %v1093, %v1085
      %v1097 = vsel %vm1095, %v1094, %v1087
      %v1098 = vld [vmem:[%s2] sm:$0xff]
      %v1099 = vld [vmem:[%s2 + $0x8] sm:$0xff]
      %v1100 = vld [vmem:[%s2 + $0x10] sm:$0xff]
      %v1101 = vld [vmem:[%s2 + $0x18] sm:$0xff]
      %v1102 = vld [vmem:[%s2 + $0x20] sm:$0xff]
      %v1103 = vld [vmem:[%s2 + $0x28] sm:$0xff]
      %v1104 = vld [vmem:[%s2 + $0x30] sm:$0xff]
      %v1105 = vld [vmem:[%s2 + $0x38] sm:$0xff]
      %v1106 = vld [vmem:[%s2 + $0x40] sm:$0xff]
      %v1107 = vld [vmem:[%s2 + $0x48] sm:$0xff]
      %v1108 = vld [vmem:[%s2 + $0x50] sm:$0xff]
      %v1109 = vld [vmem:[%s2 + $0x58] sm:$0xff]
      %v1110 = vld [vmem:[%s2 + $0x60] sm:$0xff]
      %v1111 = vld [vmem:[%s2 + $0x68] sm:$0xff]
      %v1112 = vld [vmem:[%s2 + $0x70] sm:$0xff]
      %v1113 = vld [vmem:[%s2 + $0x78] sm:$0xff]
      %v1114 = vld [vmem:[%s3] sm:$0x1]
      %v1116 = vlaneseq
      %v1117 = vshrl.u32 %v1116, 7
      %v1118 = vsub.s32 0, %v1117
      %v1119 = vrot.slane %v1114, %v1118
      %1121 = vmatprep.subr.mxu0 0.0
      %1122 = vmatpush1.msra.mxu0 %v1098
      %1123 = vmatprep.subr.mxu0 0.0
      %1124 = vmatpush1.msra.mxu0 %v1099
      %1125 = vmatprep.subr.mxu0 0.0
      %1126 = vmatpush1.msra.mxu0 %v1100
      %1127 = vmatprep.subr.mxu0 0.0
      %1128 = vmatpush1.msra.mxu0 %v1101
      %1129 = vmatprep.subr.mxu0 0.0
      %1130 = vmatpush1.msra.mxu0 %v1102
      %1131 = vmatprep.subr.mxu0 0.0
      %1132 = vmatpush1.msra.mxu0 %v1103
      %1133 = vmatprep.subr.mxu0 0.0
      %1134 = vmatpush1.msra.mxu0 %v1104
      %1135 = vmatprep.subr.mxu0 0.0
      %1136 = vmatpush1.msra.mxu0 %v1105
      %1137 = vmatprep.subr.mxu0 0.0
      %1138 = vmatpush1.msra.mxu0 %v1106
      %1139 = vmatprep.subr.mxu0 0.0
      %1140 = vmatpush1.msra.mxu0 %v1107
      %1141 = vmatprep.subr.mxu0 0.0
      %1142 = vmatpush1.msra.mxu0 %v1108
      %1143 = vmatprep.subr.mxu0 0.0
      %1144 = vmatpush1.msra.mxu0 %v1109
      %1145 = vmatprep.subr.mxu0 0.0
      %1146 = vmatpush1.msra.mxu0 %v1110
      %1147 = vmatprep.subr.mxu0 0.0
      %1148 = vmatpush1.msra.mxu0 %v1111
      %1149 = vmatprep.subr.mxu0 0.0
      %1150 = vmatpush1.msra.mxu0 %v1112
      %1151 = vmatprep.subr.mxu0 0.0
      %1152 = vmatpush1.msra.mxu0 %v1113
      %1153 = vmatprep.subr.mxu0 0.0
      %1154 = vmatpush1.msra.mxu0 0.0
      %1155 = vmatprep.subr.mxu0 0.0
      %1156 = vmatpush1.msra.mxu0 0.0
      %1157 = vmatprep.subr.mxu0 0.0
      %1158 = vmatpush1.msra.mxu0 0.0
      %1159 = vmatprep.subr.mxu0 0.0
      %1160 = vmatpush1.msra.mxu0 0.0
      %1161 = vmatprep.subr.mxu0 0.0
      %1162 = vmatpush1.msra.mxu0 0.0
      %1163 = vmatprep.subr.mxu0 0.0
      %1164 = vmatpush1.msra.mxu0 0.0
      %1165 = vmatprep.subr.mxu0 0.0
      %1166 = vmatpush1.msra.mxu0 0.0
      %1167 = vmatprep.subr.mxu0 0.0
      %1168 = vmatpush1.msra.mxu0 0.0
      %1169 = vmatprep.subr.mxu0 0.0
      %1170 = vmatpush1.msra.mxu0 0.0
      %1171 = vmatprep.subr.mxu0 0.0
      %1172 = vmatpush1.msra.mxu0 0.0
      %1173 = vmatprep.subr.mxu0 0.0
      %1174 = vmatpush1.msra.mxu0 0.0
      %1175 = vmatprep.subr.mxu0 0.0
      %1176 = vmatpush1.msra.mxu0 0.0
      %1177 = vmatprep.subr.mxu0 0.0
      %1178 = vmatpush1.msra.mxu0 0.0
      %1179 = vmatprep.subr.mxu0 0.0
      %1180 = vmatpush1.msra.mxu0 0.0
      %1181 = vmatprep.subr.mxu0 0.0
      %1182 = vmatpush1.msra.mxu0 0.0
      %1183 = vmatprep.subr.mxu0 0.0
      %1184 = vmatpush1.msra.mxu0 0.0
      %1185 = vmatprep.mubr.f32.mxu0 0.0
      %1186 = vmatmul.mubr.f32.gmra.mrb[0].mxu0 %v1096
      %v1187 = vpop.f32.mrb[0].mxu0
      %v1188 = vadd.f32 %v1119, %v1187
      %v1189 = vpop.f32.mrb[0].mxu0
      %1190 = vmatprep.mubr.f32.mxu0 0.0
      %1191 = vmatmul.mubr.f32.gmra.mrb[0].mxu0 %v1097
      %v1192 = vpop.f32.mrb[0].mxu0
      %v1193 = vadd.f32 %v1119, %v1192
      %v1194 = vpop.f32.mrb[0].mxu0
      %1195 = vdwg.mxu0
      %v1196 = vmul.f32 %v1188, 256.0
      %v1197 = vmul.f32 %v1193, 256.0
      %v1198 = vround.ne.pseudo %v1196
      %v1199 = vround.ne.pseudo %v1197
      %v1200 = vmax.f32 %v1198, -32768.0
      %v1201 = vmax.f32 %v1199, -32768.0
      %v1202 = vmin.f32 %v1200, 32767.0
      %v1203 = vmin.f32 %v1201, 32767.0
      %v1204 = vmul.f32 %v1202, 0.00390625
      %v1205 = vmul.f32 %v1203, 0.00390625
      %v1206 = vld [vmem:[%s212] sm:$0xff]
      %v1207 = vld [vmem:[%s212 + $0x8] sm:$0xff]
      %v1208 = vadd.f32 %v1206, %v1204
      %v1209 = vadd.f32 %v1207, %v1205
      %v1210 = vmul.f32 %v1208, 256.0
      %v1211 = vmul.f32 %v1209, 256.0
      %v1212 = vround.ne.pseudo %v1210
      %v1213 = vround.ne.pseudo %v1211
      %v1214 = vmax.f32 %v1212, -32768.0
      %v1215 = vmax.f32 %v1213, -32768.0
      %v1216 = vmin.f32 %v1214, 32767.0
      %v1217 = vmin.f32 %v1215, 32767.0
      %v1218 = vmul.f32 %v1216, 0.00390625
      %v1219 = vmul.f32 %v1217, 0.00390625
      %1220 = vst [vmem:[%s217] sm:$0xff] %v1218
      %1221 = vst [vmem:[%s217 + $0x8] sm:$0xff] %v1219
      %p1222 = scmp.lt.s32.totalorder %s15, 1
      %s1223 = scalar_select %p1222, %s15, 1
      %s1224 = smul.addr %s1223, 2
      %s1225 = smul.addr %s1224, 8
      %s1226 = scalar_lea.vmem %s4, %s1225
      // Predicated region
      $region37: #{vit_forward.10} parent=35 // pred_check
        %p1227 = pneg %p127
      $region38: #{vit_forward.10} parent=35 // pred_check_branch
        %1229 = sbr.rel (%p1227) target = $region40
      $region39: #{vit_forward.10} parent=35 // pred_region
        _
      $region40: #{vit_forward.10} parent=35 // pred_fallthru
        _
    $region36: #{vit_forward.10} parent=5 // pred_fallthru
      _
    %p1230 = scmp.le.s32.totalorder 2, %s10
    // Predicated region
    $region41: #{vit_forward.10} parent=5 // pred_check
      %p1231 = pneg %p1230
    $region42: #{vit_forward.10} parent=5 // pred_check_branch
      %1233 = sbr.rel (%p1231) target = $region44
    $region43: #{vit_forward.10} parent=5 // pred_region
      %s1234 = ssub.s32 %s10, 2
      // Predicated region
      $region45: #{vit_forward.10} parent=43 // pred_check
        %p1235 = pneg %p133
      $region46: #{vit_forward.10} parent=43 // pred_check_branch
        %1237 = sbr.rel (%p1235) target = $region48
      $region47: #{vit_forward.10} parent=43 // pred_region
        %p1238 = scmp.lt.s32.totalorder %s16, 1
        %s1239 = scalar_select %p1238, %s16, 1
        %s1240 = smul.addr %s1239, 2
        %s1241 = smul.addr %s1240, 8
        %s1242 = scalar_lea.vmem %s4, %s1241
      $region48: #{vit_forward.10} parent=43 // pred_fallthru
        _
    $region44: #{vit_forward.10} parent=5 // pred_fallthru
      _
  $region6: #{vit_forward.10} parent=0 // loop_footer
    %s14 = sadd.s32 1, %s10
  $region7: #{vit_forward.10} parent=0 // loop_footer_branch
    %9 = sbr.rel target = $region3
  $region8: #{vit_forward.10} parent=0 // loop_exit
    _

// kernel: vit_forward.15
$region0: #{vit_forward.15}
  #allocation0 [shape = 'u32[]', space=smem, size = 0x4, offset = 0x4, fixed_abs, tag = 'smem constant byte address 0x4 - core index']
  #allocation1 [shape = 'u32[144,128]{1,0:T(1,128)}', space=vmem, size = 0x12000, scoped, tag = 'internal scratch']
  %s0 = inlined_call_operand.vmem [shape: f32[2,16,128], index: 0, kind: input, shape index: {}]
  %s1 = inlined_call_operand.vmem [shape: f32[128,10], index: 1, kind: input, shape index: {}]
  %s2 = inlined_call_operand.vmem [shape: f32[1,10], index: 2, kind: input, shape index: {}]
  %s3 = inlined_call_operand.hbm [shape: f32[2,10], index: 3, kind: output, shape index: {}]
  %s4 = sld [smem:[#allocation0]]
  $region22: #{vit_forward.15} parent=0
    _
  %s6 = ssub.s32 1, %s4
  %s7 = scalar_select 0, %s6, %s4
  $region1: #{vit_forward.15} parent=0
    #allocation2 [shape = 'u8[1024]{0}', space=vmem, size = 0x400, scoped, tag = 'output window, operand 0, single buffered']
    #allocation3 [shape = 's32[1]{0}', space=sflag, size = 0x4, scoped, tag = 'scoped memory for vit_forward.15']
    %8 = vsyncpa [#allocation3], 0
    // Predicated region
    $region2: #{vit_forward.15} parent=1 // pred_check
      _
    $region3: #{vit_forward.15} parent=1 // pred_check_branch
      %10 = sbr.rel (0) target = $region5
    $region4: #{vit_forward.15} parent=1 // pred_region
      _
    $region5: #{vit_forward.15} parent=1 // pred_fallthru
      _
    // Predicated region
    $region6: #{vit_forward.15} parent=1 // pred_check
      _
    $region7: #{vit_forward.15} parent=1 // pred_check_branch
      %12 = sbr.rel (0) target = $region9
    $region8: #{vit_forward.15} parent=1 // pred_region
      _
    $region9: #{vit_forward.15} parent=1 // pred_fallthru
      _
    // Predicated region
    $region10: #{vit_forward.15} parent=1 // pred_check
      _
    $region11: #{vit_forward.15} parent=1 // pred_check_branch
      %14 = sbr.rel (0) target = $region13
    $region12: #{vit_forward.15} parent=1 // pred_region
      _
    $region13: #{vit_forward.15} parent=1 // pred_fallthru
      _
    %v15 = vld [vmem:[%s0] sm:$0xff]
    %v16 = vld [vmem:[%s0 + $0x8] sm:$0xff]
    %v17 = vld [vmem:[%s0 + $0x10] sm:$0xff]
    %v18 = vld [vmem:[%s0 + $0x18] sm:$0xff]
    %v19 = vadd.f32 %v15, %v16
    %v20 = vrot.slane %v19, 4
    %v21 = vadd.f32 %v19, %v20
    %v22 = vrot.slane %v21, 2
    %v23 = vadd.f32 %v21, %v22
    %v24 = vrot.slane %v23, 1
    %v25 = vadd.f32 %v23, %v24
    %v26 = vadd.f32 %v17, %v18
    %v27 = vrot.slane %v26, 4
    %v28 = vadd.f32 %v26, %v27
    %v29 = vrot.slane %v28, 2
    %v30 = vadd.f32 %v28, %v29
    %v31 = vrot.slane %v30, 1
    %v32 = vadd.f32 %v30, %v31
    %v33 = vrcp.pop 16.0
    %v34 = vmul.f32 %v25, %v33
    %v35 = vmul.f32 %v32, %v33
    %v36 = vld [vmem:[%s1] sm:$0xff]
    %v37 = vld [vmem:[%s1 + $0x8] sm:$0xff]
    %v38 = vld [vmem:[%s1 + $0x10] sm:$0xff]
    %v39 = vld [vmem:[%s1 + $0x18] sm:$0xff]
    %v40 = vld [vmem:[%s1 + $0x20] sm:$0xff]
    %v41 = vld [vmem:[%s1 + $0x28] sm:$0xff]
    %v42 = vld [vmem:[%s1 + $0x30] sm:$0xff]
    %v43 = vld [vmem:[%s1 + $0x38] sm:$0xff]
    %v44 = vld [vmem:[%s1 + $0x40] sm:$0xff]
    %v45 = vld [vmem:[%s1 + $0x48] sm:$0xff]
    %v46 = vld [vmem:[%s1 + $0x50] sm:$0xff]
    %v47 = vld [vmem:[%s1 + $0x58] sm:$0xff]
    %v48 = vld [vmem:[%s1 + $0x60] sm:$0xff]
    %v49 = vld [vmem:[%s1 + $0x68] sm:$0xff]
    %v50 = vld [vmem:[%s1 + $0x70] sm:$0xff]
    %v51 = vld [vmem:[%s1 + $0x78] sm:$0xff]
    %v52 = vld [vmem:[%s2] sm:$0x1]
    %v54 = vlaneseq
    %v55 = vshrl.u32 %v54, 7
    %v56 = vsub.s32 0, %v55
    %v57 = vrot.slane %v52, %v56
    %vm61 = vcmask 1041409
    %v62 = vsel %vm61, %v35, %v34
    %64 = vmatprep.subr.mxu0 0.0
    %65 = vmatpush1.msra.mxu0 %v36
    %66 = vmatprep.subr.mxu0 0.0
    %67 = vmatpush1.msra.mxu0 %v37
    %68 = vmatprep.subr.mxu0 0.0
    %69 = vmatpush1.msra.mxu0 %v38
    %70 = vmatprep.subr.mxu0 0.0
    %71 = vmatpush1.msra.mxu0 %v39
    %72 = vmatprep.subr.mxu0 0.0
    %73 = vmatpush1.msra.mxu0 %v40
    %74 = vmatprep.subr.mxu0 0.0
    %75 = vmatpush1.msra.mxu0 %v41
    %76 = vmatprep.subr.mxu0 0.0
    %77 = vmatpush1.msra.mxu0 %v42
    %78 = vmatprep.subr.mxu0 0.0
    %79 = vmatpush1.msra.mxu0 %v43
    %80 = vmatprep.subr.mxu0 0.0
    %81 = vmatpush1.msra.mxu0 %v44
    %82 = vmatprep.subr.mxu0 0.0
    %83 = vmatpush1.msra.mxu0 %v45
    %84 = vmatprep.subr.mxu0 0.0
    %85 = vmatpush1.msra.mxu0 %v46
    %86 = vmatprep.subr.mxu0 0.0
    %87 = vmatpush1.msra.mxu0 %v47
    %88 = vmatprep.subr.mxu0 0.0
    %89 = vmatpush1.msra.mxu0 %v48
    %90 = vmatprep.subr.mxu0 0.0
    %91 = vmatpush1.msra.mxu0 %v49
    %92 = vmatprep.subr.mxu0 0.0
    %93 = vmatpush1.msra.mxu0 %v50
    %94 = vmatprep.subr.mxu0 0.0
    %95 = vmatpush1.msra.mxu0 %v51
    %96 = vmatprep.subr.mxu0 0.0
    %97 = vmatpush1.msra.mxu0 0.0
    %98 = vmatprep.subr.mxu0 0.0
    %99 = vmatpush1.msra.mxu0 0.0
    %100 = vmatprep.subr.mxu0 0.0
    %101 = vmatpush1.msra.mxu0 0.0
    %102 = vmatprep.subr.mxu0 0.0
    %103 = vmatpush1.msra.mxu0 0.0
    %104 = vmatprep.subr.mxu0 0.0
    %105 = vmatpush1.msra.mxu0 0.0
    %106 = vmatprep.subr.mxu0 0.0
    %107 = vmatpush1.msra.mxu0 0.0
    %108 = vmatprep.subr.mxu0 0.0
    %109 = vmatpush1.msra.mxu0 0.0
    %110 = vmatprep.subr.mxu0 0.0
    %111 = vmatpush1.msra.mxu0 0.0
    %112 = vmatprep.subr.mxu0 0.0
    %113 = vmatpush1.msra.mxu0 0.0
    %114 = vmatprep.subr.mxu0 0.0
    %115 = vmatpush1.msra.mxu0 0.0
    %116 = vmatprep.subr.mxu0 0.0
    %117 = vmatpush1.msra.mxu0 0.0
    %118 = vmatprep.subr.mxu0 0.0
    %119 = vmatpush1.msra.mxu0 0.0
    %120 = vmatprep.subr.mxu0 0.0
    %121 = vmatpush1.msra.mxu0 0.0
    %122 = vmatprep.subr.mxu0 0.0
    %123 = vmatpush1.msra.mxu0 0.0
    %124 = vmatprep.subr.mxu0 0.0
    %125 = vmatpush1.msra.mxu0 0.0
    %126 = vmatprep.subr.mxu0 0.0
    %127 = vmatpush1.msra.mxu0 0.0
    %128 = vmatprep.mubr.f32.mxu0 0.0
    %129 = vmatmul.mubr.f32.gmra.mrb[0].mxu0 %v62
    %v130 = vpop.f32.mrb[0].mxu0
    %v131 = vadd.f32 %v57, %v130
    %v132 = vpop.f32.mrb[0].mxu0
    %133 = vdwg.mxu0
    %vm134 = vcmask 74752
    %135 = vst.msk [vmem:[#allocation2] sm:$0x3] %vm134, %v131
    // Predicated region
    $region14: #{vit_forward.15} parent=1 // pred_check
      _
    $region15: #{vit_forward.15} parent=1 // pred_check_branch
      %137 = sbr.rel (0) target = $region17
    $region16: #{vit_forward.15} parent=1 // pred_region
      %s139 = ssub.s32 32, 32
      %140 = vsyncadd [#allocation3], %s139
      %s142 = sshll.u32 [#allocation2], 4
      %s143 = int_to_ptr.vmem [resolvable:$true] %s142
      %145 = dma.vmem_to_hbm [thread:$0]  %s143, 32, %s3, [#allocation3]
    $region17: #{vit_forward.15} parent=1 // pred_fallthru
      _
    // Predicated region
    $region18: #{vit_forward.15} parent=1 // pred_check
      _
    $region19: #{vit_forward.15} parent=1 // pred_check_branch
      %147 = sbr.rel (0) target = $region21
    $region20: #{vit_forward.15} parent=1 // pred_region
      %148 = dma.done [#allocation3], 32
    $region21: #{vit_forward.15} parent=1 // pred_fallthru
      _
    %149 = vsyncpa [#allocation3], 1

</llo_original>
